<compile_context>
chip_gen: v5e
topology: v5e:2x2
jax: 0.10.0
libtpu: 0.0.40
codegen_flags: <defaults>
</compile_context>

<pallas_src>
import functools
import math

import jax
import jax.numpy as jnp
import numpy as np
from jax.experimental import pallas as pl
from jax.experimental.pallas import tpu as pltpu

# ----------------------------- model config (small, synthetic) -----------------------------
NUM_LAYERS = 2          # config.decoder.num_hidden_layers
HIDDEN = 32             # base_config.hidden_size
NUM_HEADS = 4
HEAD_DIM = HIDDEN // NUM_HEADS
INTERMEDIATE = 64       # base_config.intermediate_size
VOCAB = 128             # base_config.vocab_size
MAX_POS = 64            # base_config.max_position_embeddings
LN_EPS = 1e-12          # BERT layer_norm_eps
NEG_INF = -1e9          # large-negative additive mask (same softmax result as finfo.min)

# MXU operand dtype (weights pre-cast in prepare_params, activations cast in-kernel);
# accumulation is always f32 via preferred_element_type.
MXU_INPUT_DTYPE = jnp.bfloat16

BATCH = 2
SEQ = 8

PVEC_W = max(HIDDEN, INTERMEDIATE)   # 64: lane width of the packed per-layer param rows


# ----------------------------- small helpers -----------------------------
def _try_single_buffer():
    """pl.Buffered(1): single-buffer weight blocks whose index_map is constant."""
    try:
        return pl.Buffered(buffer_count=1)
    except Exception:
        try:
            return pl.Buffered(1)
        except Exception:
            return None


_SINGLE_BUFFER = _try_single_buffer()


def _resident_spec(shape):
    """Full-array block that is identical at every grid step (weights/biases)."""
    nd = len(shape)
    index_map = lambda i, _nd=nd: (0,) * _nd
    if _SINGLE_BUFFER is not None:
        try:
            return pl.BlockSpec(shape, index_map, pipeline_mode=_SINGLE_BUFFER)
        except TypeError:
            pass
    return pl.BlockSpec(shape, index_map)


@functools.lru_cache(maxsize=None)
def _vmem_limit_bytes():
    """Scoped VMEM limit derived from the actual chip (v5e/v6e: 128 MiB, v7x: 64 MiB)."""
    cap = 64 * 1024 * 1024                      # conservative fallback (v7x physical)
    try:
        info = pltpu.get_tpu_info()
        cap = int(getattr(info, "vmem_capacity_bytes", cap))
    except Exception:
        pass
    return max(16 * 1024 * 1024, (cap * 3) // 4)


# ----------------------------- Pallas kernel -----------------------------
def decoder_kernel(mask_ref, x_ref, pos_ref,
                   wqkv_ref, bqkv_ref, wo_ref, w1_ref, w2_ref, pvec_ref,
                   wfc_ref, bfc_ref,
                   out_ref):
    bb, S, H = x_ref.shape
    BS = bb * S

    # Residual stream kept 2-D (rows = batch*seq): every dense projection is a single
    # plain (BS, K) @ (K, N) MXU matmul with the largest possible M.
    x = (x_ref[...] + pos_ref[...]).reshape(BS, H)

    # Additive attention mask broadcast ONCE per kernel (reused by every layer / head;
    # JAX does not CSE broadcast_in_dim).
    mask_b = jnp.broadcast_to(mask_ref[...][:, None, :], (bb, S, S))

    def layer_norm(v, g, b):
        # One-pass mean / mean-of-squares halves the cross-lane XLU reductions.
        # Values are O(1) post-residual, so the E[x^2]-mu^2 cancellation is benign here.
        mu = jnp.mean(v, axis=-1, keepdims=True)
        ms = jnp.mean(v * v, axis=-1, keepdims=True)
        var = jnp.maximum(ms - mu * mu, 0.0)
        return (v - mu) * jax.lax.rsqrt(var + LN_EPS) * g + b

    # TODO(synk): at real-BERT sizes, move the layer axis onto an "arbitrary" grid dim (or
    # lax.fori_loop) and stream per-layer weights with pltpu.make_async_copy, and tile the
    # vocab projection over a VOCAB grid axis -- an all-resident layout that fits v5e/v6e's
    # 128 MiB VMEM will not fit v7x's 64 MiB.
    for l in range(NUM_LAYERS):
        # Packed per-layer small params: every row starts at lane 0 (no lane rotations).
        bo   = pvec_ref[l, 0:1, 0:H]
        b1   = pvec_ref[l, 1:2, 0:INTERMEDIATE]
        b2   = pvec_ref[l, 2:3, 0:H]
        ln1g = pvec_ref[l, 3:4, 0:H]
        ln1b = pvec_ref[l, 4:5, 0:H]
        ln2g = pvec_ref[l, 5:6, 0:H]
        ln2b = pvec_ref[l, 6:7, 0:H]

        xb = x.astype(MXU_INPUT_DTYPE)          # cast once, reused by all per-head matmuls

        # ---- multi-head self attention ----
        # Heads are split on the WEIGHT side (done once in the wrapper): per-head q/k/v/out
        # weights are separate leading-dim blocks, so the kernel never lane-slices vreg
        # values and never stores per-head context to scratch -- each head's context is
        # projected through its (HEAD_DIM, H) slice of W_o and accumulated in vregs.
        attn = None
        for h in range(NUM_HEADS):
            qi = (l * 3 + 0) * NUM_HEADS + h
            ki = (l * 3 + 1) * NUM_HEADS + h
            vi = (l * 3 + 2) * NUM_HEADS + h
            # 1/sqrt(HEAD_DIM) is pre-folded into the q weights & bias in the wrapper.
            qh = (jnp.dot(xb, wqkv_ref[qi], preferred_element_type=jnp.float32)
                  + bqkv_ref[qi]).reshape(bb, S, HEAD_DIM)
            kh = (jnp.dot(xb, wqkv_ref[ki], preferred_element_type=jnp.float32)
                  + bqkv_ref[ki]).reshape(bb, S, HEAD_DIM)
            vh = (jnp.dot(xb, wqkv_ref[vi], preferred_element_type=jnp.float32)
                  + bqkv_ref[vi]).reshape(bb, S, HEAD_DIM)

            s = jnp.einsum('bqd,bkd->bqk', qh, kh,
                           preferred_element_type=jnp.float32) + mask_b
            s = s - jnp.max(s, axis=-1, keepdims=True)
            p = jnp.exp(s)
            p = p * pl.reciprocal(jnp.sum(p, axis=-1, keepdims=True), approx=True)
            ctxh = jnp.einsum('bqk,bkd->bqd', p, vh,
                              preferred_element_type=jnp.float32).reshape(BS, HEAD_DIM)

            contrib = jnp.dot(ctxh.astype(MXU_INPUT_DTYPE), wo_ref[l * NUM_HEADS + h],
                              preferred_element_type=jnp.float32)
            attn = contrib if attn is None else attn + contrib

        x = layer_norm(x + attn + bo, ln1g, ln1b)

        # ---- feed forward (tanh GELU -> EUP slot) ----
        hmid = jnp.dot(x.astype(MXU_INPUT_DTYPE), w1_ref[l],
                       preferred_element_type=jnp.float32) + b1
        hmid = jax.nn.gelu(hmid, approximate=True)
        ffn = jnp.dot(hmid.astype(MXU_INPUT_DTYPE), w2_ref[l],
                      preferred_element_type=jnp.float32) + b2
        x = layer_norm(x + ffn, ln2g, ln2b)

    # ---- final vocab projection (lane-dense output: VOCAB = 128) ----
    logits = jnp.dot(x.astype(MXU_INPUT_DTYPE), wfc_ref[...],
                     preferred_element_type=jnp.float32) + bfc_ref[...]
    out_ref[...] = logits.reshape(bb, S, VOCAB)


# ----------------------------- one-time parameter preparation -----------------------------
def prepare_params(params):
    """Head-split, scale-fold, pack and pre-cast weights (done once, outside the hot path)."""
    (wq, bq, wk, bk, wv, bv, wo, bo, ln1g, ln1b,
     w1, b1, w2, b2, ln2g, ln2b, wfc, bfc) = params
    L = NUM_LAYERS
    scale = 1.0 / math.sqrt(HEAD_DIM)

    def split_heads_w(w):   # (L,H,H) columns -> (L,NH,H,hd)
        return jnp.transpose(w.reshape(L, HIDDEN, NUM_HEADS, HEAD_DIM), (0, 2, 1, 3))

    def split_heads_b(b):   # (L,1,H) -> (L,NH,1,hd)
        return jnp.transpose(b.reshape(L, 1, NUM_HEADS, HEAD_DIM), (0, 2, 1, 3))

    # per-head q/k/v weights (q pre-scaled), flattened to a 3-D leading-indexed array
    wqkv_h = jnp.stack([split_heads_w(wq * scale), split_heads_w(wk), split_heads_w(wv)],
                       axis=1)                                          # (L,3,NH,H,hd)
    wqkv_h = wqkv_h.reshape(L * 3 * NUM_HEADS, HIDDEN, HEAD_DIM).astype(MXU_INPUT_DTYPE)
    bqkv_h = jnp.stack([split_heads_b(bq * scale), split_heads_b(bk), split_heads_b(bv)],
                       axis=1)                                          # (L,3,NH,1,hd)
    bqkv_h = bqkv_h.reshape(L * 3 * NUM_HEADS, 1, HEAD_DIM).astype(jnp.float32)

    # per-head output-projection rows
    wo_h = wo.reshape(L, NUM_HEADS, HEAD_DIM, HIDDEN)
    wo_h = wo_h.reshape(L * NUM_HEADS, HEAD_DIM, HIDDEN).astype(MXU_INPUT_DTYPE)

    # pack the remaining tiny per-layer params into one (L, 8, 64) array
    def pad_lane(a):
        return jnp.pad(a, ((0, 0), (0, 0), (0, PVEC_W - a.shape[-1])))

    pvec = jnp.concatenate(
        [pad_lane(bo), pad_lane(b1), pad_lane(b2),
         pad_lane(ln1g), pad_lane(ln1b), pad_lane(ln2g), pad_lane(ln2b),
         jnp.zeros((L, 1, PVEC_W), jnp.float32)], axis=1).astype(jnp.float32)  # (L,8,64)

    return dict(
        wqkv_h=wqkv_h, bqkv_h=bqkv_h, wo_h=wo_h,
        w1=w1.astype(MXU_INPUT_DTYPE), w2=w2.astype(MXU_INPUT_DTYPE),
        pvec=pvec,
        wfc=wfc.astype(MXU_INPUT_DTYPE), bfc=bfc.astype(jnp.float32),
    )


# ----------------------------- wrapper -----------------------------
@jax.jit
def transformer_decoder_pallas(x, attn_mask, pos_emb, prep):
    B, S, H = x.shape
    # Fold the whole batch into ONE grid step: at this size every extra step is ~0.35us of
    # pure pipeline overhead against a few tiny matmuls.
    # TODO(synk): on v7x (2 TensorCores/chip) shard the batch across cores with
    # pltpu.CORE_PARALLEL / pl.core_map once verified to actually split the work.
    bb = B

    # additive mask, same semantics as get_extended_attention_mask (broadcast over
    # heads/queries); -1e9 instead of finfo.min (identical softmax result, no -inf risk).
    mask_add = (1.0 - attn_mask.astype(jnp.float32)) * NEG_INF          # (B, S)

    in_specs = [
        pl.BlockSpec((bb, S), lambda i: (i, 0)),                        # mask_add
        pl.BlockSpec((bb, S, H), lambda i: (i, 0, 0)),                  # x
        _resident_spec(pos_emb.shape),                                  # position embeddings
        _resident_spec(prep["wqkv_h"].shape),
        _resident_spec(prep["bqkv_h"].shape),
        _resident_spec(prep["wo_h"].shape),
        _resident_spec(prep["w1"].shape),
        _resident_spec(prep["w2"].shape),
        _resident_spec(prep["pvec"].shape),
        _resident_spec(prep["wfc"].shape),
        _resident_spec(prep["bfc"].shape),
    ]
    out_spec = pl.BlockSpec((bb, S, VOCAB), lambda i: (i, 0, 0))

    return pl.pallas_call(
        decoder_kernel,
        out_shape=jax.ShapeDtypeStruct((B, S, VOCAB), jnp.float32),
        grid=(B // bb,),
        in_specs=in_specs,
        out_specs=out_spec,
        compiler_params=pltpu.CompilerParams(
            dimension_semantics=("parallel",),
            vmem_limit_bytes=_vmem_limit_bytes()),
    )(mask_add, x, pos_emb,
      prep["wqkv_h"], prep["bqkv_h"], prep["wo_h"], prep["w1"], prep["w2"],
      prep["pvec"], prep["wfc"], prep["bfc"])


# ----------------------------- pure-JAX reference (mirrors the PyTorch module) -----------------------------
def transformer_decoder_ref(x, attn_mask, pos_emb, params):
    (wq, bq, wk, bk, wv, bv, wo, bo, ln1g, ln1b,
     w1, b1, w2, b2, ln2g, ln2b, wfc, bfc) = params
    B, S, H = x.shape

    def mm(a, b):
        # mirror the kernel's MXU operand dtype (f32 accumulation) so the check stays tight
        return jnp.dot(a.astype(MXU_INPUT_DTYPE), b.astype(MXU_INPUT_DTYPE),
                       preferred_element_type=jnp.float32)

    mask_add = (1.0 - attn_mask.astype(jnp.float32)) * jnp.finfo(jnp.float32).min
    mask_add = mask_add[:, None, None, :]                               # (B,1,1,S)

    def ln(v, g, b):
        mu = jnp.mean(v, axis=-1, keepdims=True)
        var = jnp.mean((v - mu) ** 2, axis=-1, keepdims=True)
        return (v - mu) / jnp.sqrt(var + LN_EPS) * g + b

    h = x + pos_emb[None]
    for l in range(NUM_LAYERS):
        q = mm(h, wq[l]) + bq[l]
        k = mm(h, wk[l]) + bk[l]
        v = mm(h, wv[l]) + bv[l]
        q = q.reshape(B, S, NUM_HEADS, HEAD_DIM).transpose(0, 2, 1, 3)
        k = k.reshape(B, S, NUM_HEADS, HEAD_DIM).transpose(0, 2, 1, 3)
        v = v.reshape(B, S, NUM_HEADS, HEAD_DIM).transpose(0, 2, 1, 3)
        s = jnp.einsum('bhqd,bhkd->bhqk', q, k) / np.sqrt(HEAD_DIM) + mask_add
        p = jax.nn.softmax(s, axis=-1)
        ctx = jnp.einsum('bhqk,bhkd->bhqd', p, v).transpose(0, 2, 1, 3).reshape(B, S, H)
        h = ln(h + mm(ctx, wo[l]) + bo[l], ln1g[l], ln1b[l])
        ff = mm(jax.nn.gelu(mm(h, w1[l]) + b1[l], approximate=False), w2[l]) + b2[l]
        h = ln(h + ff, ln2g[l], ln2b[l])
    return mm(h, wfc) + bfc


# ----------------------------- deterministic parameter init -----------------------------
def make_params(key):
    ks = jax.random.split(key, 12)
    std = 0.02
    wq = jax.random.normal(ks[0], (NUM_LAYERS, HIDDEN, HIDDEN), jnp.float32) * std
    wk = jax.random.normal(ks[1], (NUM_LAYERS, HIDDEN, HIDDEN), jnp.float32) * std
    wv = jax.random.normal(ks[2], (NUM_LAYERS, HIDDEN, HIDDEN), jnp.float32) * std
    wo = jax.random.normal(ks[3], (NUM_LAYERS, HIDDEN, HIDDEN), jnp.float32) * std
    w1 = jax.random.normal(ks[4], (NUM_LAYERS, HIDDEN, INTERMEDIATE), jnp.float32) * std
    w2 = jax.random.normal(ks[5], (NUM_LAYERS, INTERMEDIATE, HIDDEN), jnp.float32) * std
    wfc = jax.random.normal(ks[6], (HIDDEN, VOCAB), jnp.float32) * std
    bq = jax.random.normal(ks[7], (NUM_LAYERS, 1, HIDDEN), jnp.float32) * std
    bk = jnp.zeros((NUM_LAYERS, 1, HIDDEN), jnp.float32)
    bv = jax.random.normal(ks[8], (NUM_LAYERS, 1, HIDDEN), jnp.float32) * std
    bo = jnp.zeros((NUM_LAYERS, 1, HIDDEN), jnp.float32)
    b1 = jax.random.normal(ks[9], (NUM_LAYERS, 1, INTERMEDIATE), jnp.float32) * std
    b2 = jnp.zeros((NUM_LAYERS, 1, HIDDEN), jnp.float32)
    ln1g = jnp.ones((NUM_LAYERS, 1, HIDDEN), jnp.float32)
    ln1b = jnp.zeros((NUM_LAYERS, 1, HIDDEN), jnp.float32)
    ln2g = jnp.ones((NUM_LAYERS, 1, HIDDEN), jnp.float32)
    ln2b = jnp.zeros((NUM_LAYERS, 1, HIDDEN), jnp.float32)
    bfc = jax.random.normal(ks[10], (1, VOCAB), jnp.float32) * std
    pos_emb = jax.random.normal(ks[11], (MAX_POS, HIDDEN), jnp.float32) * std
    params = (wq, bq, wk, bk, wv, bv, wo, bo, ln1g, ln1b,
              w1, b1, w2, b2, ln2g, ln2b, wfc, bfc)
    return params, pos_emb


if __name__ == "__main__":
    key = jax.random.PRNGKey(0)
    kx, kp = jax.random.split(key)

    x = jax.random.normal(kx, (BATCH, SEQ, HIDDEN), jnp.float32)
    # attention mask: batch 0 fully visible, batch 1 with last two positions masked out
    attn_mask = jnp.ones((BATCH, SEQ), jnp.float32).at[1, SEQ - 2:].set(0.0)

    params, pos_emb_full = make_params(kp)
    pos_emb = pos_emb_full[:SEQ]           # position_ids[:, :seq_length] lookup

    prep = prepare_params(params)
    out = transformer_decoder_pallas(x, attn_mask, pos_emb, prep)
    out = jax.block_until_ready(out)

    ref = transformer_decoder_ref(x, attn_mask, pos_emb, params)
    # reference uses the same bf16 MXU operand dtype but exact softmax / erf GELU / two-pass
    # LN and an un-folded attention scale; tolerance covers those approximation differences.
    np.testing.assert_allclose(np.asarray(out), np.asarray(ref), rtol=3e-3, atol=3e-4)

    assert out.shape == (BATCH, SEQ, VOCAB)
    print("KERNEL_OK")
</pallas_src>

<mosaic_0001>
module attributes {stable_mosaic.version = 11 : i64} {
  func.func @decoder_kernel(%arg0: i32, %arg1: memref<2x8xf32, #tpu.memory_space<vmem>>, %arg2: memref<2x8x32xf32, #tpu.memory_space<vmem>>, %arg3: memref<8x32xf32, #tpu.memory_space<vmem>>, %arg4: memref<24x32x8xbf16, #tpu.memory_space<vmem>>, %arg5: memref<24x1x8xf32, #tpu.memory_space<vmem>>, %arg6: memref<8x8x32xbf16, #tpu.memory_space<vmem>>, %arg7: memref<2x32x64xbf16, #tpu.memory_space<vmem>>, %arg8: memref<2x64x32xbf16, #tpu.memory_space<vmem>>, %arg9: memref<2x8x64xf32, #tpu.memory_space<vmem>>, %arg10: memref<32x128xbf16, #tpu.memory_space<vmem>>, %arg11: memref<1x128xf32, #tpu.memory_space<vmem>>, %arg12: memref<2x8x128xf32, #tpu.memory_space<vmem>>) attributes {dimension_semantics = [#tpu.dimension_semantics<parallel>], iteration_bounds = array<i64: 1>, scalar_prefetch = 0 : i64, scratch_operands = 0 : i64, tpu.core_type = #tpu.core_type<tc>, window_params = [{transform_indices = @transform_0, window_bounds = array<i64: 2, 8>}, {transform_indices = @transform_1, window_bounds = array<i64: 2, 8, 32>}, {pipeline_mode = #tpu.pipeline_mode<synchronous>, transform_indices = @transform_2, window_bounds = array<i64: 8, 32>}, {pipeline_mode = #tpu.pipeline_mode<synchronous>, transform_indices = @transform_3, window_bounds = array<i64: 24, 32, 8>}, {pipeline_mode = #tpu.pipeline_mode<synchronous>, transform_indices = @transform_4, window_bounds = array<i64: 24, 1, 8>}, {pipeline_mode = #tpu.pipeline_mode<synchronous>, transform_indices = @transform_5, window_bounds = array<i64: 8, 8, 32>}, {pipeline_mode = #tpu.pipeline_mode<synchronous>, transform_indices = @transform_6, window_bounds = array<i64: 2, 32, 64>}, {pipeline_mode = #tpu.pipeline_mode<synchronous>, transform_indices = @transform_7, window_bounds = array<i64: 2, 64, 32>}, {pipeline_mode = #tpu.pipeline_mode<synchronous>, transform_indices = @transform_8, window_bounds = array<i64: 2, 8, 64>}, {pipeline_mode = #tpu.pipeline_mode<synchronous>, transform_indices = @transform_9, window_bounds = array<i64: 32, 128>}, {pipeline_mode = #tpu.pipeline_mode<synchronous>, transform_indices = @transform_10, window_bounds = array<i64: 1, 128>}, {transform_indices = @transform_11, window_bounds = array<i64: 2, 8, 128>}]} {
    %c0 = arith.constant 0 : index
    %c0_0 = arith.constant 0 : index
    %c0_1 = arith.constant 0 : index
    %0 = vector.load %arg2[%c0, %c0_0, %c0_1] : memref<2x8x32xf32, #tpu.memory_space<vmem>>, vector<2x8x32xf32>
    %c0_2 = arith.constant 0 : index
    %c0_3 = arith.constant 0 : index
    %1 = vector.load %arg3[%c0_2, %c0_3] : memref<8x32xf32, #tpu.memory_space<vmem>>, vector<8x32xf32>
    %2 = vector.shape_cast %1 : vector<8x32xf32> to vector<1x8x32xf32>
    %3 = vector.broadcast %2 : vector<1x8x32xf32> to vector<2x8x32xf32>
    %4 = arith.addf %0, %3 : vector<2x8x32xf32>
    %5 = vector.shape_cast %4 : vector<2x8x32xf32> to vector<16x32xf32>
    %c0_4 = arith.constant 0 : index
    %c0_5 = arith.constant 0 : index
    %6 = vector.load %arg1[%c0_4, %c0_5] : memref<2x8xf32, #tpu.memory_space<vmem>>, vector<2x8xf32>
    %7 = vector.shape_cast %6 : vector<2x8xf32> to vector<2x1x8xf32>
    %8 = vector.shape_cast %7 : vector<2x1x8xf32> to vector<2x1x8xf32>
    %9 = vector.broadcast %8 : vector<2x1x8xf32> to vector<2x8x8xf32>
    %c0_6 = arith.constant 0 : index
    %c0_7 = arith.constant 0 : index
    %c0_8 = arith.constant 0 : index
    %10 = vector.load %arg9[%c0_6, %c0_7, %c0_8] : memref<2x8x64xf32, #tpu.memory_space<vmem>>, vector<1x1x32xf32>
    %11 = vector.shape_cast %10 : vector<1x1x32xf32> to vector<1x32xf32>
    %c0_9 = arith.constant 0 : index
    %c1 = arith.constant 1 : index
    %c0_10 = arith.constant 0 : index
    %12 = vector.load %arg9[%c0_9, %c1, %c0_10] : memref<2x8x64xf32, #tpu.memory_space<vmem>>, vector<1x1x64xf32>
    %13 = vector.shape_cast %12 : vector<1x1x64xf32> to vector<1x64xf32>
    %c0_11 = arith.constant 0 : index
    %c2 = arith.constant 2 : index
    %c0_12 = arith.constant 0 : index
    %14 = vector.load %arg9[%c0_11, %c2, %c0_12] : memref<2x8x64xf32, #tpu.memory_space<vmem>>, vector<1x1x32xf32>
    %15 = vector.shape_cast %14 : vector<1x1x32xf32> to vector<1x32xf32>
    %c0_13 = arith.constant 0 : index
    %c3 = arith.constant 3 : index
    %c0_14 = arith.constant 0 : index
    %16 = vector.load %arg9[%c0_13, %c3, %c0_14] : memref<2x8x64xf32, #tpu.memory_space<vmem>>, vector<1x1x32xf32>
    %17 = vector.shape_cast %16 : vector<1x1x32xf32> to vector<1x32xf32>
    %c0_15 = arith.constant 0 : index
    %c4 = arith.constant 4 : index
    %c0_16 = arith.constant 0 : index
    %18 = vector.load %arg9[%c0_15, %c4, %c0_16] : memref<2x8x64xf32, #tpu.memory_space<vmem>>, vector<1x1x32xf32>
    %19 = vector.shape_cast %18 : vector<1x1x32xf32> to vector<1x32xf32>
    %c0_17 = arith.constant 0 : index
    %c5 = arith.constant 5 : index
    %c0_18 = arith.constant 0 : index
    %20 = vector.load %arg9[%c0_17, %c5, %c0_18] : memref<2x8x64xf32, #tpu.memory_space<vmem>>, vector<1x1x32xf32>
    %21 = vector.shape_cast %20 : vector<1x1x32xf32> to vector<1x32xf32>
    %c0_19 = arith.constant 0 : index
    %c6 = arith.constant 6 : index
    %c0_20 = arith.constant 0 : index
    %22 = vector.load %arg9[%c0_19, %c6, %c0_20] : memref<2x8x64xf32, #tpu.memory_space<vmem>>, vector<1x1x32xf32>
    %23 = vector.shape_cast %22 : vector<1x1x32xf32> to vector<1x32xf32>
    %24 = arith.truncf %5 : vector<16x32xf32> to vector<16x32xbf16>
    %c0_21 = arith.constant 0 : index
    %c0_22 = arith.constant 0 : index
    %c0_23 = arith.constant 0 : index
    %25 = vector.load %arg4[%c0_21, %c0_22, %c0_23] : memref<24x32x8xbf16, #tpu.memory_space<vmem>>, vector<1x32x8xbf16>
    %26 = vector.shape_cast %25 : vector<1x32x8xbf16> to vector<32x8xbf16>
    %cst = arith.constant dense<0.000000e+00> : vector<16x8xf32>
    %27 = tpu.matmul %24, %26, %cst {dimension_numbers = #tpu.dot_dimension_numbers<[1], [0], [0], [1], [0, 0, 1, 1], [], []>} : vector<16x32xbf16>, vector<32x8xbf16>, vector<16x8xf32> -> vector<16x8xf32>
    %c0_24 = arith.constant 0 : index
    %c0_25 = arith.constant 0 : index
    %c0_26 = arith.constant 0 : index
    %28 = vector.load %arg5[%c0_24, %c0_25, %c0_26] : memref<24x1x8xf32, #tpu.memory_space<vmem>>, vector<1x1x8xf32>
    %29 = vector.shape_cast %28 : vector<1x1x8xf32> to vector<1x8xf32>
    %30 = vector.broadcast %29 : vector<1x8xf32> to vector<16x8xf32>
    %31 = arith.addf %27, %30 : vector<16x8xf32>
    %32 = vector.shape_cast %31 : vector<16x8xf32> to vector<2x8x8xf32>
    %c4_27 = arith.constant 4 : index
    %c0_28 = arith.constant 0 : index
    %c0_29 = arith.constant 0 : index
    %33 = vector.load %arg4[%c4_27, %c0_28, %c0_29] : memref<24x32x8xbf16, #tpu.memory_space<vmem>>, vector<1x32x8xbf16>
    %34 = vector.shape_cast %33 : vector<1x32x8xbf16> to vector<32x8xbf16>
    %cst_30 = arith.constant dense<0.000000e+00> : vector<16x8xf32>
    %35 = tpu.matmul %24, %34, %cst_30 {dimension_numbers = #tpu.dot_dimension_numbers<[1], [0], [0], [1], [0, 0, 1, 1], [], []>} : vector<16x32xbf16>, vector<32x8xbf16>, vector<16x8xf32> -> vector<16x8xf32>
    %c4_31 = arith.constant 4 : index
    %c0_32 = arith.constant 0 : index
    %c0_33 = arith.constant 0 : index
    %36 = vector.load %arg5[%c4_31, %c0_32, %c0_33] : memref<24x1x8xf32, #tpu.memory_space<vmem>>, vector<1x1x8xf32>
    %37 = vector.shape_cast %36 : vector<1x1x8xf32> to vector<1x8xf32>
    %38 = vector.broadcast %37 : vector<1x8xf32> to vector<16x8xf32>
    %39 = arith.addf %35, %38 : vector<16x8xf32>
    %40 = vector.shape_cast %39 : vector<16x8xf32> to vector<2x8x8xf32>
    %c8 = arith.constant 8 : index
    %c0_34 = arith.constant 0 : index
    %c0_35 = arith.constant 0 : index
    %41 = vector.load %arg4[%c8, %c0_34, %c0_35] : memref<24x32x8xbf16, #tpu.memory_space<vmem>>, vector<1x32x8xbf16>
    %42 = vector.shape_cast %41 : vector<1x32x8xbf16> to vector<32x8xbf16>
    %cst_36 = arith.constant dense<0.000000e+00> : vector<16x8xf32>
    %43 = tpu.matmul %24, %42, %cst_36 {dimension_numbers = #tpu.dot_dimension_numbers<[1], [0], [0], [1], [0, 0, 1, 1], [], []>} : vector<16x32xbf16>, vector<32x8xbf16>, vector<16x8xf32> -> vector<16x8xf32>
    %c8_37 = arith.constant 8 : index
    %c0_38 = arith.constant 0 : index
    %c0_39 = arith.constant 0 : index
    %44 = vector.load %arg5[%c8_37, %c0_38, %c0_39] : memref<24x1x8xf32, #tpu.memory_space<vmem>>, vector<1x1x8xf32>
    %45 = vector.shape_cast %44 : vector<1x1x8xf32> to vector<1x8xf32>
    %46 = vector.broadcast %45 : vector<1x8xf32> to vector<16x8xf32>
    %47 = arith.addf %43, %46 : vector<16x8xf32>
    %48 = vector.shape_cast %47 : vector<16x8xf32> to vector<2x8x8xf32>
    "tpu.trace_start"() <{level = 10 : i32, message = "bqd,bkd->bqk"}> : () -> ()
    %cst_40 = arith.constant dense<0.000000e+00> : vector<2x8x8xf32>
    %49 = tpu.matmul %32, %40, %cst_40 {dimension_numbers = #tpu.dot_dimension_numbers<[2], [2], [1], [1], [0, 0, 0, 1, 1, 1], [0], [0]>} : vector<2x8x8xf32>, vector<2x8x8xf32>, vector<2x8x8xf32> -> vector<2x8x8xf32>
    "tpu.trace_stop"() : () -> ()
    %50 = arith.addf %49, %9 : vector<2x8x8xf32>
    %cst_41 = arith.constant dense<0xFF800000> : vector<2x8xf32>
    %51 = vector.multi_reduction <maximumf>, %50, %cst_41 [2] : vector<2x8x8xf32> to vector<2x8xf32>
    %52 = vector.shape_cast %51 : vector<2x8xf32> to vector<2x8x1xf32>
    %53 = vector.broadcast %52 : vector<2x8x1xf32> to vector<2x8x8xf32>
    %54 = arith.subf %50, %53 : vector<2x8x8xf32>
    %55 = math.exp %54 : vector<2x8x8xf32>
    %cst_42 = arith.constant dense<0.000000e+00> : vector<2x8xf32>
    %56 = vector.multi_reduction <add>, %55, %cst_42 [2] : vector<2x8x8xf32> to vector<2x8xf32>
    %57 = vector.shape_cast %56 : vector<2x8xf32> to vector<2x8x1xf32>
    %58 = tpu.reciprocal %57 {approx = true} : vector<2x8x1xf32> -> vector<2x8x1xf32>
    %59 = vector.broadcast %58 : vector<2x8x1xf32> to vector<2x8x8xf32>
    %60 = arith.mulf %55, %59 : vector<2x8x8xf32>
    "tpu.trace_start"() <{level = 10 : i32, message = "bqk,bkd->bqd"}> : () -> ()
    %cst_43 = arith.constant dense<0.000000e+00> : vector<2x8x8xf32>
    %61 = tpu.matmul %60, %48, %cst_43 {dimension_numbers = #tpu.dot_dimension_numbers<[2], [1], [1], [2], [0, 0, 0, 1, 1, 2], [0], [0]>} : vector<2x8x8xf32>, vector<2x8x8xf32>, vector<2x8x8xf32> -> vector<2x8x8xf32>
    "tpu.trace_stop"() : () -> ()
    %62 = vector.shape_cast %61 : vector<2x8x8xf32> to vector<16x8xf32>
    %63 = arith.truncf %62 : vector<16x8xf32> to vector<16x8xbf16>
    %c0_44 = arith.constant 0 : index
    %c0_45 = arith.constant 0 : index
    %c0_46 = arith.constant 0 : index
    %64 = vector.load %arg6[%c0_44, %c0_45, %c0_46] : memref<8x8x32xbf16, #tpu.memory_space<vmem>>, vector<1x8x32xbf16>
    %65 = vector.shape_cast %64 : vector<1x8x32xbf16> to vector<8x32xbf16>
    %cst_47 = arith.constant dense<0.000000e+00> : vector<16x32xf32>
    %66 = tpu.matmul %63, %65, %cst_47 {dimension_numbers = #tpu.dot_dimension_numbers<[1], [0], [0], [1], [0, 0, 1, 1], [], []>} : vector<16x8xbf16>, vector<8x32xbf16>, vector<16x32xf32> -> vector<16x32xf32>
    %c1_48 = arith.constant 1 : index
    %c0_49 = arith.constant 0 : index
    %c0_50 = arith.constant 0 : index
    %67 = vector.load %arg4[%c1_48, %c0_49, %c0_50] : memref<24x32x8xbf16, #tpu.memory_space<vmem>>, vector<1x32x8xbf16>
    %68 = vector.shape_cast %67 : vector<1x32x8xbf16> to vector<32x8xbf16>
    %cst_51 = arith.constant dense<0.000000e+00> : vector<16x8xf32>
    %69 = tpu.matmul %24, %68, %cst_51 {dimension_numbers = #tpu.dot_dimension_numbers<[1], [0], [0], [1], [0, 0, 1, 1], [], []>} : vector<16x32xbf16>, vector<32x8xbf16>, vector<16x8xf32> -> vector<16x8xf32>
    %c1_52 = arith.constant 1 : index
    %c0_53 = arith.constant 0 : index
    %c0_54 = arith.constant 0 : index
    %70 = vector.load %arg5[%c1_52, %c0_53, %c0_54] : memref<24x1x8xf32, #tpu.memory_space<vmem>>, vector<1x1x8xf32>
    %71 = vector.shape_cast %70 : vector<1x1x8xf32> to vector<1x8xf32>
    %72 = vector.broadcast %71 : vector<1x8xf32> to vector<16x8xf32>
    %73 = arith.addf %69, %72 : vector<16x8xf32>
    %74 = vector.shape_cast %73 : vector<16x8xf32> to vector<2x8x8xf32>
    %c5_55 = arith.constant 5 : index
    %c0_56 = arith.constant 0 : index
    %c0_57 = arith.constant 0 : index
    %75 = vector.load %arg4[%c5_55, %c0_56, %c0_57] : memref<24x32x8xbf16, #tpu.memory_space<vmem>>, vector<1x32x8xbf16>
    %76 = vector.shape_cast %75 : vector<1x32x8xbf16> to vector<32x8xbf16>
    %cst_58 = arith.constant dense<0.000000e+00> : vector<16x8xf32>
    %77 = tpu.matmul %24, %76, %cst_58 {dimension_numbers = #tpu.dot_dimension_numbers<[1], [0], [0], [1], [0, 0, 1, 1], [], []>} : vector<16x32xbf16>, vector<32x8xbf16>, vector<16x8xf32> -> vector<16x8xf32>
    %c5_59 = arith.constant 5 : index
    %c0_60 = arith.constant 0 : index
    %c0_61 = arith.constant 0 : index
    %78 = vector.load %arg5[%c5_59, %c0_60, %c0_61] : memref<24x1x8xf32, #tpu.memory_space<vmem>>, vector<1x1x8xf32>
    %79 = vector.shape_cast %78 : vector<1x1x8xf32> to vector<1x8xf32>
    %80 = vector.broadcast %79 : vector<1x8xf32> to vector<16x8xf32>
    %81 = arith.addf %77, %80 : vector<16x8xf32>
    %82 = vector.shape_cast %81 : vector<16x8xf32> to vector<2x8x8xf32>
    %c9 = arith.constant 9 : index
    %c0_62 = arith.constant 0 : index
    %c0_63 = arith.constant 0 : index
    %83 = vector.load %arg4[%c9, %c0_62, %c0_63] : memref<24x32x8xbf16, #tpu.memory_space<vmem>>, vector<1x32x8xbf16>
    %84 = vector.shape_cast %83 : vector<1x32x8xbf16> to vector<32x8xbf16>
    %cst_64 = arith.constant dense<0.000000e+00> : vector<16x8xf32>
    %85 = tpu.matmul %24, %84, %cst_64 {dimension_numbers = #tpu.dot_dimension_numbers<[1], [0], [0], [1], [0, 0, 1, 1], [], []>} : vector<16x32xbf16>, vector<32x8xbf16>, vector<16x8xf32> -> vector<16x8xf32>
    %c9_65 = arith.constant 9 : index
    %c0_66 = arith.constant 0 : index
    %c0_67 = arith.constant 0 : index
    %86 = vector.load %arg5[%c9_65, %c0_66, %c0_67] : memref<24x1x8xf32, #tpu.memory_space<vmem>>, vector<1x1x8xf32>
    %87 = vector.shape_cast %86 : vector<1x1x8xf32> to vector<1x8xf32>
    %88 = vector.broadcast %87 : vector<1x8xf32> to vector<16x8xf32>
    %89 = arith.addf %85, %88 : vector<16x8xf32>
    %90 = vector.shape_cast %89 : vector<16x8xf32> to vector<2x8x8xf32>
    "tpu.trace_start"() <{level = 10 : i32, message = "bqd,bkd->bqk"}> : () -> ()
    %cst_68 = arith.constant dense<0.000000e+00> : vector<2x8x8xf32>
    %91 = tpu.matmul %74, %82, %cst_68 {dimension_numbers = #tpu.dot_dimension_numbers<[2], [2], [1], [1], [0, 0, 0, 1, 1, 1], [0], [0]>} : vector<2x8x8xf32>, vector<2x8x8xf32>, vector<2x8x8xf32> -> vector<2x8x8xf32>
    "tpu.trace_stop"() : () -> ()
    %92 = arith.addf %91, %9 : vector<2x8x8xf32>
    %cst_69 = arith.constant dense<0xFF800000> : vector<2x8xf32>
    %93 = vector.multi_reduction <maximumf>, %92, %cst_69 [2] : vector<2x8x8xf32> to vector<2x8xf32>
    %94 = vector.shape_cast %93 : vector<2x8xf32> to vector<2x8x1xf32>
    %95 = vector.broadcast %94 : vector<2x8x1xf32> to vector<2x8x8xf32>
    %96 = arith.subf %92, %95 : vector<2x8x8xf32>
    %97 = math.exp %96 : vector<2x8x8xf32>
    %cst_70 = arith.constant dense<0.000000e+00> : vector<2x8xf32>
    %98 = vector.multi_reduction <add>, %97, %cst_70 [2] : vector<2x8x8xf32> to vector<2x8xf32>
    %99 = vector.shape_cast %98 : vector<2x8xf32> to vector<2x8x1xf32>
    %100 = tpu.reciprocal %99 {approx = true} : vector<2x8x1xf32> -> vector<2x8x1xf32>
    %101 = vector.broadcast %100 : vector<2x8x1xf32> to vector<2x8x8xf32>
    %102 = arith.mulf %97, %101 : vector<2x8x8xf32>
    "tpu.trace_start"() <{level = 10 : i32, message = "bqk,bkd->bqd"}> : () -> ()
    %cst_71 = arith.constant dense<0.000000e+00> : vector<2x8x8xf32>
    %103 = tpu.matmul %102, %90, %cst_71 {dimension_numbers = #tpu.dot_dimension_numbers<[2], [1], [1], [2], [0, 0, 0, 1, 1, 2], [0], [0]>} : vector<2x8x8xf32>, vector<2x8x8xf32>, vector<2x8x8xf32> -> vector<2x8x8xf32>
    "tpu.trace_stop"() : () -> ()
    %104 = vector.shape_cast %103 : vector<2x8x8xf32> to vector<16x8xf32>
    %105 = arith.truncf %104 : vector<16x8xf32> to vector<16x8xbf16>
    %c1_72 = arith.constant 1 : index
    %c0_73 = arith.constant 0 : index
    %c0_74 = arith.constant 0 : index
    %106 = vector.load %arg6[%c1_72, %c0_73, %c0_74] : memref<8x8x32xbf16, #tpu.memory_space<vmem>>, vector<1x8x32xbf16>
    %107 = vector.shape_cast %106 : vector<1x8x32xbf16> to vector<8x32xbf16>
    %cst_75 = arith.constant dense<0.000000e+00> : vector<16x32xf32>
    %108 = tpu.matmul %105, %107, %cst_75 {dimension_numbers = #tpu.dot_dimension_numbers<[1], [0], [0], [1], [0, 0, 1, 1], [], []>} : vector<16x8xbf16>, vector<8x32xbf16>, vector<16x32xf32> -> vector<16x32xf32>
    %109 = arith.addf %66, %108 : vector<16x32xf32>
    %c2_76 = arith.constant 2 : index
    %c0_77 = arith.constant 0 : index
    %c0_78 = arith.constant 0 : index
    %110 = vector.load %arg4[%c2_76, %c0_77, %c0_78] : memref<24x32x8xbf16, #tpu.memory_space<vmem>>, vector<1x32x8xbf16>
    %111 = vector.shape_cast %110 : vector<1x32x8xbf16> to vector<32x8xbf16>
    %cst_79 = arith.constant dense<0.000000e+00> : vector<16x8xf32>
    %112 = tpu.matmul %24, %111, %cst_79 {dimension_numbers = #tpu.dot_dimension_numbers<[1], [0], [0], [1], [0, 0, 1, 1], [], []>} : vector<16x32xbf16>, vector<32x8xbf16>, vector<16x8xf32> -> vector<16x8xf32>
    %c2_80 = arith.constant 2 : index
    %c0_81 = arith.constant 0 : index
    %c0_82 = arith.constant 0 : index
    %113 = vector.load %arg5[%c2_80, %c0_81, %c0_82] : memref<24x1x8xf32, #tpu.memory_space<vmem>>, vector<1x1x8xf32>
    %114 = vector.shape_cast %113 : vector<1x1x8xf32> to vector<1x8xf32>
    %115 = vector.broadcast %114 : vector<1x8xf32> to vector<16x8xf32>
    %116 = arith.addf %112, %115 : vector<16x8xf32>
    %117 = vector.shape_cast %116 : vector<16x8xf32> to vector<2x8x8xf32>
    %c6_83 = arith.constant 6 : index
    %c0_84 = arith.constant 0 : index
    %c0_85 = arith.constant 0 : index
    %118 = vector.load %arg4[%c6_83, %c0_84, %c0_85] : memref<24x32x8xbf16, #tpu.memory_space<vmem>>, vector<1x32x8xbf16>
    %119 = vector.shape_cast %118 : vector<1x32x8xbf16> to vector<32x8xbf16>
    %cst_86 = arith.constant dense<0.000000e+00> : vector<16x8xf32>
    %120 = tpu.matmul %24, %119, %cst_86 {dimension_numbers = #tpu.dot_dimension_numbers<[1], [0], [0], [1], [0, 0, 1, 1], [], []>} : vector<16x32xbf16>, vector<32x8xbf16>, vector<16x8xf32> -> vector<16x8xf32>
    %c6_87 = arith.constant 6 : index
    %c0_88 = arith.constant 0 : index
    %c0_89 = arith.constant 0 : index
    %121 = vector.load %arg5[%c6_87, %c0_88, %c0_89] : memref<24x1x8xf32, #tpu.memory_space<vmem>>, vector<1x1x8xf32>
    %122 = vector.shape_cast %121 : vector<1x1x8xf32> to vector<1x8xf32>
    %123 = vector.broadcast %122 : vector<1x8xf32> to vector<16x8xf32>
    %124 = arith.addf %120, %123 : vector<16x8xf32>
    %125 = vector.shape_cast %124 : vector<16x8xf32> to vector<2x8x8xf32>
    %c10 = arith.constant 10 : index
    %c0_90 = arith.constant 0 : index
    %c0_91 = arith.constant 0 : index
    %126 = vector.load %arg4[%c10, %c0_90, %c0_91] : memref<24x32x8xbf16, #tpu.memory_space<vmem>>, vector<1x32x8xbf16>
    %127 = vector.shape_cast %126 : vector<1x32x8xbf16> to vector<32x8xbf16>
    %cst_92 = arith.constant dense<0.000000e+00> : vector<16x8xf32>
    %128 = tpu.matmul %24, %127, %cst_92 {dimension_numbers = #tpu.dot_dimension_numbers<[1], [0], [0], [1], [0, 0, 1, 1], [], []>} : vector<16x32xbf16>, vector<32x8xbf16>, vector<16x8xf32> -> vector<16x8xf32>
    %c10_93 = arith.constant 10 : index
    %c0_94 = arith.constant 0 : index
    %c0_95 = arith.constant 0 : index
    %129 = vector.load %arg5[%c10_93, %c0_94, %c0_95] : memref<24x1x8xf32, #tpu.memory_space<vmem>>, vector<1x1x8xf32>
    %130 = vector.shape_cast %129 : vector<1x1x8xf32> to vector<1x8xf32>
    %131 = vector.broadcast %130 : vector<1x8xf32> to vector<16x8xf32>
    %132 = arith.addf %128, %131 : vector<16x8xf32>
    %133 = vector.shape_cast %132 : vector<16x8xf32> to vector<2x8x8xf32>
    "tpu.trace_start"() <{level = 10 : i32, message = "bqd,bkd->bqk"}> : () -> ()
    %cst_96 = arith.constant dense<0.000000e+00> : vector<2x8x8xf32>
    %134 = tpu.matmul %117, %125, %cst_96 {dimension_numbers = #tpu.dot_dimension_numbers<[2], [2], [1], [1], [0, 0, 0, 1, 1, 1], [0], [0]>} : vector<2x8x8xf32>, vector<2x8x8xf32>, vector<2x8x8xf32> -> vector<2x8x8xf32>
    "tpu.trace_stop"() : () -> ()
    %135 = arith.addf %134, %9 : vector<2x8x8xf32>
    %cst_97 = arith.constant dense<0xFF800000> : vector<2x8xf32>
    %136 = vector.multi_reduction <maximumf>, %135, %cst_97 [2] : vector<2x8x8xf32> to vector<2x8xf32>
    %137 = vector.shape_cast %136 : vector<2x8xf32> to vector<2x8x1xf32>
    %138 = vector.broadcast %137 : vector<2x8x1xf32> to vector<2x8x8xf32>
    %139 = arith.subf %135, %138 : vector<2x8x8xf32>
    %140 = math.exp %139 : vector<2x8x8xf32>
    %cst_98 = arith.constant dense<0.000000e+00> : vector<2x8xf32>
    %141 = vector.multi_reduction <add>, %140, %cst_98 [2] : vector<2x8x8xf32> to vector<2x8xf32>
    %142 = vector.shape_cast %141 : vector<2x8xf32> to vector<2x8x1xf32>
    %143 = tpu.reciprocal %142 {approx = true} : vector<2x8x1xf32> -> vector<2x8x1xf32>
    %144 = vector.broadcast %143 : vector<2x8x1xf32> to vector<2x8x8xf32>
    %145 = arith.mulf %140, %144 : vector<2x8x8xf32>
    "tpu.trace_start"() <{level = 10 : i32, message = "bqk,bkd->bqd"}> : () -> ()
    %cst_99 = arith.constant dense<0.000000e+00> : vector<2x8x8xf32>
    %146 = tpu.matmul %145, %133, %cst_99 {dimension_numbers = #tpu.dot_dimension_numbers<[2], [1], [1], [2], [0, 0, 0, 1, 1, 2], [0], [0]>} : vector<2x8x8xf32>, vector<2x8x8xf32>, vector<2x8x8xf32> -> vector<2x8x8xf32>
    "tpu.trace_stop"() : () -> ()
    %147 = vector.shape_cast %146 : vector<2x8x8xf32> to vector<16x8xf32>
    %148 = arith.truncf %147 : vector<16x8xf32> to vector<16x8xbf16>
    %c2_100 = arith.constant 2 : index
    %c0_101 = arith.constant 0 : index
    %c0_102 = arith.constant 0 : index
    %149 = vector.load %arg6[%c2_100, %c0_101, %c0_102] : memref<8x8x32xbf16, #tpu.memory_space<vmem>>, vector<1x8x32xbf16>
    %150 = vector.shape_cast %149 : vector<1x8x32xbf16> to vector<8x32xbf16>
    %cst_103 = arith.constant dense<0.000000e+00> : vector<16x32xf32>
    %151 = tpu.matmul %148, %150, %cst_103 {dimension_numbers = #tpu.dot_dimension_numbers<[1], [0], [0], [1], [0, 0, 1, 1], [], []>} : vector<16x8xbf16>, vector<8x32xbf16>, vector<16x32xf32> -> vector<16x32xf32>
    %152 = arith.addf %109, %151 : vector<16x32xf32>
    %c3_104 = arith.constant 3 : index
    %c0_105 = arith.constant 0 : index
    %c0_106 = arith.constant 0 : index
    %153 = vector.load %arg4[%c3_104, %c0_105, %c0_106] : memref<24x32x8xbf16, #tpu.memory_space<vmem>>, vector<1x32x8xbf16>
    %154 = vector.shape_cast %153 : vector<1x32x8xbf16> to vector<32x8xbf16>
    %cst_107 = arith.constant dense<0.000000e+00> : vector<16x8xf32>
    %155 = tpu.matmul %24, %154, %cst_107 {dimension_numbers = #tpu.dot_dimension_numbers<[1], [0], [0], [1], [0, 0, 1, 1], [], []>} : vector<16x32xbf16>, vector<32x8xbf16>, vector<16x8xf32> -> vector<16x8xf32>
    %c3_108 = arith.constant 3 : index
    %c0_109 = arith.constant 0 : index
    %c0_110 = arith.constant 0 : index
    %156 = vector.load %arg5[%c3_108, %c0_109, %c0_110] : memref<24x1x8xf32, #tpu.memory_space<vmem>>, vector<1x1x8xf32>
    %157 = vector.shape_cast %156 : vector<1x1x8xf32> to vector<1x8xf32>
    %158 = vector.broadcast %157 : vector<1x8xf32> to vector<16x8xf32>
    %159 = arith.addf %155, %158 : vector<16x8xf32>
    %160 = vector.shape_cast %159 : vector<16x8xf32> to vector<2x8x8xf32>
    %c7 = arith.constant 7 : index
    %c0_111 = arith.constant 0 : index
    %c0_112 = arith.constant 0 : index
    %161 = vector.load %arg4[%c7, %c0_111, %c0_112] : memref<24x32x8xbf16, #tpu.memory_space<vmem>>, vector<1x32x8xbf16>
    %162 = vector.shape_cast %161 : vector<1x32x8xbf16> to vector<32x8xbf16>
    %cst_113 = arith.constant dense<0.000000e+00> : vector<16x8xf32>
    %163 = tpu.matmul %24, %162, %cst_113 {dimension_numbers = #tpu.dot_dimension_numbers<[1], [0], [0], [1], [0, 0, 1, 1], [], []>} : vector<16x32xbf16>, vector<32x8xbf16>, vector<16x8xf32> -> vector<16x8xf32>
    %c7_114 = arith.constant 7 : index
    %c0_115 = arith.constant 0 : index
    %c0_116 = arith.constant 0 : index
    %164 = vector.load %arg5[%c7_114, %c0_115, %c0_116] : memref<24x1x8xf32, #tpu.memory_space<vmem>>, vector<1x1x8xf32>
    %165 = vector.shape_cast %164 : vector<1x1x8xf32> to vector<1x8xf32>
    %166 = vector.broadcast %165 : vector<1x8xf32> to vector<16x8xf32>
    %167 = arith.addf %163, %166 : vector<16x8xf32>
    %168 = vector.shape_cast %167 : vector<16x8xf32> to vector<2x8x8xf32>
    %c11 = arith.constant 11 : index
    %c0_117 = arith.constant 0 : index
    %c0_118 = arith.constant 0 : index
    %169 = vector.load %arg4[%c11, %c0_117, %c0_118] : memref<24x32x8xbf16, #tpu.memory_space<vmem>>, vector<1x32x8xbf16>
    %170 = vector.shape_cast %169 : vector<1x32x8xbf16> to vector<32x8xbf16>
    %cst_119 = arith.constant dense<0.000000e+00> : vector<16x8xf32>
    %171 = tpu.matmul %24, %170, %cst_119 {dimension_numbers = #tpu.dot_dimension_numbers<[1], [0], [0], [1], [0, 0, 1, 1], [], []>} : vector<16x32xbf16>, vector<32x8xbf16>, vector<16x8xf32> -> vector<16x8xf32>
    %c11_120 = arith.constant 11 : index
    %c0_121 = arith.constant 0 : index
    %c0_122 = arith.constant 0 : index
    %172 = vector.load %arg5[%c11_120, %c0_121, %c0_122] : memref<24x1x8xf32, #tpu.memory_space<vmem>>, vector<1x1x8xf32>
    %173 = vector.shape_cast %172 : vector<1x1x8xf32> to vector<1x8xf32>
    %174 = vector.broadcast %173 : vector<1x8xf32> to vector<16x8xf32>
    %175 = arith.addf %171, %174 : vector<16x8xf32>
    %176 = vector.shape_cast %175 : vector<16x8xf32> to vector<2x8x8xf32>
    "tpu.trace_start"() <{level = 10 : i32, message = "bqd,bkd->bqk"}> : () -> ()
    %cst_123 = arith.constant dense<0.000000e+00> : vector<2x8x8xf32>
    %177 = tpu.matmul %160, %168, %cst_123 {dimension_numbers = #tpu.dot_dimension_numbers<[2], [2], [1], [1], [0, 0, 0, 1, 1, 1], [0], [0]>} : vector<2x8x8xf32>, vector<2x8x8xf32>, vector<2x8x8xf32> -> vector<2x8x8xf32>
    "tpu.trace_stop"() : () -> ()
    %178 = arith.addf %177, %9 : vector<2x8x8xf32>
    %cst_124 = arith.constant dense<0xFF800000> : vector<2x8xf32>
    %179 = vector.multi_reduction <maximumf>, %178, %cst_124 [2] : vector<2x8x8xf32> to vector<2x8xf32>
    %180 = vector.shape_cast %179 : vector<2x8xf32> to vector<2x8x1xf32>
    %181 = vector.broadcast %180 : vector<2x8x1xf32> to vector<2x8x8xf32>
    %182 = arith.subf %178, %181 : vector<2x8x8xf32>
    %183 = math.exp %182 : vector<2x8x8xf32>
    %cst_125 = arith.constant dense<0.000000e+00> : vector<2x8xf32>
    %184 = vector.multi_reduction <add>, %183, %cst_125 [2] : vector<2x8x8xf32> to vector<2x8xf32>
    %185 = vector.shape_cast %184 : vector<2x8xf32> to vector<2x8x1xf32>
    %186 = tpu.reciprocal %185 {approx = true} : vector<2x8x1xf32> -> vector<2x8x1xf32>
    %187 = vector.broadcast %186 : vector<2x8x1xf32> to vector<2x8x8xf32>
    %188 = arith.mulf %183, %187 : vector<2x8x8xf32>
    "tpu.trace_start"() <{level = 10 : i32, message = "bqk,bkd->bqd"}> : () -> ()
    %cst_126 = arith.constant dense<0.000000e+00> : vector<2x8x8xf32>
    %189 = tpu.matmul %188, %176, %cst_126 {dimension_numbers = #tpu.dot_dimension_numbers<[2], [1], [1], [2], [0, 0, 0, 1, 1, 2], [0], [0]>} : vector<2x8x8xf32>, vector<2x8x8xf32>, vector<2x8x8xf32> -> vector<2x8x8xf32>
    "tpu.trace_stop"() : () -> ()
    %190 = vector.shape_cast %189 : vector<2x8x8xf32> to vector<16x8xf32>
    %191 = arith.truncf %190 : vector<16x8xf32> to vector<16x8xbf16>
    %c3_127 = arith.constant 3 : index
    %c0_128 = arith.constant 0 : index
    %c0_129 = arith.constant 0 : index
    %192 = vector.load %arg6[%c3_127, %c0_128, %c0_129] : memref<8x8x32xbf16, #tpu.memory_space<vmem>>, vector<1x8x32xbf16>
    %193 = vector.shape_cast %192 : vector<1x8x32xbf16> to vector<8x32xbf16>
    %cst_130 = arith.constant dense<0.000000e+00> : vector<16x32xf32>
    %194 = tpu.matmul %191, %193, %cst_130 {dimension_numbers = #tpu.dot_dimension_numbers<[1], [0], [0], [1], [0, 0, 1, 1], [], []>} : vector<16x8xbf16>, vector<8x32xbf16>, vector<16x32xf32> -> vector<16x32xf32>
    %195 = arith.addf %152, %194 : vector<16x32xf32>
    %196 = arith.addf %5, %195 : vector<16x32xf32>
    %197 = vector.broadcast %11 : vector<1x32xf32> to vector<16x32xf32>
    %198 = arith.addf %196, %197 : vector<16x32xf32>
    %cst_131 = arith.constant dense<0.000000e+00> : vector<16xf32>
    %199 = vector.multi_reduction <add>, %198, %cst_131 [1] : vector<16x32xf32> to vector<16xf32>
    %200 = vector.shape_cast %199 : vector<16xf32> to vector<16x1xf32>
    %cst_132 = arith.constant 3.200000e+01 : f32
    %201 = vector.broadcast %cst_132 : f32 to vector<16x1xf32>
    %202 = arith.divf %200, %201 : vector<16x1xf32>
    %203 = arith.mulf %198, %198 : vector<16x32xf32>
    %cst_133 = arith.constant dense<0.000000e+00> : vector<16xf32>
    %204 = vector.multi_reduction <add>, %203, %cst_133 [1] : vector<16x32xf32> to vector<16xf32>
    %205 = vector.shape_cast %204 : vector<16xf32> to vector<16x1xf32>
    %cst_134 = arith.constant 3.200000e+01 : f32
    %206 = vector.broadcast %cst_134 : f32 to vector<16x1xf32>
    %207 = arith.divf %205, %206 : vector<16x1xf32>
    %208 = arith.mulf %202, %202 : vector<16x1xf32>
    %209 = arith.subf %207, %208 : vector<16x1xf32>
    %cst_135 = arith.constant 0.000000e+00 : f32
    %210 = vector.broadcast %cst_135 : f32 to vector<16x1xf32>
    %211 = arith.maximumf %209, %210 : vector<16x1xf32>
    %212 = vector.broadcast %202 : vector<16x1xf32> to vector<16x32xf32>
    %213 = arith.subf %198, %212 : vector<16x32xf32>
    %cst_136 = arith.constant 9.99999996E-13 : f32
    %214 = vector.broadcast %cst_136 : f32 to vector<16x1xf32>
    %215 = arith.addf %211, %214 : vector<16x1xf32>
    %216 = math.rsqrt %215 : vector<16x1xf32>
    %217 = vector.broadcast %216 : vector<16x1xf32> to vector<16x32xf32>
    %218 = arith.mulf %213, %217 : vector<16x32xf32>
    %219 = vector.broadcast %17 : vector<1x32xf32> to vector<16x32xf32>
    %220 = arith.mulf %218, %219 : vector<16x32xf32>
    %221 = vector.broadcast %19 : vector<1x32xf32> to vector<16x32xf32>
    %222 = arith.addf %220, %221 : vector<16x32xf32>
    %223 = arith.truncf %222 : vector<16x32xf32> to vector<16x32xbf16>
    %c0_137 = arith.constant 0 : index
    %c0_138 = arith.constant 0 : index
    %c0_139 = arith.constant 0 : index
    %224 = vector.load %arg7[%c0_137, %c0_138, %c0_139] : memref<2x32x64xbf16, #tpu.memory_space<vmem>>, vector<1x32x64xbf16>
    %225 = vector.shape_cast %224 : vector<1x32x64xbf16> to vector<32x64xbf16>
    %cst_140 = arith.constant dense<0.000000e+00> : vector<16x64xf32>
    %226 = tpu.matmul %223, %225, %cst_140 {dimension_numbers = #tpu.dot_dimension_numbers<[1], [0], [0], [1], [0, 0, 1, 1], [], []>} : vector<16x32xbf16>, vector<32x64xbf16>, vector<16x64xf32> -> vector<16x64xf32>
    %227 = vector.broadcast %13 : vector<1x64xf32> to vector<16x64xf32>
    %228 = arith.addf %226, %227 : vector<16x64xf32>
    %229 = arith.mulf %228, %228 : vector<16x64xf32>
    %230 = arith.mulf %228, %229 : vector<16x64xf32>
    %cst_141 = arith.constant 4.471500e-02 : f32
    %231 = vector.broadcast %cst_141 : f32 to vector<16x64xf32>
    %232 = arith.mulf %231, %230 : vector<16x64xf32>
    %233 = arith.addf %228, %232 : vector<16x64xf32>
    %cst_142 = arith.constant 0.797884583 : f32
    %234 = vector.broadcast %cst_142 : f32 to vector<16x64xf32>
    %235 = arith.mulf %234, %233 : vector<16x64xf32>
    %236 = math.tanh %235 : vector<16x64xf32>
    %cst_143 = arith.constant 1.000000e+00 : f32
    %237 = vector.broadcast %cst_143 : f32 to vector<16x64xf32>
    %238 = arith.addf %237, %236 : vector<16x64xf32>
    %cst_144 = arith.constant 5.000000e-01 : f32
    %239 = vector.broadcast %cst_144 : f32 to vector<16x64xf32>
    %240 = arith.mulf %239, %238 : vector<16x64xf32>
    %241 = arith.mulf %228, %240 : vector<16x64xf32>
    %242 = arith.truncf %241 : vector<16x64xf32> to vector<16x64xbf16>
    %c0_145 = arith.constant 0 : index
    %c0_146 = arith.constant 0 : index
    %c0_147 = arith.constant 0 : index
    %243 = vector.load %arg8[%c0_145, %c0_146, %c0_147] : memref<2x64x32xbf16, #tpu.memory_space<vmem>>, vector<1x64x32xbf16>
    %244 = vector.shape_cast %243 : vector<1x64x32xbf16> to vector<64x32xbf16>
    %cst_148 = arith.constant dense<0.000000e+00> : vector<16x32xf32>
    %245 = tpu.matmul %242, %244, %cst_148 {dimension_numbers = #tpu.dot_dimension_numbers<[1], [0], [0], [1], [0, 0, 1, 1], [], []>} : vector<16x64xbf16>, vector<64x32xbf16>, vector<16x32xf32> -> vector<16x32xf32>
    %246 = vector.broadcast %15 : vector<1x32xf32> to vector<16x32xf32>
    %247 = arith.addf %245, %246 : vector<16x32xf32>
    %248 = arith.addf %222, %247 : vector<16x32xf32>
    %cst_149 = arith.constant dense<0.000000e+00> : vector<16xf32>
    %249 = vector.multi_reduction <add>, %248, %cst_149 [1] : vector<16x32xf32> to vector<16xf32>
    %250 = vector.shape_cast %249 : vector<16xf32> to vector<16x1xf32>
    %cst_150 = arith.constant 3.200000e+01 : f32
    %251 = vector.broadcast %cst_150 : f32 to vector<16x1xf32>
    %252 = arith.divf %250, %251 : vector<16x1xf32>
    %253 = arith.mulf %248, %248 : vector<16x32xf32>
    %cst_151 = arith.constant dense<0.000000e+00> : vector<16xf32>
    %254 = vector.multi_reduction <add>, %253, %cst_151 [1] : vector<16x32xf32> to vector<16xf32>
    %255 = vector.shape_cast %254 : vector<16xf32> to vector<16x1xf32>
    %cst_152 = arith.constant 3.200000e+01 : f32
    %256 = vector.broadcast %cst_152 : f32 to vector<16x1xf32>
    %257 = arith.divf %255, %256 : vector<16x1xf32>
    %258 = arith.mulf %252, %252 : vector<16x1xf32>
    %259 = arith.subf %257, %258 : vector<16x1xf32>
    %cst_153 = arith.constant 0.000000e+00 : f32
    %260 = vector.broadcast %cst_153 : f32 to vector<16x1xf32>
    %261 = arith.maximumf %259, %260 : vector<16x1xf32>
    %262 = vector.broadcast %252 : vector<16x1xf32> to vector<16x32xf32>
    %263 = arith.subf %248, %262 : vector<16x32xf32>
    %cst_154 = arith.constant 9.99999996E-13 : f32
    %264 = vector.broadcast %cst_154 : f32 to vector<16x1xf32>
    %265 = arith.addf %261, %264 : vector<16x1xf32>
    %266 = math.rsqrt %265 : vector<16x1xf32>
    %267 = vector.broadcast %266 : vector<16x1xf32> to vector<16x32xf32>
    %268 = arith.mulf %263, %267 : vector<16x32xf32>
    %269 = vector.broadcast %21 : vector<1x32xf32> to vector<16x32xf32>
    %270 = arith.mulf %268, %269 : vector<16x32xf32>
    %271 = vector.broadcast %23 : vector<1x32xf32> to vector<16x32xf32>
    %272 = arith.addf %270, %271 : vector<16x32xf32>
    %c1_155 = arith.constant 1 : index
    %c0_156 = arith.constant 0 : index
    %c0_157 = arith.constant 0 : index
    %273 = vector.load %arg9[%c1_155, %c0_156, %c0_157] : memref<2x8x64xf32, #tpu.memory_space<vmem>>, vector<1x1x32xf32>
    %274 = vector.shape_cast %273 : vector<1x1x32xf32> to vector<1x32xf32>
    %c1_158 = arith.constant 1 : index
    %c1_159 = arith.constant 1 : index
    %c0_160 = arith.constant 0 : index
    %275 = vector.load %arg9[%c1_158, %c1_159, %c0_160] : memref<2x8x64xf32, #tpu.memory_space<vmem>>, vector<1x1x64xf32>
    %276 = vector.shape_cast %275 : vector<1x1x64xf32> to vector<1x64xf32>
    %c1_161 = arith.constant 1 : index
    %c2_162 = arith.constant 2 : index
    %c0_163 = arith.constant 0 : index
    %277 = vector.load %arg9[%c1_161, %c2_162, %c0_163] : memref<2x8x64xf32, #tpu.memory_space<vmem>>, vector<1x1x32xf32>
    %278 = vector.shape_cast %277 : vector<1x1x32xf32> to vector<1x32xf32>
    %c1_164 = arith.constant 1 : index
    %c3_165 = arith.constant 3 : index
    %c0_166 = arith.constant 0 : index
    %279 = vector.load %arg9[%c1_164, %c3_165, %c0_166] : memref<2x8x64xf32, #tpu.memory_space<vmem>>, vector<1x1x32xf32>
    %280 = vector.shape_cast %279 : vector<1x1x32xf32> to vector<1x32xf32>
    %c1_167 = arith.constant 1 : index
    %c4_168 = arith.constant 4 : index
    %c0_169 = arith.constant 0 : index
    %281 = vector.load %arg9[%c1_167, %c4_168, %c0_169] : memref<2x8x64xf32, #tpu.memory_space<vmem>>, vector<1x1x32xf32>
    %282 = vector.shape_cast %281 : vector<1x1x32xf32> to vector<1x32xf32>
    %c1_170 = arith.constant 1 : index
    %c5_171 = arith.constant 5 : index
    %c0_172 = arith.constant 0 : index
    %283 = vector.load %arg9[%c1_170, %c5_171, %c0_172] : memref<2x8x64xf32, #tpu.memory_space<vmem>>, vector<1x1x32xf32>
    %284 = vector.shape_cast %283 : vector<1x1x32xf32> to vector<1x32xf32>
    %c1_173 = arith.constant 1 : index
    %c6_174 = arith.constant 6 : index
    %c0_175 = arith.constant 0 : index
    %285 = vector.load %arg9[%c1_173, %c6_174, %c0_175] : memref<2x8x64xf32, #tpu.memory_space<vmem>>, vector<1x1x32xf32>
    %286 = vector.shape_cast %285 : vector<1x1x32xf32> to vector<1x32xf32>
    %287 = arith.truncf %272 : vector<16x32xf32> to vector<16x32xbf16>
    %c12 = arith.constant 12 : index
    %c0_176 = arith.constant 0 : index
    %c0_177 = arith.constant 0 : index
    %288 = vector.load %arg4[%c12, %c0_176, %c0_177] : memref<24x32x8xbf16, #tpu.memory_space<vmem>>, vector<1x32x8xbf16>
    %289 = vector.shape_cast %288 : vector<1x32x8xbf16> to vector<32x8xbf16>
    %cst_178 = arith.constant dense<0.000000e+00> : vector<16x8xf32>
    %290 = tpu.matmul %287, %289, %cst_178 {dimension_numbers = #tpu.dot_dimension_numbers<[1], [0], [0], [1], [0, 0, 1, 1], [], []>} : vector<16x32xbf16>, vector<32x8xbf16>, vector<16x8xf32> -> vector<16x8xf32>
    %c12_179 = arith.constant 12 : index
    %c0_180 = arith.constant 0 : index
    %c0_181 = arith.constant 0 : index
    %291 = vector.load %arg5[%c12_179, %c0_180, %c0_181] : memref<24x1x8xf32, #tpu.memory_space<vmem>>, vector<1x1x8xf32>
    %292 = vector.shape_cast %291 : vector<1x1x8xf32> to vector<1x8xf32>
    %293 = vector.broadcast %292 : vector<1x8xf32> to vector<16x8xf32>
    %294 = arith.addf %290, %293 : vector<16x8xf32>
    %295 = vector.shape_cast %294 : vector<16x8xf32> to vector<2x8x8xf32>
    %c16 = arith.constant 16 : index
    %c0_182 = arith.constant 0 : index
    %c0_183 = arith.constant 0 : index
    %296 = vector.load %arg4[%c16, %c0_182, %c0_183] : memref<24x32x8xbf16, #tpu.memory_space<vmem>>, vector<1x32x8xbf16>
    %297 = vector.shape_cast %296 : vector<1x32x8xbf16> to vector<32x8xbf16>
    %cst_184 = arith.constant dense<0.000000e+00> : vector<16x8xf32>
    %298 = tpu.matmul %287, %297, %cst_184 {dimension_numbers = #tpu.dot_dimension_numbers<[1], [0], [0], [1], [0, 0, 1, 1], [], []>} : vector<16x32xbf16>, vector<32x8xbf16>, vector<16x8xf32> -> vector<16x8xf32>
    %c16_185 = arith.constant 16 : index
    %c0_186 = arith.constant 0 : index
    %c0_187 = arith.constant 0 : index
    %299 = vector.load %arg5[%c16_185, %c0_186, %c0_187] : memref<24x1x8xf32, #tpu.memory_space<vmem>>, vector<1x1x8xf32>
    %300 = vector.shape_cast %299 : vector<1x1x8xf32> to vector<1x8xf32>
    %301 = vector.broadcast %300 : vector<1x8xf32> to vector<16x8xf32>
    %302 = arith.addf %298, %301 : vector<16x8xf32>
    %303 = vector.shape_cast %302 : vector<16x8xf32> to vector<2x8x8xf32>
    %c20 = arith.constant 20 : index
    %c0_188 = arith.constant 0 : index
    %c0_189 = arith.constant 0 : index
    %304 = vector.load %arg4[%c20, %c0_188, %c0_189] : memref<24x32x8xbf16, #tpu.memory_space<vmem>>, vector<1x32x8xbf16>
    %305 = vector.shape_cast %304 : vector<1x32x8xbf16> to vector<32x8xbf16>
    %cst_190 = arith.constant dense<0.000000e+00> : vector<16x8xf32>
    %306 = tpu.matmul %287, %305, %cst_190 {dimension_numbers = #tpu.dot_dimension_numbers<[1], [0], [0], [1], [0, 0, 1, 1], [], []>} : vector<16x32xbf16>, vector<32x8xbf16>, vector<16x8xf32> -> vector<16x8xf32>
    %c20_191 = arith.constant 20 : index
    %c0_192 = arith.constant 0 : index
    %c0_193 = arith.constant 0 : index
    %307 = vector.load %arg5[%c20_191, %c0_192, %c0_193] : memref<24x1x8xf32, #tpu.memory_space<vmem>>, vector<1x1x8xf32>
    %308 = vector.shape_cast %307 : vector<1x1x8xf32> to vector<1x8xf32>
    %309 = vector.broadcast %308 : vector<1x8xf32> to vector<16x8xf32>
    %310 = arith.addf %306, %309 : vector<16x8xf32>
    %311 = vector.shape_cast %310 : vector<16x8xf32> to vector<2x8x8xf32>
    "tpu.trace_start"() <{level = 10 : i32, message = "bqd,bkd->bqk"}> : () -> ()
    %cst_194 = arith.constant dense<0.000000e+00> : vector<2x8x8xf32>
    %312 = tpu.matmul %295, %303, %cst_194 {dimension_numbers = #tpu.dot_dimension_numbers<[2], [2], [1], [1], [0, 0, 0, 1, 1, 1], [0], [0]>} : vector<2x8x8xf32>, vector<2x8x8xf32>, vector<2x8x8xf32> -> vector<2x8x8xf32>
    "tpu.trace_stop"() : () -> ()
    %313 = arith.addf %312, %9 : vector<2x8x8xf32>
    %cst_195 = arith.constant dense<0xFF800000> : vector<2x8xf32>
    %314 = vector.multi_reduction <maximumf>, %313, %cst_195 [2] : vector<2x8x8xf32> to vector<2x8xf32>
    %315 = vector.shape_cast %314 : vector<2x8xf32> to vector<2x8x1xf32>
    %316 = vector.broadcast %315 : vector<2x8x1xf32> to vector<2x8x8xf32>
    %317 = arith.subf %313, %316 : vector<2x8x8xf32>
    %318 = math.exp %317 : vector<2x8x8xf32>
    %cst_196 = arith.constant dense<0.000000e+00> : vector<2x8xf32>
    %319 = vector.multi_reduction <add>, %318, %cst_196 [2] : vector<2x8x8xf32> to vector<2x8xf32>
    %320 = vector.shape_cast %319 : vector<2x8xf32> to vector<2x8x1xf32>
    %321 = tpu.reciprocal %320 {approx = true} : vector<2x8x1xf32> -> vector<2x8x1xf32>
    %322 = vector.broadcast %321 : vector<2x8x1xf32> to vector<2x8x8xf32>
    %323 = arith.mulf %318, %322 : vector<2x8x8xf32>
    "tpu.trace_start"() <{level = 10 : i32, message = "bqk,bkd->bqd"}> : () -> ()
    %cst_197 = arith.constant dense<0.000000e+00> : vector<2x8x8xf32>
    %324 = tpu.matmul %323, %311, %cst_197 {dimension_numbers = #tpu.dot_dimension_numbers<[2], [1], [1], [2], [0, 0, 0, 1, 1, 2], [0], [0]>} : vector<2x8x8xf32>, vector<2x8x8xf32>, vector<2x8x8xf32> -> vector<2x8x8xf32>
    "tpu.trace_stop"() : () -> ()
    %325 = vector.shape_cast %324 : vector<2x8x8xf32> to vector<16x8xf32>
    %326 = arith.truncf %325 : vector<16x8xf32> to vector<16x8xbf16>
    %c4_198 = arith.constant 4 : index
    %c0_199 = arith.constant 0 : index
    %c0_200 = arith.constant 0 : index
    %327 = vector.load %arg6[%c4_198, %c0_199, %c0_200] : memref<8x8x32xbf16, #tpu.memory_space<vmem>>, vector<1x8x32xbf16>
    %328 = vector.shape_cast %327 : vector<1x8x32xbf16> to vector<8x32xbf16>
    %cst_201 = arith.constant dense<0.000000e+00> : vector<16x32xf32>
    %329 = tpu.matmul %326, %328, %cst_201 {dimension_numbers = #tpu.dot_dimension_numbers<[1], [0], [0], [1], [0, 0, 1, 1], [], []>} : vector<16x8xbf16>, vector<8x32xbf16>, vector<16x32xf32> -> vector<16x32xf32>
    %c13 = arith.constant 13 : index
    %c0_202 = arith.constant 0 : index
    %c0_203 = arith.constant 0 : index
    %330 = vector.load %arg4[%c13, %c0_202, %c0_203] : memref<24x32x8xbf16, #tpu.memory_space<vmem>>, vector<1x32x8xbf16>
    %331 = vector.shape_cast %330 : vector<1x32x8xbf16> to vector<32x8xbf16>
    %cst_204 = arith.constant dense<0.000000e+00> : vector<16x8xf32>
    %332 = tpu.matmul %287, %331, %cst_204 {dimension_numbers = #tpu.dot_dimension_numbers<[1], [0], [0], [1], [0, 0, 1, 1], [], []>} : vector<16x32xbf16>, vector<32x8xbf16>, vector<16x8xf32> -> vector<16x8xf32>
    %c13_205 = arith.constant 13 : index
    %c0_206 = arith.constant 0 : index
    %c0_207 = arith.constant 0 : index
    %333 = vector.load %arg5[%c13_205, %c0_206, %c0_207] : memref<24x1x8xf32, #tpu.memory_space<vmem>>, vector<1x1x8xf32>
    %334 = vector.shape_cast %333 : vector<1x1x8xf32> to vector<1x8xf32>
    %335 = vector.broadcast %334 : vector<1x8xf32> to vector<16x8xf32>
    %336 = arith.addf %332, %335 : vector<16x8xf32>
    %337 = vector.shape_cast %336 : vector<16x8xf32> to vector<2x8x8xf32>
    %c17 = arith.constant 17 : index
    %c0_208 = arith.constant 0 : index
    %c0_209 = arith.constant 0 : index
    %338 = vector.load %arg4[%c17, %c0_208, %c0_209] : memref<24x32x8xbf16, #tpu.memory_space<vmem>>, vector<1x32x8xbf16>
    %339 = vector.shape_cast %338 : vector<1x32x8xbf16> to vector<32x8xbf16>
    %cst_210 = arith.constant dense<0.000000e+00> : vector<16x8xf32>
    %340 = tpu.matmul %287, %339, %cst_210 {dimension_numbers = #tpu.dot_dimension_numbers<[1], [0], [0], [1], [0, 0, 1, 1], [], []>} : vector<16x32xbf16>, vector<32x8xbf16>, vector<16x8xf32> -> vector<16x8xf32>
    %c17_211 = arith.constant 17 : index
    %c0_212 = arith.constant 0 : index
    %c0_213 = arith.constant 0 : index
    %341 = vector.load %arg5[%c17_211, %c0_212, %c0_213] : memref<24x1x8xf32, #tpu.memory_space<vmem>>, vector<1x1x8xf32>
    %342 = vector.shape_cast %341 : vector<1x1x8xf32> to vector<1x8xf32>
    %343 = vector.broadcast %342 : vector<1x8xf32> to vector<16x8xf32>
    %344 = arith.addf %340, %343 : vector<16x8xf32>
    %345 = vector.shape_cast %344 : vector<16x8xf32> to vector<2x8x8xf32>
    %c21 = arith.constant 21 : index
    %c0_214 = arith.constant 0 : index
    %c0_215 = arith.constant 0 : index
    %346 = vector.load %arg4[%c21, %c0_214, %c0_215] : memref<24x32x8xbf16, #tpu.memory_space<vmem>>, vector<1x32x8xbf16>
    %347 = vector.shape_cast %346 : vector<1x32x8xbf16> to vector<32x8xbf16>
    %cst_216 = arith.constant dense<0.000000e+00> : vector<16x8xf32>
    %348 = tpu.matmul %287, %347, %cst_216 {dimension_numbers = #tpu.dot_dimension_numbers<[1], [0], [0], [1], [0, 0, 1, 1], [], []>} : vector<16x32xbf16>, vector<32x8xbf16>, vector<16x8xf32> -> vector<16x8xf32>
    %c21_217 = arith.constant 21 : index
    %c0_218 = arith.constant 0 : index
    %c0_219 = arith.constant 0 : index
    %349 = vector.load %arg5[%c21_217, %c0_218, %c0_219] : memref<24x1x8xf32, #tpu.memory_space<vmem>>, vector<1x1x8xf32>
    %350 = vector.shape_cast %349 : vector<1x1x8xf32> to vector<1x8xf32>
    %351 = vector.broadcast %350 : vector<1x8xf32> to vector<16x8xf32>
    %352 = arith.addf %348, %351 : vector<16x8xf32>
    %353 = vector.shape_cast %352 : vector<16x8xf32> to vector<2x8x8xf32>
    "tpu.trace_start"() <{level = 10 : i32, message = "bqd,bkd->bqk"}> : () -> ()
    %cst_220 = arith.constant dense<0.000000e+00> : vector<2x8x8xf32>
    %354 = tpu.matmul %337, %345, %cst_220 {dimension_numbers = #tpu.dot_dimension_numbers<[2], [2], [1], [1], [0, 0, 0, 1, 1, 1], [0], [0]>} : vector<2x8x8xf32>, vector<2x8x8xf32>, vector<2x8x8xf32> -> vector<2x8x8xf32>
    "tpu.trace_stop"() : () -> ()
    %355 = arith.addf %354, %9 : vector<2x8x8xf32>
    %cst_221 = arith.constant dense<0xFF800000> : vector<2x8xf32>
    %356 = vector.multi_reduction <maximumf>, %355, %cst_221 [2] : vector<2x8x8xf32> to vector<2x8xf32>
    %357 = vector.shape_cast %356 : vector<2x8xf32> to vector<2x8x1xf32>
    %358 = vector.broadcast %357 : vector<2x8x1xf32> to vector<2x8x8xf32>
    %359 = arith.subf %355, %358 : vector<2x8x8xf32>
    %360 = math.exp %359 : vector<2x8x8xf32>
    %cst_222 = arith.constant dense<0.000000e+00> : vector<2x8xf32>
    %361 = vector.multi_reduction <add>, %360, %cst_222 [2] : vector<2x8x8xf32> to vector<2x8xf32>
    %362 = vector.shape_cast %361 : vector<2x8xf32> to vector<2x8x1xf32>
    %363 = tpu.reciprocal %362 {approx = true} : vector<2x8x1xf32> -> vector<2x8x1xf32>
    %364 = vector.broadcast %363 : vector<2x8x1xf32> to vector<2x8x8xf32>
    %365 = arith.mulf %360, %364 : vector<2x8x8xf32>
    "tpu.trace_start"() <{level = 10 : i32, message = "bqk,bkd->bqd"}> : () -> ()
    %cst_223 = arith.constant dense<0.000000e+00> : vector<2x8x8xf32>
    %366 = tpu.matmul %365, %353, %cst_223 {dimension_numbers = #tpu.dot_dimension_numbers<[2], [1], [1], [2], [0, 0, 0, 1, 1, 2], [0], [0]>} : vector<2x8x8xf32>, vector<2x8x8xf32>, vector<2x8x8xf32> -> vector<2x8x8xf32>
    "tpu.trace_stop"() : () -> ()
    %367 = vector.shape_cast %366 : vector<2x8x8xf32> to vector<16x8xf32>
    %368 = arith.truncf %367 : vector<16x8xf32> to vector<16x8xbf16>
    %c5_224 = arith.constant 5 : index
    %c0_225 = arith.constant 0 : index
    %c0_226 = arith.constant 0 : index
    %369 = vector.load %arg6[%c5_224, %c0_225, %c0_226] : memref<8x8x32xbf16, #tpu.memory_space<vmem>>, vector<1x8x32xbf16>
    %370 = vector.shape_cast %369 : vector<1x8x32xbf16> to vector<8x32xbf16>
    %cst_227 = arith.constant dense<0.000000e+00> : vector<16x32xf32>
    %371 = tpu.matmul %368, %370, %cst_227 {dimension_numbers = #tpu.dot_dimension_numbers<[1], [0], [0], [1], [0, 0, 1, 1], [], []>} : vector<16x8xbf16>, vector<8x32xbf16>, vector<16x32xf32> -> vector<16x32xf32>
    %372 = arith.addf %329, %371 : vector<16x32xf32>
    %c14 = arith.constant 14 : index
    %c0_228 = arith.constant 0 : index
    %c0_229 = arith.constant 0 : index
    %373 = vector.load %arg4[%c14, %c0_228, %c0_229] : memref<24x32x8xbf16, #tpu.memory_space<vmem>>, vector<1x32x8xbf16>
    %374 = vector.shape_cast %373 : vector<1x32x8xbf16> to vector<32x8xbf16>
    %cst_230 = arith.constant dense<0.000000e+00> : vector<16x8xf32>
    %375 = tpu.matmul %287, %374, %cst_230 {dimension_numbers = #tpu.dot_dimension_numbers<[1], [0], [0], [1], [0, 0, 1, 1], [], []>} : vector<16x32xbf16>, vector<32x8xbf16>, vector<16x8xf32> -> vector<16x8xf32>
    %c14_231 = arith.constant 14 : index
    %c0_232 = arith.constant 0 : index
    %c0_233 = arith.constant 0 : index
    %376 = vector.load %arg5[%c14_231, %c0_232, %c0_233] : memref<24x1x8xf32, #tpu.memory_space<vmem>>, vector<1x1x8xf32>
    %377 = vector.shape_cast %376 : vector<1x1x8xf32> to vector<1x8xf32>
    %378 = vector.broadcast %377 : vector<1x8xf32> to vector<16x8xf32>
    %379 = arith.addf %375, %378 : vector<16x8xf32>
    %380 = vector.shape_cast %379 : vector<16x8xf32> to vector<2x8x8xf32>
    %c18 = arith.constant 18 : index
    %c0_234 = arith.constant 0 : index
    %c0_235 = arith.constant 0 : index
    %381 = vector.load %arg4[%c18, %c0_234, %c0_235] : memref<24x32x8xbf16, #tpu.memory_space<vmem>>, vector<1x32x8xbf16>
    %382 = vector.shape_cast %381 : vector<1x32x8xbf16> to vector<32x8xbf16>
    %cst_236 = arith.constant dense<0.000000e+00> : vector<16x8xf32>
    %383 = tpu.matmul %287, %382, %cst_236 {dimension_numbers = #tpu.dot_dimension_numbers<[1], [0], [0], [1], [0, 0, 1, 1], [], []>} : vector<16x32xbf16>, vector<32x8xbf16>, vector<16x8xf32> -> vector<16x8xf32>
    %c18_237 = arith.constant 18 : index
    %c0_238 = arith.constant 0 : index
    %c0_239 = arith.constant 0 : index
    %384 = vector.load %arg5[%c18_237, %c0_238, %c0_239] : memref<24x1x8xf32, #tpu.memory_space<vmem>>, vector<1x1x8xf32>
    %385 = vector.shape_cast %384 : vector<1x1x8xf32> to vector<1x8xf32>
    %386 = vector.broadcast %385 : vector<1x8xf32> to vector<16x8xf32>
    %387 = arith.addf %383, %386 : vector<16x8xf32>
    %388 = vector.shape_cast %387 : vector<16x8xf32> to vector<2x8x8xf32>
    %c22 = arith.constant 22 : index
    %c0_240 = arith.constant 0 : index
    %c0_241 = arith.constant 0 : index
    %389 = vector.load %arg4[%c22, %c0_240, %c0_241] : memref<24x32x8xbf16, #tpu.memory_space<vmem>>, vector<1x32x8xbf16>
    %390 = vector.shape_cast %389 : vector<1x32x8xbf16> to vector<32x8xbf16>
    %cst_242 = arith.constant dense<0.000000e+00> : vector<16x8xf32>
    %391 = tpu.matmul %287, %390, %cst_242 {dimension_numbers = #tpu.dot_dimension_numbers<[1], [0], [0], [1], [0, 0, 1, 1], [], []>} : vector<16x32xbf16>, vector<32x8xbf16>, vector<16x8xf32> -> vector<16x8xf32>
    %c22_243 = arith.constant 22 : index
    %c0_244 = arith.constant 0 : index
    %c0_245 = arith.constant 0 : index
    %392 = vector.load %arg5[%c22_243, %c0_244, %c0_245] : memref<24x1x8xf32, #tpu.memory_space<vmem>>, vector<1x1x8xf32>
    %393 = vector.shape_cast %392 : vector<1x1x8xf32> to vector<1x8xf32>
    %394 = vector.broadcast %393 : vector<1x8xf32> to vector<16x8xf32>
    %395 = arith.addf %391, %394 : vector<16x8xf32>
    %396 = vector.shape_cast %395 : vector<16x8xf32> to vector<2x8x8xf32>
    "tpu.trace_start"() <{level = 10 : i32, message = "bqd,bkd->bqk"}> : () -> ()
    %cst_246 = arith.constant dense<0.000000e+00> : vector<2x8x8xf32>
    %397 = tpu.matmul %380, %388, %cst_246 {dimension_numbers = #tpu.dot_dimension_numbers<[2], [2], [1], [1], [0, 0, 0, 1, 1, 1], [0], [0]>} : vector<2x8x8xf32>, vector<2x8x8xf32>, vector<2x8x8xf32> -> vector<2x8x8xf32>
    "tpu.trace_stop"() : () -> ()
    %398 = arith.addf %397, %9 : vector<2x8x8xf32>
    %cst_247 = arith.constant dense<0xFF800000> : vector<2x8xf32>
    %399 = vector.multi_reduction <maximumf>, %398, %cst_247 [2] : vector<2x8x8xf32> to vector<2x8xf32>
    %400 = vector.shape_cast %399 : vector<2x8xf32> to vector<2x8x1xf32>
    %401 = vector.broadcast %400 : vector<2x8x1xf32> to vector<2x8x8xf32>
    %402 = arith.subf %398, %401 : vector<2x8x8xf32>
    %403 = math.exp %402 : vector<2x8x8xf32>
    %cst_248 = arith.constant dense<0.000000e+00> : vector<2x8xf32>
    %404 = vector.multi_reduction <add>, %403, %cst_248 [2] : vector<2x8x8xf32> to vector<2x8xf32>
    %405 = vector.shape_cast %404 : vector<2x8xf32> to vector<2x8x1xf32>
    %406 = tpu.reciprocal %405 {approx = true} : vector<2x8x1xf32> -> vector<2x8x1xf32>
    %407 = vector.broadcast %406 : vector<2x8x1xf32> to vector<2x8x8xf32>
    %408 = arith.mulf %403, %407 : vector<2x8x8xf32>
    "tpu.trace_start"() <{level = 10 : i32, message = "bqk,bkd->bqd"}> : () -> ()
    %cst_249 = arith.constant dense<0.000000e+00> : vector<2x8x8xf32>
    %409 = tpu.matmul %408, %396, %cst_249 {dimension_numbers = #tpu.dot_dimension_numbers<[2], [1], [1], [2], [0, 0, 0, 1, 1, 2], [0], [0]>} : vector<2x8x8xf32>, vector<2x8x8xf32>, vector<2x8x8xf32> -> vector<2x8x8xf32>
    "tpu.trace_stop"() : () -> ()
    %410 = vector.shape_cast %409 : vector<2x8x8xf32> to vector<16x8xf32>
    %411 = arith.truncf %410 : vector<16x8xf32> to vector<16x8xbf16>
    %c6_250 = arith.constant 6 : index
    %c0_251 = arith.constant 0 : index
    %c0_252 = arith.constant 0 : index
    %412 = vector.load %arg6[%c6_250, %c0_251, %c0_252] : memref<8x8x32xbf16, #tpu.memory_space<vmem>>, vector<1x8x32xbf16>
    %413 = vector.shape_cast %412 : vector<1x8x32xbf16> to vector<8x32xbf16>
    %cst_253 = arith.constant dense<0.000000e+00> : vector<16x32xf32>
    %414 = tpu.matmul %411, %413, %cst_253 {dimension_numbers = #tpu.dot_dimension_numbers<[1], [0], [0], [1], [0, 0, 1, 1], [], []>} : vector<16x8xbf16>, vector<8x32xbf16>, vector<16x32xf32> -> vector<16x32xf32>
    %415 = arith.addf %372, %414 : vector<16x32xf32>
    %c15 = arith.constant 15 : index
    %c0_254 = arith.constant 0 : index
    %c0_255 = arith.constant 0 : index
    %416 = vector.load %arg4[%c15, %c0_254, %c0_255] : memref<24x32x8xbf16, #tpu.memory_space<vmem>>, vector<1x32x8xbf16>
    %417 = vector.shape_cast %416 : vector<1x32x8xbf16> to vector<32x8xbf16>
    %cst_256 = arith.constant dense<0.000000e+00> : vector<16x8xf32>
    %418 = tpu.matmul %287, %417, %cst_256 {dimension_numbers = #tpu.dot_dimension_numbers<[1], [0], [0], [1], [0, 0, 1, 1], [], []>} : vector<16x32xbf16>, vector<32x8xbf16>, vector<16x8xf32> -> vector<16x8xf32>
    %c15_257 = arith.constant 15 : index
    %c0_258 = arith.constant 0 : index
    %c0_259 = arith.constant 0 : index
    %419 = vector.load %arg5[%c15_257, %c0_258, %c0_259] : memref<24x1x8xf32, #tpu.memory_space<vmem>>, vector<1x1x8xf32>
    %420 = vector.shape_cast %419 : vector<1x1x8xf32> to vector<1x8xf32>
    %421 = vector.broadcast %420 : vector<1x8xf32> to vector<16x8xf32>
    %422 = arith.addf %418, %421 : vector<16x8xf32>
    %423 = vector.shape_cast %422 : vector<16x8xf32> to vector<2x8x8xf32>
    %c19 = arith.constant 19 : index
    %c0_260 = arith.constant 0 : index
    %c0_261 = arith.constant 0 : index
    %424 = vector.load %arg4[%c19, %c0_260, %c0_261] : memref<24x32x8xbf16, #tpu.memory_space<vmem>>, vector<1x32x8xbf16>
    %425 = vector.shape_cast %424 : vector<1x32x8xbf16> to vector<32x8xbf16>
    %cst_262 = arith.constant dense<0.000000e+00> : vector<16x8xf32>
    %426 = tpu.matmul %287, %425, %cst_262 {dimension_numbers = #tpu.dot_dimension_numbers<[1], [0], [0], [1], [0, 0, 1, 1], [], []>} : vector<16x32xbf16>, vector<32x8xbf16>, vector<16x8xf32> -> vector<16x8xf32>
    %c19_263 = arith.constant 19 : index
    %c0_264 = arith.constant 0 : index
    %c0_265 = arith.constant 0 : index
    %427 = vector.load %arg5[%c19_263, %c0_264, %c0_265] : memref<24x1x8xf32, #tpu.memory_space<vmem>>, vector<1x1x8xf32>
    %428 = vector.shape_cast %427 : vector<1x1x8xf32> to vector<1x8xf32>
    %429 = vector.broadcast %428 : vector<1x8xf32> to vector<16x8xf32>
    %430 = arith.addf %426, %429 : vector<16x8xf32>
    %431 = vector.shape_cast %430 : vector<16x8xf32> to vector<2x8x8xf32>
    %c23 = arith.constant 23 : index
    %c0_266 = arith.constant 0 : index
    %c0_267 = arith.constant 0 : index
    %432 = vector.load %arg4[%c23, %c0_266, %c0_267] : memref<24x32x8xbf16, #tpu.memory_space<vmem>>, vector<1x32x8xbf16>
    %433 = vector.shape_cast %432 : vector<1x32x8xbf16> to vector<32x8xbf16>
    %cst_268 = arith.constant dense<0.000000e+00> : vector<16x8xf32>
    %434 = tpu.matmul %287, %433, %cst_268 {dimension_numbers = #tpu.dot_dimension_numbers<[1], [0], [0], [1], [0, 0, 1, 1], [], []>} : vector<16x32xbf16>, vector<32x8xbf16>, vector<16x8xf32> -> vector<16x8xf32>
    %c23_269 = arith.constant 23 : index
    %c0_270 = arith.constant 0 : index
    %c0_271 = arith.constant 0 : index
    %435 = vector.load %arg5[%c23_269, %c0_270, %c0_271] : memref<24x1x8xf32, #tpu.memory_space<vmem>>, vector<1x1x8xf32>
    %436 = vector.shape_cast %435 : vector<1x1x8xf32> to vector<1x8xf32>
    %437 = vector.broadcast %436 : vector<1x8xf32> to vector<16x8xf32>
    %438 = arith.addf %434, %437 : vector<16x8xf32>
    %439 = vector.shape_cast %438 : vector<16x8xf32> to vector<2x8x8xf32>
    "tpu.trace_start"() <{level = 10 : i32, message = "bqd,bkd->bqk"}> : () -> ()
    %cst_272 = arith.constant dense<0.000000e+00> : vector<2x8x8xf32>
    %440 = tpu.matmul %423, %431, %cst_272 {dimension_numbers = #tpu.dot_dimension_numbers<[2], [2], [1], [1], [0, 0, 0, 1, 1, 1], [0], [0]>} : vector<2x8x8xf32>, vector<2x8x8xf32>, vector<2x8x8xf32> -> vector<2x8x8xf32>
    "tpu.trace_stop"() : () -> ()
    %441 = arith.addf %440, %9 : vector<2x8x8xf32>
    %cst_273 = arith.constant dense<0xFF800000> : vector<2x8xf32>
    %442 = vector.multi_reduction <maximumf>, %441, %cst_273 [2] : vector<2x8x8xf32> to vector<2x8xf32>
    %443 = vector.shape_cast %442 : vector<2x8xf32> to vector<2x8x1xf32>
    %444 = vector.broadcast %443 : vector<2x8x1xf32> to vector<2x8x8xf32>
    %445 = arith.subf %441, %444 : vector<2x8x8xf32>
    %446 = math.exp %445 : vector<2x8x8xf32>
    %cst_274 = arith.constant dense<0.000000e+00> : vector<2x8xf32>
    %447 = vector.multi_reduction <add>, %446, %cst_274 [2] : vector<2x8x8xf32> to vector<2x8xf32>
    %448 = vector.shape_cast %447 : vector<2x8xf32> to vector<2x8x1xf32>
    %449 = tpu.reciprocal %448 {approx = true} : vector<2x8x1xf32> -> vector<2x8x1xf32>
    %450 = vector.broadcast %449 : vector<2x8x1xf32> to vector<2x8x8xf32>
    %451 = arith.mulf %446, %450 : vector<2x8x8xf32>
    "tpu.trace_start"() <{level = 10 : i32, message = "bqk,bkd->bqd"}> : () -> ()
    %cst_275 = arith.constant dense<0.000000e+00> : vector<2x8x8xf32>
    %452 = tpu.matmul %451, %439, %cst_275 {dimension_numbers = #tpu.dot_dimension_numbers<[2], [1], [1], [2], [0, 0, 0, 1, 1, 2], [0], [0]>} : vector<2x8x8xf32>, vector<2x8x8xf32>, vector<2x8x8xf32> -> vector<2x8x8xf32>
    "tpu.trace_stop"() : () -> ()
    %453 = vector.shape_cast %452 : vector<2x8x8xf32> to vector<16x8xf32>
    %454 = arith.truncf %453 : vector<16x8xf32> to vector<16x8xbf16>
    %c7_276 = arith.constant 7 : index
    %c0_277 = arith.constant 0 : index
    %c0_278 = arith.constant 0 : index
    %455 = vector.load %arg6[%c7_276, %c0_277, %c0_278] : memref<8x8x32xbf16, #tpu.memory_space<vmem>>, vector<1x8x32xbf16>
    %456 = vector.shape_cast %455 : vector<1x8x32xbf16> to vector<8x32xbf16>
    %cst_279 = arith.constant dense<0.000000e+00> : vector<16x32xf32>
    %457 = tpu.matmul %454, %456, %cst_279 {dimension_numbers = #tpu.dot_dimension_numbers<[1], [0], [0], [1], [0, 0, 1, 1], [], []>} : vector<16x8xbf16>, vector<8x32xbf16>, vector<16x32xf32> -> vector<16x32xf32>
    %458 = arith.addf %415, %457 : vector<16x32xf32>
    %459 = arith.addf %272, %458 : vector<16x32xf32>
    %460 = vector.broadcast %274 : vector<1x32xf32> to vector<16x32xf32>
    %461 = arith.addf %459, %460 : vector<16x32xf32>
    %cst_280 = arith.constant dense<0.000000e+00> : vector<16xf32>
    %462 = vector.multi_reduction <add>, %461, %cst_280 [1] : vector<16x32xf32> to vector<16xf32>
    %463 = vector.shape_cast %462 : vector<16xf32> to vector<16x1xf32>
    %cst_281 = arith.constant 3.200000e+01 : f32
    %464 = vector.broadcast %cst_281 : f32 to vector<16x1xf32>
    %465 = arith.divf %463, %464 : vector<16x1xf32>
    %466 = arith.mulf %461, %461 : vector<16x32xf32>
    %cst_282 = arith.constant dense<0.000000e+00> : vector<16xf32>
    %467 = vector.multi_reduction <add>, %466, %cst_282 [1] : vector<16x32xf32> to vector<16xf32>
    %468 = vector.shape_cast %467 : vector<16xf32> to vector<16x1xf32>
    %cst_283 = arith.constant 3.200000e+01 : f32
    %469 = vector.broadcast %cst_283 : f32 to vector<16x1xf32>
    %470 = arith.divf %468, %469 : vector<16x1xf32>
    %471 = arith.mulf %465, %465 : vector<16x1xf32>
    %472 = arith.subf %470, %471 : vector<16x1xf32>
    %cst_284 = arith.constant 0.000000e+00 : f32
    %473 = vector.broadcast %cst_284 : f32 to vector<16x1xf32>
    %474 = arith.maximumf %472, %473 : vector<16x1xf32>
    %475 = vector.broadcast %465 : vector<16x1xf32> to vector<16x32xf32>
    %476 = arith.subf %461, %475 : vector<16x32xf32>
    %cst_285 = arith.constant 9.99999996E-13 : f32
    %477 = vector.broadcast %cst_285 : f32 to vector<16x1xf32>
    %478 = arith.addf %474, %477 : vector<16x1xf32>
    %479 = math.rsqrt %478 : vector<16x1xf32>
    %480 = vector.broadcast %479 : vector<16x1xf32> to vector<16x32xf32>
    %481 = arith.mulf %476, %480 : vector<16x32xf32>
    %482 = vector.broadcast %280 : vector<1x32xf32> to vector<16x32xf32>
    %483 = arith.mulf %481, %482 : vector<16x32xf32>
    %484 = vector.broadcast %282 : vector<1x32xf32> to vector<16x32xf32>
    %485 = arith.addf %483, %484 : vector<16x32xf32>
    %486 = arith.truncf %485 : vector<16x32xf32> to vector<16x32xbf16>
    %c1_286 = arith.constant 1 : index
    %c0_287 = arith.constant 0 : index
    %c0_288 = arith.constant 0 : index
    %487 = vector.load %arg7[%c1_286, %c0_287, %c0_288] : memref<2x32x64xbf16, #tpu.memory_space<vmem>>, vector<1x32x64xbf16>
    %488 = vector.shape_cast %487 : vector<1x32x64xbf16> to vector<32x64xbf16>
    %cst_289 = arith.constant dense<0.000000e+00> : vector<16x64xf32>
    %489 = tpu.matmul %486, %488, %cst_289 {dimension_numbers = #tpu.dot_dimension_numbers<[1], [0], [0], [1], [0, 0, 1, 1], [], []>} : vector<16x32xbf16>, vector<32x64xbf16>, vector<16x64xf32> -> vector<16x64xf32>
    %490 = vector.broadcast %276 : vector<1x64xf32> to vector<16x64xf32>
    %491 = arith.addf %489, %490 : vector<16x64xf32>
    %492 = arith.mulf %491, %491 : vector<16x64xf32>
    %493 = arith.mulf %491, %492 : vector<16x64xf32>
    %cst_290 = arith.constant 4.471500e-02 : f32
    %494 = vector.broadcast %cst_290 : f32 to vector<16x64xf32>
    %495 = arith.mulf %494, %493 : vector<16x64xf32>
    %496 = arith.addf %491, %495 : vector<16x64xf32>
    %cst_291 = arith.constant 0.797884583 : f32
    %497 = vector.broadcast %cst_291 : f32 to vector<16x64xf32>
    %498 = arith.mulf %497, %496 : vector<16x64xf32>
    %499 = math.tanh %498 : vector<16x64xf32>
    %cst_292 = arith.constant 1.000000e+00 : f32
    %500 = vector.broadcast %cst_292 : f32 to vector<16x64xf32>
    %501 = arith.addf %500, %499 : vector<16x64xf32>
    %cst_293 = arith.constant 5.000000e-01 : f32
    %502 = vector.broadcast %cst_293 : f32 to vector<16x64xf32>
    %503 = arith.mulf %502, %501 : vector<16x64xf32>
    %504 = arith.mulf %491, %503 : vector<16x64xf32>
    %505 = arith.truncf %504 : vector<16x64xf32> to vector<16x64xbf16>
    %c1_294 = arith.constant 1 : index
    %c0_295 = arith.constant 0 : index
    %c0_296 = arith.constant 0 : index
    %506 = vector.load %arg8[%c1_294, %c0_295, %c0_296] : memref<2x64x32xbf16, #tpu.memory_space<vmem>>, vector<1x64x32xbf16>
    %507 = vector.shape_cast %506 : vector<1x64x32xbf16> to vector<64x32xbf16>
    %cst_297 = arith.constant dense<0.000000e+00> : vector<16x32xf32>
    %508 = tpu.matmul %505, %507, %cst_297 {dimension_numbers = #tpu.dot_dimension_numbers<[1], [0], [0], [1], [0, 0, 1, 1], [], []>} : vector<16x64xbf16>, vector<64x32xbf16>, vector<16x32xf32> -> vector<16x32xf32>
    %509 = vector.broadcast %278 : vector<1x32xf32> to vector<16x32xf32>
    %510 = arith.addf %508, %509 : vector<16x32xf32>
    %511 = arith.addf %485, %510 : vector<16x32xf32>
    %cst_298 = arith.constant dense<0.000000e+00> : vector<16xf32>
    %512 = vector.multi_reduction <add>, %511, %cst_298 [1] : vector<16x32xf32> to vector<16xf32>
    %513 = vector.shape_cast %512 : vector<16xf32> to vector<16x1xf32>
    %cst_299 = arith.constant 3.200000e+01 : f32
    %514 = vector.broadcast %cst_299 : f32 to vector<16x1xf32>
    %515 = arith.divf %513, %514 : vector<16x1xf32>
    %516 = arith.mulf %511, %511 : vector<16x32xf32>
    %cst_300 = arith.constant dense<0.000000e+00> : vector<16xf32>
    %517 = vector.multi_reduction <add>, %516, %cst_300 [1] : vector<16x32xf32> to vector<16xf32>
    %518 = vector.shape_cast %517 : vector<16xf32> to vector<16x1xf32>
    %cst_301 = arith.constant 3.200000e+01 : f32
    %519 = vector.broadcast %cst_301 : f32 to vector<16x1xf32>
    %520 = arith.divf %518, %519 : vector<16x1xf32>
    %521 = arith.mulf %515, %515 : vector<16x1xf32>
    %522 = arith.subf %520, %521 : vector<16x1xf32>
    %cst_302 = arith.constant 0.000000e+00 : f32
    %523 = vector.broadcast %cst_302 : f32 to vector<16x1xf32>
    %524 = arith.maximumf %522, %523 : vector<16x1xf32>
    %525 = vector.broadcast %515 : vector<16x1xf32> to vector<16x32xf32>
    %526 = arith.subf %511, %525 : vector<16x32xf32>
    %cst_303 = arith.constant 9.99999996E-13 : f32
    %527 = vector.broadcast %cst_303 : f32 to vector<16x1xf32>
    %528 = arith.addf %524, %527 : vector<16x1xf32>
    %529 = math.rsqrt %528 : vector<16x1xf32>
    %530 = vector.broadcast %529 : vector<16x1xf32> to vector<16x32xf32>
    %531 = arith.mulf %526, %530 : vector<16x32xf32>
    %532 = vector.broadcast %284 : vector<1x32xf32> to vector<16x32xf32>
    %533 = arith.mulf %531, %532 : vector<16x32xf32>
    %534 = vector.broadcast %286 : vector<1x32xf32> to vector<16x32xf32>
    %535 = arith.addf %533, %534 : vector<16x32xf32>
    %536 = arith.truncf %535 : vector<16x32xf32> to vector<16x32xbf16>
    %c0_304 = arith.constant 0 : index
    %c0_305 = arith.constant 0 : index
    %537 = vector.load %arg10[%c0_304, %c0_305] : memref<32x128xbf16, #tpu.memory_space<vmem>>, vector<32x128xbf16>
    %cst_306 = arith.constant dense<0.000000e+00> : vector<16x128xf32>
    %538 = tpu.matmul %536, %537, %cst_306 {dimension_numbers = #tpu.dot_dimension_numbers<[1], [0], [0], [1], [0, 0, 1, 1], [], []>} : vector<16x32xbf16>, vector<32x128xbf16>, vector<16x128xf32> -> vector<16x128xf32>
    %c0_307 = arith.constant 0 : index
    %c0_308 = arith.constant 0 : index
    %539 = vector.load %arg11[%c0_307, %c0_308] : memref<1x128xf32, #tpu.memory_space<vmem>>, vector<1x128xf32>
    %540 = vector.broadcast %539 : vector<1x128xf32> to vector<16x128xf32>
    %541 = arith.addf %538, %540 : vector<16x128xf32>
    %542 = vector.shape_cast %541 : vector<16x128xf32> to vector<2x8x128xf32>
    %c0_309 = arith.constant 0 : index
    %c0_310 = arith.constant 0 : index
    %c0_311 = arith.constant 0 : index
    %543 = vector.load %arg12[%c0_309, %c0_310, %c0_311] : memref<2x8x128xf32, #tpu.memory_space<vmem>>, vector<2x8x128xf32>
    tpu.vector_store %arg12[%c0_309, %c0_310, %c0_311], %542 {strides = array<i32>} : memref<2x8x128xf32, #tpu.memory_space<vmem>>, vector<2x8x128xf32>,
    return
  }
  func.func @transform_0(%arg0: i32) -> (i32, i32) {
    %c0_i32 = arith.constant 0 : i32
    %c0_i32_0 = arith.constant 0 : i32
    return %arg0, %c0_i32 : i32, i32
  }
  func.func @transform_1(%arg0: i32) -> (i32, i32, i32) {
    %c0_i32 = arith.constant 0 : i32
    %c0_i32_0 = arith.constant 0 : i32
    %c0_i32_1 = arith.constant 0 : i32
    return %arg0, %c0_i32, %c0_i32_0 : i32, i32, i32
  }
  func.func @transform_2(%arg0: i32) -> (i32, i32) {
    %c0_i32 = arith.constant 0 : i32
    %c0_i32_0 = arith.constant 0 : i32
    %c0_i32_1 = arith.constant 0 : i32
    return %c0_i32, %c0_i32_0 : i32, i32
  }
  func.func @transform_3(%arg0: i32) -> (i32, i32, i32) {
    %c0_i32 = arith.constant 0 : i32
    %c0_i32_0 = arith.constant 0 : i32
    %c0_i32_1 = arith.constant 0 : i32
    %c0_i32_2 = arith.constant 0 : i32
    return %c0_i32, %c0_i32_0, %c0_i32_1 : i32, i32, i32
  }
  func.func @transform_4(%arg0: i32) -> (i32, i32, i32) {
    %c0_i32 = arith.constant 0 : i32
    %c0_i32_0 = arith.constant 0 : i32
    %c0_i32_1 = arith.constant 0 : i32
    %c0_i32_2 = arith.constant 0 : i32
    return %c0_i32, %c0_i32_0, %c0_i32_1 : i32, i32, i32
  }
  func.func @transform_5(%arg0: i32) -> (i32, i32, i32) {
    %c0_i32 = arith.constant 0 : i32
    %c0_i32_0 = arith.constant 0 : i32
    %c0_i32_1 = arith.constant 0 : i32
    %c0_i32_2 = arith.constant 0 : i32
    return %c0_i32, %c0_i32_0, %c0_i32_1 : i32, i32, i32
  }
  func.func @transform_6(%arg0: i32) -> (i32, i32, i32) {
    %c0_i32 = arith.constant 0 : i32
    %c0_i32_0 = arith.constant 0 : i32
    %c0_i32_1 = arith.constant 0 : i32
    %c0_i32_2 = arith.constant 0 : i32
    return %c0_i32, %c0_i32_0, %c0_i32_1 : i32, i32, i32
  }
  func.func @transform_7(%arg0: i32) -> (i32, i32, i32) {
    %c0_i32 = arith.constant 0 : i32
    %c0_i32_0 = arith.constant 0 : i32
    %c0_i32_1 = arith.constant 0 : i32
    %c0_i32_2 = arith.constant 0 : i32
    return %c0_i32, %c0_i32_0, %c0_i32_1 : i32, i32, i32
  }
  func.func @transform_8(%arg0: i32) -> (i32, i32, i32) {
    %c0_i32 = arith.constant 0 : i32
    %c0_i32_0 = arith.constant 0 : i32
    %c0_i32_1 = arith.constant 0 : i32
    %c0_i32_2 = arith.constant 0 : i32
    return %c0_i32, %c0_i32_0, %c0_i32_1 : i32, i32, i32
  }
  func.func @transform_9(%arg0: i32) -> (i32, i32) {
    %c0_i32 = arith.constant 0 : i32
    %c0_i32_0 = arith.constant 0 : i32
    %c0_i32_1 = arith.constant 0 : i32
    return %c0_i32, %c0_i32_0 : i32, i32
  }
  func.func @transform_10(%arg0: i32) -> (i32, i32) {
    %c0_i32 = arith.constant 0 : i32
    %c0_i32_0 = arith.constant 0 : i32
    %c0_i32_1 = arith.constant 0 : i32
    return %c0_i32, %c0_i32_0 : i32, i32
  }
  func.func @transform_11(%arg0: i32) -> (i32, i32, i32) {
    %c0_i32 = arith.constant 0 : i32
    %c0_i32_0 = arith.constant 0 : i32
    %c0_i32_1 = arith.constant 0 : i32
    return %arg0, %c0_i32, %c0_i32_0 : i32, i32, i32
  }
}

</mosaic_0001>

<llo_original>
// kernel: transformer_decoder_pallas.1
$region0: #{transformer_decoder_pallas.1}
  #allocation0 [shape = 'u32[]', space=smem, size = 0x4, offset = 0x4, fixed_abs, tag = 'smem constant byte address 0x4 - core index']
  #allocation1 [shape = 'u32[72,128]{1,0:T(1,128)}', space=vmem, size = 0x9000, scoped, tag = 'internal scratch']
  %s0 = inlined_call_operand.vmem [shape: f32[2,8], index: 0, kind: input, shape index: {}]
  %s1 = inlined_call_operand.vmem [shape: f32[2,8,32], index: 1, kind: input, shape index: {}]
  %s2 = inlined_call_operand.vmem [shape: f32[8,32], index: 2, kind: input, shape index: {}]
  %s3 = inlined_call_operand.vmem [shape: bf16[24,32,8], index: 3, kind: input, shape index: {}]
  %s4 = inlined_call_operand.vmem [shape: f32[24,1,8], index: 4, kind: input, shape index: {}]
  %s5 = inlined_call_operand.vmem [shape: bf16[8,8,32], index: 5, kind: input, shape index: {}]
  %s6 = inlined_call_operand.vmem [shape: bf16[2,32,64], index: 6, kind: input, shape index: {}]
  %s7 = inlined_call_operand.vmem [shape: bf16[2,64,32], index: 7, kind: input, shape index: {}]
  %s8 = inlined_call_operand.vmem [shape: f32[2,8,64], index: 8, kind: input, shape index: {}]
  %s9 = inlined_call_operand.vmem [shape: bf16[32,128], index: 9, kind: input, shape index: {}]
  %s10 = inlined_call_operand.vmem [shape: f32[1,128], index: 10, kind: input, shape index: {}]
  %s11 = inlined_call_operand.hbm [shape: f32[2,8,128], index: 11, kind: output, shape index: {}]
  %s12 = sld [smem:[#allocation0]]
  $region54: #{transformer_decoder_pallas.1} parent=0
    _
  %s14 = ssub.s32 1, %s12
  %s15 = scalar_select 0, %s14, %s12
  $region1: #{transformer_decoder_pallas.1} parent=0
    #allocation2 [shape = 'u8[8192]{0}', space=vmem, size = 0x2000, scoped, tag = 'output window, operand 0, single buffered']
    #allocation3 [shape = 's32[1]{0}', space=sflag, size = 0x4, scoped, tag = 'scoped memory for transformer_decoder_pallas.1']
    %16 = vsyncpa [#allocation3], 0
    // Predicated region
    $region2: #{transformer_decoder_pallas.1} parent=1 // pred_check
      _
    $region3: #{transformer_decoder_pallas.1} parent=1 // pred_check_branch
      %18 = sbr.rel (0) target = $region5
    $region4: #{transformer_decoder_pallas.1} parent=1 // pred_region
      _
    $region5: #{transformer_decoder_pallas.1} parent=1 // pred_fallthru
      _
    // Predicated region
    $region6: #{transformer_decoder_pallas.1} parent=1 // pred_check
      _
    $region7: #{transformer_decoder_pallas.1} parent=1 // pred_check_branch
      %20 = sbr.rel (0) target = $region9
    $region8: #{transformer_decoder_pallas.1} parent=1 // pred_region
      _
    $region9: #{transformer_decoder_pallas.1} parent=1 // pred_fallthru
      _
    // Predicated region
    $region10: #{transformer_decoder_pallas.1} parent=1 // pred_check
      _
    $region11: #{transformer_decoder_pallas.1} parent=1 // pred_check_branch
      %22 = sbr.rel (0) target = $region13
    $region12: #{transformer_decoder_pallas.1} parent=1 // pred_region
      _
    $region13: #{transformer_decoder_pallas.1} parent=1 // pred_fallthru
      _
    // Predicated region
    $region14: #{transformer_decoder_pallas.1} parent=1 // pred_check
      _
    $region15: #{transformer_decoder_pallas.1} parent=1 // pred_check_branch
      %24 = sbr.rel (0) target = $region17
    $region16: #{transformer_decoder_pallas.1} parent=1 // pred_region
      _
    $region17: #{transformer_decoder_pallas.1} parent=1 // pred_fallthru
      _
    // Predicated region
    $region18: #{transformer_decoder_pallas.1} parent=1 // pred_check
      _
    $region19: #{transformer_decoder_pallas.1} parent=1 // pred_check_branch
      %26 = sbr.rel (0) target = $region21
    $region20: #{transformer_decoder_pallas.1} parent=1 // pred_region
      _
    $region21: #{transformer_decoder_pallas.1} parent=1 // pred_fallthru
      _
    // Predicated region
    $region22: #{transformer_decoder_pallas.1} parent=1 // pred_check
      _
    $region23: #{transformer_decoder_pallas.1} parent=1 // pred_check_branch
      %28 = sbr.rel (0) target = $region25
    $region24: #{transformer_decoder_pallas.1} parent=1 // pred_region
      _
    $region25: #{transformer_decoder_pallas.1} parent=1 // pred_fallthru
      _
    // Predicated region
    $region26: #{transformer_decoder_pallas.1} parent=1 // pred_check
      _
    $region27: #{transformer_decoder_pallas.1} parent=1 // pred_check_branch
      %30 = sbr.rel (0) target = $region29
    $region28: #{transformer_decoder_pallas.1} parent=1 // pred_region
      _
    $region29: #{transformer_decoder_pallas.1} parent=1 // pred_fallthru
      _
    // Predicated region
    $region30: #{transformer_decoder_pallas.1} parent=1 // pred_check
      _
    $region31: #{transformer_decoder_pallas.1} parent=1 // pred_check_branch
      %32 = sbr.rel (0) target = $region33
    $region32: #{transformer_decoder_pallas.1} parent=1 // pred_region
      _
    $region33: #{transformer_decoder_pallas.1} parent=1 // pred_fallthru
      _
    // Predicated region
    $region34: #{transformer_decoder_pallas.1} parent=1 // pred_check
      _
    $region35: #{transformer_decoder_pallas.1} parent=1 // pred_check_branch
      %34 = sbr.rel (0) target = $region37
    $region36: #{transformer_decoder_pallas.1} parent=1 // pred_region
      _
    $region37: #{transformer_decoder_pallas.1} parent=1 // pred_fallthru
      _
    // Predicated region
    $region38: #{transformer_decoder_pallas.1} parent=1 // pred_check
      _
    $region39: #{transformer_decoder_pallas.1} parent=1 // pred_check_branch
      %36 = sbr.rel (0) target = $region41
    $region40: #{transformer_decoder_pallas.1} parent=1 // pred_region
      _
    $region41: #{transformer_decoder_pallas.1} parent=1 // pred_fallthru
      _
    // Predicated region
    $region42: #{transformer_decoder_pallas.1} parent=1 // pred_check
      _
    $region43: #{transformer_decoder_pallas.1} parent=1 // pred_check_branch
      %38 = sbr.rel (0) target = $region45
    $region44: #{transformer_decoder_pallas.1} parent=1 // pred_region
      _
    $region45: #{transformer_decoder_pallas.1} parent=1 // pred_fallthru
      _
    %v40 = vld [vmem:[%s1] sm:$0xff]
    %v41 = vld [vmem:[%s1 + $0x8] sm:$0xff]
    %v42 = vld [vmem:[%s2] sm:$0xff]
    %v43 = vadd.f32 %v40, %v42
    %v44 = vadd.f32 %v41, %v42
    %v45 = vld [vmem:[%s0] sm:$0x3]
    %v47 = vrot.slane %v45, 1
    %v48 = vperm.slane %v45, 0
    %v49 = vperm.slane %v47, 0
    %v52 = vld [vmem:[%s8] sm:$0x1]
    %v53 = vld [vmem:[%s8 + $0x1] sm:$0x1]
    %v54 = vld [vmem:[%s8 + $0x2] sm:$0x1]
    %v55 = vld [vmem:[%s8 + $0x3] sm:$0x1]
    %v56 = vld [vmem:[%s8 + $0x4] sm:$0x1]
    %v57 = vld [vmem:[%s8 + $0x5] sm:$0x1]
    %v58 = vld [vmem:[%s8 + $0x6] sm:$0x1]
    %v59 = vpack.c.bf16 %v44, %v43
    %v60 = vld [vmem:[%s3] sm:$0xf]
    %v61 = vld [vmem:[%s3 + $0x4] sm:$0xf]
    %v62 = vld [vmem:[%s3 + $0x8] sm:$0xf]
    %v63 = vld [vmem:[%s3 + $0xc] sm:$0xf]
    %v64 = vld [vmem:[%s4] sm:$0x1]
    %v66 = vperm.slane %v64, 0
    %v72 = vunpack.c.l.b16 %v60
    %v73 = vunpack.c.l.b16 %v61
    %v74 = vunpack.c.l.b16 %v62
    %v75 = vunpack.c.l.b16 %v63
    %v76 = vpack.c.b16 %v73, %v72
    %v77 = vpack.c.b16 %v75, %v74
    %vm80 = vcmask 261120
    %v82 = vsel %vm80, %v59, 0
    %84 = vmatpush.bf16.msra.mxu0 0
    %85 = vmatpush.bf16.msra.mxu0 0
    %86 = vmatpush.bf16.msra.mxu0 0
    %87 = vmatpush.bf16.msra.mxu0 0
    %88 = vmatpush.bf16.msra.mxu0 0
    %89 = vmatpush.bf16.msra.mxu0 0
    %90 = vmatpush.bf16.msra.mxu0 %v77
    %91 = vmatpush.bf16.msra.mxu0 %v76
    %92 = vmatmul.bf16.gmra.mxu0 %v82
    %v93 = vpop.f32.mrf.mxu0
    %v94 = vadd.f32 %v66, %v93
    %v95 = vpop.f32.mrf.mxu0
    %v96 = vadd.f32 %v66, %v95
    %97 = vdwg.mxu0
    %s98 = scalar_lea.vmem %s3, 64
    %v99 = vld [vmem:[%s98] sm:$0xf]
    %v100 = vld [vmem:[%s98 + $0x4] sm:$0xf]
    %v101 = vld [vmem:[%s98 + $0x8] sm:$0xf]
    %v102 = vld [vmem:[%s98 + $0xc] sm:$0xf]
    %s103 = scalar_lea.vmem %s4, 4
    %v104 = vld [vmem:[%s103] sm:$0x1]
    %v106 = vperm.slane %v104, 0
    %v112 = vunpack.c.l.b16 %v99
    %v113 = vunpack.c.l.b16 %v100
    %v114 = vunpack.c.l.b16 %v101
    %v115 = vunpack.c.l.b16 %v102
    %v116 = vpack.c.b16 %v113, %v112
    %v117 = vpack.c.b16 %v115, %v114
    %120 = vmatpush.bf16.msra.mxu0 0
    %121 = vmatpush.bf16.msra.mxu0 0
    %122 = vmatpush.bf16.msra.mxu0 0
    %123 = vmatpush.bf16.msra.mxu0 0
    %124 = vmatpush.bf16.msra.mxu0 0
    %125 = vmatpush.bf16.msra.mxu0 0
    %126 = vmatpush.bf16.msra.mxu0 %v117
    %127 = vmatpush.bf16.msra.mxu0 %v116
    %128 = vmatmul.bf16.gmra.mxu0 %v82
    %v129 = vpop.f32.mrf.mxu0
    %v130 = vadd.f32 %v106, %v129
    %v131 = vpop.f32.mrf.mxu0
    %v132 = vadd.f32 %v106, %v131
    %133 = vdwg.mxu0
    %s134 = scalar_lea.vmem %s3, 128
    %v135 = vld [vmem:[%s134] sm:$0xf]
    %v136 = vld [vmem:[%s134 + $0x4] sm:$0xf]
    %v137 = vld [vmem:[%s134 + $0x8] sm:$0xf]
    %v138 = vld [vmem:[%s134 + $0xc] sm:$0xf]
    %s139 = scalar_lea.vmem %s4, 8
    %v140 = vld [vmem:[%s139] sm:$0x1]
    %v142 = vperm.slane %v140, 0
    %v148 = vunpack.c.l.b16 %v135
    %v149 = vunpack.c.l.b16 %v136
    %v150 = vunpack.c.l.b16 %v137
    %v151 = vunpack.c.l.b16 %v138
    %v152 = vpack.c.b16 %v149, %v148
    %v153 = vpack.c.b16 %v151, %v150
    %156 = vmatpush.bf16.msra.mxu0 0
    %157 = vmatpush.bf16.msra.mxu0 0
    %158 = vmatpush.bf16.msra.mxu0 0
    %159 = vmatpush.bf16.msra.mxu0 0
    %160 = vmatpush.bf16.msra.mxu0 0
    %161 = vmatpush.bf16.msra.mxu0 0
    %162 = vmatpush.bf16.msra.mxu0 %v153
    %163 = vmatpush.bf16.msra.mxu0 %v152
    %164 = vmatmul.bf16.gmra.mxu0 %v82
    %v165 = vpop.f32.mrf.mxu0
    %v166 = vadd.f32 %v142, %v165
    %v167 = vpop.f32.mrf.mxu0
    %v168 = vadd.f32 %v142, %v167
    %169 = vdwg.mxu0
    %vm170 = vcmask 64512
    %v172 = vsel %vm170, %v94, 0
    %v175 = vsel %vm170, %v130, 0
    %177 = vmatpush.xpose.msra.mxu0 0.0
    %178 = vmatpush.xpose.msra.mxu0 0.0
    %179 = vmatpush.xpose.msra.mxu0 0.0
    %180 = vmatpush.xpose.msra.mxu0 0.0
    %181 = vmatpush.xpose.msra.mxu0 0.0
    %182 = vmatpush.xpose.msra.mxu0 0.0
    %183 = vmatpush.xpose.msra.mxu0 0.0
    %184 = vmatpush.xpose.msra.mxu0 0.0
    %185 = vmatpush.xpose.msra.mxu0 0.0
    %186 = vmatpush.xpose.msra.mxu0 0.0
    %187 = vmatpush.xpose.msra.mxu0 0.0
    %188 = vmatpush.xpose.msra.mxu0 0.0
    %189 = vmatpush.xpose.msra.mxu0 0.0
    %190 = vmatpush.xpose.msra.mxu0 0.0
    %191 = vmatpush.xpose.msra.mxu0 0.0
    %192 = vmatpush.xpose.msra.mxu0 %v175
    %193 = vmatmul.f32.gmra.mxu0 %v172
    %v194 = vpop.f32.mrf.mxu0
    %v195 = vadd.f32 %v48, %v194
    %196 = vdwg.mxu0
    %v198 = vsel %vm170, %v96, 0
    %v201 = vsel %vm170, %v132, 0
    %203 = vmatpush.xpose.msra.mxu0 0.0
    %204 = vmatpush.xpose.msra.mxu0 0.0
    %205 = vmatpush.xpose.msra.mxu0 0.0
    %206 = vmatpush.xpose.msra.mxu0 0.0
    %207 = vmatpush.xpose.msra.mxu0 0.0
    %208 = vmatpush.xpose.msra.mxu0 0.0
    %209 = vmatpush.xpose.msra.mxu0 0.0
    %210 = vmatpush.xpose.msra.mxu0 0.0
    %211 = vmatpush.xpose.msra.mxu0 0.0
    %212 = vmatpush.xpose.msra.mxu0 0.0
    %213 = vmatpush.xpose.msra.mxu0 0.0
    %214 = vmatpush.xpose.msra.mxu0 0.0
    %215 = vmatpush.xpose.msra.mxu0 0.0
    %216 = vmatpush.xpose.msra.mxu0 0.0
    %217 = vmatpush.xpose.msra.mxu0 0.0
    %218 = vmatpush.xpose.msra.mxu0 %v201
    %219 = vmatmul.f32.gmra.mxu0 %v198
    %v220 = vpop.f32.mrf.mxu0
    %v221 = vadd.f32 %v49, %v220
    %222 = vdwg.mxu0
    %v223 = vsel %vm170, %v195, -inf
    %224 = vmax.xlane.f32.xlu0 %v223
    %v225 = vpop.xlane.xlu0 %224
    %v226 = vsel %vm170, %v221, -inf
    %227 = vmax.xlane.f32.xlu0 %v226
    %v228 = vpop.xlane.xlu0 %227
    %v229 = vsub.f32 %v195, %v225
    %v230 = vsub.f32 %v221, %v228
    %v231 = vmul.f32 %v229, 1.442695
    %v232 = vpow.pop %v231
    %v233 = vmul.f32 %v230, 1.442695
    %v234 = vpow.pop %v233
    %v235 = vsel %vm170, %v232, 0.0
    %236 = vadd.xlane.f32.xlu0 %v235
    %v237 = vpop.xlane.xlu0 %236
    %v238 = vsel %vm170, %v234, 0.0
    %239 = vadd.xlane.f32.xlu0 %v238
    %v240 = vpop.xlane.xlu0 %239
    %v241 = vrcp.pop %v237
    %v242 = vrcp.pop %v240
    %v243 = vmul.f32 %v232, %v241
    %v244 = vmul.f32 %v234, %v242
    %v246 = vsel %vm170, %v243, 0
    %248 = vmatpush.msra.mxu0 0.0
    %249 = vmatpush.msra.mxu0 0.0
    %250 = vmatpush.msra.mxu0 0.0
    %251 = vmatpush.msra.mxu0 0.0
    %252 = vmatpush.msra.mxu0 0.0
    %253 = vmatpush.msra.mxu0 0.0
    %254 = vmatpush.msra.mxu0 0.0
    %255 = vmatpush.msra.mxu0 0.0
    %256 = vmatpush.msra.mxu0 0.0
    %257 = vmatpush.msra.mxu0 0.0
    %258 = vmatpush.msra.mxu0 0.0
    %259 = vmatpush.msra.mxu0 0.0
    %260 = vmatpush.msra.mxu0 0.0
    %261 = vmatpush.msra.mxu0 0.0
    %262 = vmatpush.msra.mxu0 0.0
    %263 = vmatpush.msra.mxu0 %v166
    %264 = vmatmul.f32.gmra.mxu0 %v246
    %v265 = vpop.f32.mrf.mxu0
    %v266 = vadd.f32 0.0, %v265
    %267 = vdwg.mxu0
    %v269 = vsel %vm170, %v244, 0
    %271 = vmatpush.msra.mxu0 0.0
    %272 = vmatpush.msra.mxu0 0.0
    %273 = vmatpush.msra.mxu0 0.0
    %274 = vmatpush.msra.mxu0 0.0
    %275 = vmatpush.msra.mxu0 0.0
    %276 = vmatpush.msra.mxu0 0.0
    %277 = vmatpush.msra.mxu0 0.0
    %278 = vmatpush.msra.mxu0 0.0
    %279 = vmatpush.msra.mxu0 0.0
    %280 = vmatpush.msra.mxu0 0.0
    %281 = vmatpush.msra.mxu0 0.0
    %282 = vmatpush.msra.mxu0 0.0
    %283 = vmatpush.msra.mxu0 0.0
    %284 = vmatpush.msra.mxu0 0.0
    %285 = vmatpush.msra.mxu0 0.0
    %286 = vmatpush.msra.mxu0 %v168
    %287 = vmatmul.f32.gmra.mxu0 %v269
    %v288 = vpop.f32.mrf.mxu0
    %v289 = vadd.f32 0.0, %v288
    %290 = vdwg.mxu0
    %v291 = vpack.c.bf16 %v289, %v266
    %v292 = vld [vmem:[%s5] sm:$0xf]
    %s293 = scalar_lea.vmem %s3, 16
    %v294 = vld [vmem:[%s293] sm:$0xf]
    %v295 = vld [vmem:[%s293 + $0x4] sm:$0xf]
    %v296 = vld [vmem:[%s293 + $0x8] sm:$0xf]
    %v297 = vld [vmem:[%s293 + $0xc] sm:$0xf]
    %s298 = scalar_lea.vmem %s4, 1
    %v299 = vld [vmem:[%s298] sm:$0x1]
    %v301 = vperm.slane %v299, 0
    %v307 = vunpack.c.l.b16 %v294
    %v308 = vunpack.c.l.b16 %v295
    %v309 = vunpack.c.l.b16 %v296
    %v310 = vunpack.c.l.b16 %v297
    %v311 = vpack.c.b16 %v308, %v307
    %v312 = vpack.c.b16 %v310, %v309
    %315 = vmatpush.bf16.msra.mxu0 0
    %316 = vmatpush.bf16.msra.mxu0 0
    %317 = vmatpush.bf16.msra.mxu0 0
    %318 = vmatpush.bf16.msra.mxu0 0
    %319 = vmatpush.bf16.msra.mxu0 0
    %320 = vmatpush.bf16.msra.mxu0 0
    %321 = vmatpush.bf16.msra.mxu0 %v312
    %322 = vmatpush.bf16.msra.mxu0 %v311
    %323 = vmatmul.bf16.gmra.mxu0 %v82
    %v324 = vpop.f32.mrf.mxu0
    %v325 = vadd.f32 %v301, %v324
    %v326 = vpop.f32.mrf.mxu0
    %v327 = vadd.f32 %v301, %v326
    %328 = vdwg.mxu0
    %s329 = scalar_lea.vmem %s3, 80
    %v330 = vld [vmem:[%s329] sm:$0xf]
    %v331 = vld [vmem:[%s329 + $0x4] sm:$0xf]
    %v332 = vld [vmem:[%s329 + $0x8] sm:$0xf]
    %v333 = vld [vmem:[%s329 + $0xc] sm:$0xf]
    %s334 = scalar_lea.vmem %s4, 5
    %v335 = vld [vmem:[%s334] sm:$0x1]
    %v337 = vperm.slane %v335, 0
    %v343 = vunpack.c.l.b16 %v330
    %v344 = vunpack.c.l.b16 %v331
    %v345 = vunpack.c.l.b16 %v332
    %v346 = vunpack.c.l.b16 %v333
    %v347 = vpack.c.b16 %v344, %v343
    %v348 = vpack.c.b16 %v346, %v345
    %351 = vmatpush.bf16.msra.mxu0 0
    %352 = vmatpush.bf16.msra.mxu0 0
    %353 = vmatpush.bf16.msra.mxu0 0
    %354 = vmatpush.bf16.msra.mxu0 0
    %355 = vmatpush.bf16.msra.mxu0 0
    %356 = vmatpush.bf16.msra.mxu0 0
    %357 = vmatpush.bf16.msra.mxu0 %v348
    %358 = vmatpush.bf16.msra.mxu0 %v347
    %359 = vmatmul.bf16.gmra.mxu0 %v82
    %v360 = vpop.f32.mrf.mxu0
    %v361 = vadd.f32 %v337, %v360
    %v362 = vpop.f32.mrf.mxu0
    %v363 = vadd.f32 %v337, %v362
    %364 = vdwg.mxu0
    %s365 = scalar_lea.vmem %s3, 144
    %v366 = vld [vmem:[%s365] sm:$0xf]
    %v367 = vld [vmem:[%s365 + $0x4] sm:$0xf]
    %v368 = vld [vmem:[%s365 + $0x8] sm:$0xf]
    %v369 = vld [vmem:[%s365 + $0xc] sm:$0xf]
    %s370 = scalar_lea.vmem %s4, 9
    %v371 = vld [vmem:[%s370] sm:$0x1]
    %v373 = vperm.slane %v371, 0
    %v379 = vunpack.c.l.b16 %v366
    %v380 = vunpack.c.l.b16 %v367
    %v381 = vunpack.c.l.b16 %v368
    %v382 = vunpack.c.l.b16 %v369
    %v383 = vpack.c.b16 %v380, %v379
    %v384 = vpack.c.b16 %v382, %v381
    %387 = vmatpush.bf16.msra.mxu0 0
    %388 = vmatpush.bf16.msra.mxu0 0
    %389 = vmatpush.bf16.msra.mxu0 0
    %390 = vmatpush.bf16.msra.mxu0 0
    %391 = vmatpush.bf16.msra.mxu0 0
    %392 = vmatpush.bf16.msra.mxu0 0
    %393 = vmatpush.bf16.msra.mxu0 %v384
    %394 = vmatpush.bf16.msra.mxu0 %v383
    %395 = vmatmul.bf16.gmra.mxu0 %v82
    %v396 = vpop.f32.mrf.mxu0
    %v397 = vadd.f32 %v373, %v396
    %v398 = vpop.f32.mrf.mxu0
    %v399 = vadd.f32 %v373, %v398
    %400 = vdwg.mxu0
    %v402 = vsel %vm170, %v325, 0
    %v405 = vsel %vm170, %v361, 0
    %407 = vmatpush.xpose.msra.mxu0 0.0
    %408 = vmatpush.xpose.msra.mxu0 0.0
    %409 = vmatpush.xpose.msra.mxu0 0.0
    %410 = vmatpush.xpose.msra.mxu0 0.0
    %411 = vmatpush.xpose.msra.mxu0 0.0
    %412 = vmatpush.xpose.msra.mxu0 0.0
    %413 = vmatpush.xpose.msra.mxu0 0.0
    %414 = vmatpush.xpose.msra.mxu0 0.0
    %415 = vmatpush.xpose.msra.mxu0 0.0
    %416 = vmatpush.xpose.msra.mxu0 0.0
    %417 = vmatpush.xpose.msra.mxu0 0.0
    %418 = vmatpush.xpose.msra.mxu0 0.0
    %419 = vmatpush.xpose.msra.mxu0 0.0
    %420 = vmatpush.xpose.msra.mxu0 0.0
    %421 = vmatpush.xpose.msra.mxu0 0.0
    %422 = vmatpush.xpose.msra.mxu0 %v405
    %423 = vmatmul.f32.gmra.mxu0 %v402
    %v424 = vpop.f32.mrf.mxu0
    %v425 = vadd.f32 %v48, %v424
    %426 = vdwg.mxu0
    %v428 = vsel %vm170, %v327, 0
    %v431 = vsel %vm170, %v363, 0
    %433 = vmatpush.xpose.msra.mxu0 0.0
    %434 = vmatpush.xpose.msra.mxu0 0.0
    %435 = vmatpush.xpose.msra.mxu0 0.0
    %436 = vmatpush.xpose.msra.mxu0 0.0
    %437 = vmatpush.xpose.msra.mxu0 0.0
    %438 = vmatpush.xpose.msra.mxu0 0.0
    %439 = vmatpush.xpose.msra.mxu0 0.0
    %440 = vmatpush.xpose.msra.mxu0 0.0
    %441 = vmatpush.xpose.msra.mxu0 0.0
    %442 = vmatpush.xpose.msra.mxu0 0.0
    %443 = vmatpush.xpose.msra.mxu0 0.0
    %444 = vmatpush.xpose.msra.mxu0 0.0
    %445 = vmatpush.xpose.msra.mxu0 0.0
    %446 = vmatpush.xpose.msra.mxu0 0.0
    %447 = vmatpush.xpose.msra.mxu0 0.0
    %448 = vmatpush.xpose.msra.mxu0 %v431
    %449 = vmatmul.f32.gmra.mxu0 %v428
    %v450 = vpop.f32.mrf.mxu0
    %v451 = vadd.f32 %v49, %v450
    %452 = vdwg.mxu0
    %v453 = vsel %vm170, %v425, -inf
    %454 = vmax.xlane.f32.xlu0 %v453
    %v455 = vpop.xlane.xlu0 %454
    %v456 = vsel %vm170, %v451, -inf
    %457 = vmax.xlane.f32.xlu0 %v456
    %v458 = vpop.xlane.xlu0 %457
    %v459 = vsub.f32 %v425, %v455
    %v460 = vsub.f32 %v451, %v458
    %v461 = vmul.f32 %v459, 1.442695
    %v462 = vpow.pop %v461
    %v463 = vmul.f32 %v460, 1.442695
    %v464 = vpow.pop %v463
    %v465 = vsel %vm170, %v462, 0.0
    %466 = vadd.xlane.f32.xlu0 %v465
    %v467 = vpop.xlane.xlu0 %466
    %v468 = vsel %vm170, %v464, 0.0
    %469 = vadd.xlane.f32.xlu0 %v468
    %v470 = vpop.xlane.xlu0 %469
    %v471 = vrcp.pop %v467
    %v472 = vrcp.pop %v470
    %v473 = vmul.f32 %v462, %v471
    %v474 = vmul.f32 %v464, %v472
    %v476 = vsel %vm170, %v473, 0
    %478 = vmatpush.msra.mxu0 0.0
    %479 = vmatpush.msra.mxu0 0.0
    %480 = vmatpush.msra.mxu0 0.0
    %481 = vmatpush.msra.mxu0 0.0
    %482 = vmatpush.msra.mxu0 0.0
    %483 = vmatpush.msra.mxu0 0.0
    %484 = vmatpush.msra.mxu0 0.0
    %485 = vmatpush.msra.mxu0 0.0
    %486 = vmatpush.msra.mxu0 0.0
    %487 = vmatpush.msra.mxu0 0.0
    %488 = vmatpush.msra.mxu0 0.0
    %489 = vmatpush.msra.mxu0 0.0
    %490 = vmatpush.msra.mxu0 0.0
    %491 = vmatpush.msra.mxu0 0.0
    %492 = vmatpush.msra.mxu0 0.0
    %493 = vmatpush.msra.mxu0 %v397
    %494 = vmatmul.f32.gmra.mxu0 %v476
    %v495 = vpop.f32.mrf.mxu0
    %v496 = vadd.f32 0.0, %v495
    %497 = vdwg.mxu0
    %v499 = vsel %vm170, %v474, 0
    %501 = vmatpush.msra.mxu0 0.0
    %502 = vmatpush.msra.mxu0 0.0
    %503 = vmatpush.msra.mxu0 0.0
    %504 = vmatpush.msra.mxu0 0.0
    %505 = vmatpush.msra.mxu0 0.0
    %506 = vmatpush.msra.mxu0 0.0
    %507 = vmatpush.msra.mxu0 0.0
    %508 = vmatpush.msra.mxu0 0.0
    %509 = vmatpush.msra.mxu0 0.0
    %510 = vmatpush.msra.mxu0 0.0
    %511 = vmatpush.msra.mxu0 0.0
    %512 = vmatpush.msra.mxu0 0.0
    %513 = vmatpush.msra.mxu0 0.0
    %514 = vmatpush.msra.mxu0 0.0
    %515 = vmatpush.msra.mxu0 0.0
    %516 = vmatpush.msra.mxu0 %v399
    %517 = vmatmul.f32.gmra.mxu0 %v499
    %v518 = vpop.f32.mrf.mxu0
    %v519 = vadd.f32 0.0, %v518
    %520 = vdwg.mxu0
    %v521 = vpack.c.bf16 %v519, %v496
    %s522 = scalar_lea.vmem %s5, 4
    %v523 = vld [vmem:[%s522] sm:$0xf]
    %v525 = vsel %vm170, %v521, 0
    %vm527 = vcmask 1043456
    %v529 = vsel %vm527, %v523, 0
    %531 = vmatpush.bf16.msra.mxu0 0
    %532 = vmatpush.bf16.msra.mxu0 0
    %533 = vmatpush.bf16.msra.mxu0 0
    %534 = vmatpush.bf16.msra.mxu0 0
    %535 = vmatpush.bf16.msra.mxu0 0
    %536 = vmatpush.bf16.msra.mxu0 0
    %537 = vmatpush.bf16.msra.mxu0 0
    %538 = vmatpush.bf16.msra.mxu0 %v529
    %539 = vmatmul.bf16.gmra.mxu0 %v525
    %v540 = vpop.f32.mrf.mxu0
    %v541 = vadd.f32 0.0, %v540
    %v542 = vpop.f32.mrf.mxu0
    %v543 = vadd.f32 0.0, %v542
    %544 = vdwg.mxu0
    %v546 = vsel %vm170, %v291, 0
    %v549 = vsel %vm527, %v292, 0
    %551 = vmatpush.bf16.msra.mxu0 0
    %552 = vmatpush.bf16.msra.mxu0 0
    %553 = vmatpush.bf16.msra.mxu0 0
    %554 = vmatpush.bf16.msra.mxu0 0
    %555 = vmatpush.bf16.msra.mxu0 0
    %556 = vmatpush.bf16.msra.mxu0 0
    %557 = vmatpush.bf16.msra.mxu0 0
    %558 = vmatpush.bf16.msra.mxu0 %v549
    %559 = vmatmul.bf16.gmra.mxu0 %v546
    %v560 = vpop.f32.mrf.mxu0
    %v561 = vadd.f32 %v541, %v560
    %v562 = vpop.f32.mrf.mxu0
    %v563 = vadd.f32 %v543, %v562
    %564 = vdwg.mxu0
    %s565 = scalar_lea.vmem %s3, 32
    %v566 = vld [vmem:[%s565] sm:$0xf]
    %v567 = vld [vmem:[%s565 + $0x4] sm:$0xf]
    %v568 = vld [vmem:[%s565 + $0x8] sm:$0xf]
    %v569 = vld [vmem:[%s565 + $0xc] sm:$0xf]
    %s570 = scalar_lea.vmem %s4, 2
    %v571 = vld [vmem:[%s570] sm:$0x1]
    %v573 = vperm.slane %v571, 0
    %v579 = vunpack.c.l.b16 %v566
    %v580 = vunpack.c.l.b16 %v567
    %v581 = vunpack.c.l.b16 %v568
    %v582 = vunpack.c.l.b16 %v569
    %v583 = vpack.c.b16 %v580, %v579
    %v584 = vpack.c.b16 %v582, %v581
    %587 = vmatpush.bf16.msra.mxu0 0
    %588 = vmatpush.bf16.msra.mxu0 0
    %589 = vmatpush.bf16.msra.mxu0 0
    %590 = vmatpush.bf16.msra.mxu0 0
    %591 = vmatpush.bf16.msra.mxu0 0
    %592 = vmatpush.bf16.msra.mxu0 0
    %593 = vmatpush.bf16.msra.mxu0 %v584
    %594 = vmatpush.bf16.msra.mxu0 %v583
    %595 = vmatmul.bf16.gmra.mxu0 %v82
    %v596 = vpop.f32.mrf.mxu0
    %v597 = vadd.f32 %v573, %v596
    %v598 = vpop.f32.mrf.mxu0
    %v599 = vadd.f32 %v573, %v598
    %600 = vdwg.mxu0
    %s601 = scalar_lea.vmem %s3, 96
    %v602 = vld [vmem:[%s601] sm:$0xf]
    %v603 = vld [vmem:[%s601 + $0x4] sm:$0xf]
    %v604 = vld [vmem:[%s601 + $0x8] sm:$0xf]
    %v605 = vld [vmem:[%s601 + $0xc] sm:$0xf]
    %s606 = scalar_lea.vmem %s4, 6
    %v607 = vld [vmem:[%s606] sm:$0x1]
    %v609 = vperm.slane %v607, 0
    %v615 = vunpack.c.l.b16 %v602
    %v616 = vunpack.c.l.b16 %v603
    %v617 = vunpack.c.l.b16 %v604
    %v618 = vunpack.c.l.b16 %v605
    %v619 = vpack.c.b16 %v616, %v615
    %v620 = vpack.c.b16 %v618, %v617
    %623 = vmatpush.bf16.msra.mxu0 0
    %624 = vmatpush.bf16.msra.mxu0 0
    %625 = vmatpush.bf16.msra.mxu0 0
    %626 = vmatpush.bf16.msra.mxu0 0
    %627 = vmatpush.bf16.msra.mxu0 0
    %628 = vmatpush.bf16.msra.mxu0 0
    %629 = vmatpush.bf16.msra.mxu0 %v620
    %630 = vmatpush.bf16.msra.mxu0 %v619
    %631 = vmatmul.bf16.gmra.mxu0 %v82
    %v632 = vpop.f32.mrf.mxu0
    %v633 = vadd.f32 %v609, %v632
    %v634 = vpop.f32.mrf.mxu0
    %v635 = vadd.f32 %v609, %v634
    %636 = vdwg.mxu0
    %s637 = scalar_lea.vmem %s3, 160
    %v638 = vld [vmem:[%s637] sm:$0xf]
    %v639 = vld [vmem:[%s637 + $0x4] sm:$0xf]
    %v640 = vld [vmem:[%s637 + $0x8] sm:$0xf]
    %v641 = vld [vmem:[%s637 + $0xc] sm:$0xf]
    %s642 = scalar_lea.vmem %s4, 10
    %v643 = vld [vmem:[%s642] sm:$0x1]
    %v645 = vperm.slane %v643, 0
    %v651 = vunpack.c.l.b16 %v638
    %v652 = vunpack.c.l.b16 %v639
    %v653 = vunpack.c.l.b16 %v640
    %v654 = vunpack.c.l.b16 %v641
    %v655 = vpack.c.b16 %v652, %v651
    %v656 = vpack.c.b16 %v654, %v653
    %659 = vmatpush.bf16.msra.mxu0 0
    %660 = vmatpush.bf16.msra.mxu0 0
    %661 = vmatpush.bf16.msra.mxu0 0
    %662 = vmatpush.bf16.msra.mxu0 0
    %663 = vmatpush.bf16.msra.mxu0 0
    %664 = vmatpush.bf16.msra.mxu0 0
    %665 = vmatpush.bf16.msra.mxu0 %v656
    %666 = vmatpush.bf16.msra.mxu0 %v655
    %667 = vmatmul.bf16.gmra.mxu0 %v82
    %v668 = vpop.f32.mrf.mxu0
    %v669 = vadd.f32 %v645, %v668
    %v670 = vpop.f32.mrf.mxu0
    %v671 = vadd.f32 %v645, %v670
    %672 = vdwg.mxu0
    %v674 = vsel %vm170, %v597, 0
    %v677 = vsel %vm170, %v633, 0
    %679 = vmatpush.xpose.msra.mxu0 0.0
    %680 = vmatpush.xpose.msra.mxu0 0.0
    %681 = vmatpush.xpose.msra.mxu0 0.0
    %682 = vmatpush.xpose.msra.mxu0 0.0
    %683 = vmatpush.xpose.msra.mxu0 0.0
    %684 = vmatpush.xpose.msra.mxu0 0.0
    %685 = vmatpush.xpose.msra.mxu0 0.0
    %686 = vmatpush.xpose.msra.mxu0 0.0
    %687 = vmatpush.xpose.msra.mxu0 0.0
    %688 = vmatpush.xpose.msra.mxu0 0.0
    %689 = vmatpush.xpose.msra.mxu0 0.0
    %690 = vmatpush.xpose.msra.mxu0 0.0
    %691 = vmatpush.xpose.msra.mxu0 0.0
    %692 = vmatpush.xpose.msra.mxu0 0.0
    %693 = vmatpush.xpose.msra.mxu0 0.0
    %694 = vmatpush.xpose.msra.mxu0 %v677
    %695 = vmatmul.f32.gmra.mxu0 %v674
    %v696 = vpop.f32.mrf.mxu0
    %v697 = vadd.f32 %v48, %v696
    %698 = vdwg.mxu0
    %v700 = vsel %vm170, %v599, 0
    %v703 = vsel %vm170, %v635, 0
    %705 = vmatpush.xpose.msra.mxu0 0.0
    %706 = vmatpush.xpose.msra.mxu0 0.0
    %707 = vmatpush.xpose.msra.mxu0 0.0
    %708 = vmatpush.xpose.msra.mxu0 0.0
    %709 = vmatpush.xpose.msra.mxu0 0.0
    %710 = vmatpush.xpose.msra.mxu0 0.0
    %711 = vmatpush.xpose.msra.mxu0 0.0
    %712 = vmatpush.xpose.msra.mxu0 0.0
    %713 = vmatpush.xpose.msra.mxu0 0.0
    %714 = vmatpush.xpose.msra.mxu0 0.0
    %715 = vmatpush.xpose.msra.mxu0 0.0
    %716 = vmatpush.xpose.msra.mxu0 0.0
    %717 = vmatpush.xpose.msra.mxu0 0.0
    %718 = vmatpush.xpose.msra.mxu0 0.0
    %719 = vmatpush.xpose.msra.mxu0 0.0
    %720 = vmatpush.xpose.msra.mxu0 %v703
    %721 = vmatmul.f32.gmra.mxu0 %v700
    %v722 = vpop.f32.mrf.mxu0
    %v723 = vadd.f32 %v49, %v722
    %724 = vdwg.mxu0
    %v725 = vsel %vm170, %v697, -inf
    %726 = vmax.xlane.f32.xlu0 %v725
    %v727 = vpop.xlane.xlu0 %726
    %v728 = vsel %vm170, %v723, -inf
    %729 = vmax.xlane.f32.xlu0 %v728
    %v730 = vpop.xlane.xlu0 %729
    %v731 = vsub.f32 %v697, %v727
    %v732 = vsub.f32 %v723, %v730
    %v733 = vmul.f32 %v731, 1.442695
    %v734 = vpow.pop %v733
    %v735 = vmul.f32 %v732, 1.442695
    %v736 = vpow.pop %v735
    %v737 = vsel %vm170, %v734, 0.0
    %738 = vadd.xlane.f32.xlu0 %v737
    %v739 = vpop.xlane.xlu0 %738
    %v740 = vsel %vm170, %v736, 0.0
    %741 = vadd.xlane.f32.xlu0 %v740
    %v742 = vpop.xlane.xlu0 %741
    %v743 = vrcp.pop %v739
    %v744 = vrcp.pop %v742
    %v745 = vmul.f32 %v734, %v743
    %v746 = vmul.f32 %v736, %v744
    %v748 = vsel %vm170, %v745, 0
    %750 = vmatpush.msra.mxu0 0.0
    %751 = vmatpush.msra.mxu0 0.0
    %752 = vmatpush.msra.mxu0 0.0
    %753 = vmatpush.msra.mxu0 0.0
    %754 = vmatpush.msra.mxu0 0.0
    %755 = vmatpush.msra.mxu0 0.0
    %756 = vmatpush.msra.mxu0 0.0
    %757 = vmatpush.msra.mxu0 0.0
    %758 = vmatpush.msra.mxu0 0.0
    %759 = vmatpush.msra.mxu0 0.0
    %760 = vmatpush.msra.mxu0 0.0
    %761 = vmatpush.msra.mxu0 0.0
    %762 = vmatpush.msra.mxu0 0.0
    %763 = vmatpush.msra.mxu0 0.0
    %764 = vmatpush.msra.mxu0 0.0
    %765 = vmatpush.msra.mxu0 %v669
    %766 = vmatmul.f32.gmra.mxu0 %v748
    %v767 = vpop.f32.mrf.mxu0
    %v768 = vadd.f32 0.0, %v767
    %769 = vdwg.mxu0
    %v771 = vsel %vm170, %v746, 0
    %773 = vmatpush.msra.mxu0 0.0
    %774 = vmatpush.msra.mxu0 0.0
    %775 = vmatpush.msra.mxu0 0.0
    %776 = vmatpush.msra.mxu0 0.0
    %777 = vmatpush.msra.mxu0 0.0
    %778 = vmatpush.msra.mxu0 0.0
    %779 = vmatpush.msra.mxu0 0.0
    %780 = vmatpush.msra.mxu0 0.0
    %781 = vmatpush.msra.mxu0 0.0
    %782 = vmatpush.msra.mxu0 0.0
    %783 = vmatpush.msra.mxu0 0.0
    %784 = vmatpush.msra.mxu0 0.0
    %785 = vmatpush.msra.mxu0 0.0
    %786 = vmatpush.msra.mxu0 0.0
    %787 = vmatpush.msra.mxu0 0.0
    %788 = vmatpush.msra.mxu0 %v671
    %789 = vmatmul.f32.gmra.mxu0 %v771
    %v790 = vpop.f32.mrf.mxu0
    %v791 = vadd.f32 0.0, %v790
    %792 = vdwg.mxu0
    %v793 = vpack.c.bf16 %v791, %v768
    %s794 = scalar_lea.vmem %s5, 8
    %v795 = vld [vmem:[%s794] sm:$0xf]
    %v797 = vsel %vm170, %v793, 0
    %v800 = vsel %vm527, %v795, 0
    %802 = vmatpush.bf16.msra.mxu0 0
    %803 = vmatpush.bf16.msra.mxu0 0
    %804 = vmatpush.bf16.msra.mxu0 0
    %805 = vmatpush.bf16.msra.mxu0 0
    %806 = vmatpush.bf16.msra.mxu0 0
    %807 = vmatpush.bf16.msra.mxu0 0
    %808 = vmatpush.bf16.msra.mxu0 0
    %809 = vmatpush.bf16.msra.mxu0 %v800
    %810 = vmatmul.bf16.gmra.mxu0 %v797
    %v811 = vpop.f32.mrf.mxu0
    %v812 = vadd.f32 0.0, %v811
    %v813 = vpop.f32.mrf.mxu0
    %v814 = vadd.f32 0.0, %v813
    %815 = vdwg.mxu0
    %v816 = vadd.f32 %v561, %v812
    %v817 = vadd.f32 %v563, %v814
    %s818 = scalar_lea.vmem %s3, 48
    %v819 = vld [vmem:[%s818] sm:$0xf]
    %v820 = vld [vmem:[%s818 + $0x4] sm:$0xf]
    %v821 = vld [vmem:[%s818 + $0x8] sm:$0xf]
    %v822 = vld [vmem:[%s818 + $0xc] sm:$0xf]
    %s823 = scalar_lea.vmem %s4, 3
    %v824 = vld [vmem:[%s823] sm:$0x1]
    %v826 = vperm.slane %v824, 0
    %v832 = vunpack.c.l.b16 %v819
    %v833 = vunpack.c.l.b16 %v820
    %v834 = vunpack.c.l.b16 %v821
    %v835 = vunpack.c.l.b16 %v822
    %v836 = vpack.c.b16 %v833, %v832
    %v837 = vpack.c.b16 %v835, %v834
    %840 = vmatpush.bf16.msra.mxu0 0
    %841 = vmatpush.bf16.msra.mxu0 0
    %842 = vmatpush.bf16.msra.mxu0 0
    %843 = vmatpush.bf16.msra.mxu0 0
    %844 = vmatpush.bf16.msra.mxu0 0
    %845 = vmatpush.bf16.msra.mxu0 0
    %846 = vmatpush.bf16.msra.mxu0 %v837
    %847 = vmatpush.bf16.msra.mxu0 %v836
    %848 = vmatmul.bf16.gmra.mxu0 %v82
    %v849 = vpop.f32.mrf.mxu0
    %v850 = vadd.f32 %v826, %v849
    %v851 = vpop.f32.mrf.mxu0
    %v852 = vadd.f32 %v826, %v851
    %853 = vdwg.mxu0
    %s854 = scalar_lea.vmem %s3, 112
    %v855 = vld [vmem:[%s854] sm:$0xf]
    %v856 = vld [vmem:[%s854 + $0x4] sm:$0xf]
    %v857 = vld [vmem:[%s854 + $0x8] sm:$0xf]
    %v858 = vld [vmem:[%s854 + $0xc] sm:$0xf]
    %s859 = scalar_lea.vmem %s4, 7
    %v860 = vld [vmem:[%s859] sm:$0x1]
    %v862 = vperm.slane %v860, 0
    %v868 = vunpack.c.l.b16 %v855
    %v869 = vunpack.c.l.b16 %v856
    %v870 = vunpack.c.l.b16 %v857
    %v871 = vunpack.c.l.b16 %v858
    %v872 = vpack.c.b16 %v869, %v868
    %v873 = vpack.c.b16 %v871, %v870
    %876 = vmatpush.bf16.msra.mxu0 0
    %877 = vmatpush.bf16.msra.mxu0 0
    %878 = vmatpush.bf16.msra.mxu0 0
    %879 = vmatpush.bf16.msra.mxu0 0
    %880 = vmatpush.bf16.msra.mxu0 0
    %881 = vmatpush.bf16.msra.mxu0 0
    %882 = vmatpush.bf16.msra.mxu0 %v873
    %883 = vmatpush.bf16.msra.mxu0 %v872
    %884 = vmatmul.bf16.gmra.mxu0 %v82
    %v885 = vpop.f32.mrf.mxu0
    %v886 = vadd.f32 %v862, %v885
    %v887 = vpop.f32.mrf.mxu0
    %v888 = vadd.f32 %v862, %v887
    %889 = vdwg.mxu0
    %s890 = scalar_lea.vmem %s3, 176
    %v891 = vld [vmem:[%s890] sm:$0xf]
    %v892 = vld [vmem:[%s890 + $0x4] sm:$0xf]
    %v893 = vld [vmem:[%s890 + $0x8] sm:$0xf]
    %v894 = vld [vmem:[%s890 + $0xc] sm:$0xf]
    %s895 = scalar_lea.vmem %s4, 11
    %v896 = vld [vmem:[%s895] sm:$0x1]
    %v898 = vperm.slane %v896, 0
    %v904 = vunpack.c.l.b16 %v891
    %v905 = vunpack.c.l.b16 %v892
    %v906 = vunpack.c.l.b16 %v893
    %v907 = vunpack.c.l.b16 %v894
    %v908 = vpack.c.b16 %v905, %v904
    %v909 = vpack.c.b16 %v907, %v906
    %912 = vmatpush.bf16.msra.mxu0 0
    %913 = vmatpush.bf16.msra.mxu0 0
    %914 = vmatpush.bf16.msra.mxu0 0
    %915 = vmatpush.bf16.msra.mxu0 0
    %916 = vmatpush.bf16.msra.mxu0 0
    %917 = vmatpush.bf16.msra.mxu0 0
    %918 = vmatpush.bf16.msra.mxu0 %v909
    %919 = vmatpush.bf16.msra.mxu0 %v908
    %920 = vmatmul.bf16.gmra.mxu0 %v82
    %v921 = vpop.f32.mrf.mxu0
    %v922 = vadd.f32 %v898, %v921
    %v923 = vpop.f32.mrf.mxu0
    %v924 = vadd.f32 %v898, %v923
    %925 = vdwg.mxu0
    %v927 = vsel %vm170, %v850, 0
    %v930 = vsel %vm170, %v886, 0
    %932 = vmatpush.xpose.msra.mxu0 0.0
    %933 = vmatpush.xpose.msra.mxu0 0.0
    %934 = vmatpush.xpose.msra.mxu0 0.0
    %935 = vmatpush.xpose.msra.mxu0 0.0
    %936 = vmatpush.xpose.msra.mxu0 0.0
    %937 = vmatpush.xpose.msra.mxu0 0.0
    %938 = vmatpush.xpose.msra.mxu0 0.0
    %939 = vmatpush.xpose.msra.mxu0 0.0
    %940 = vmatpush.xpose.msra.mxu0 0.0
    %941 = vmatpush.xpose.msra.mxu0 0.0
    %942 = vmatpush.xpose.msra.mxu0 0.0
    %943 = vmatpush.xpose.msra.mxu0 0.0
    %944 = vmatpush.xpose.msra.mxu0 0.0
    %945 = vmatpush.xpose.msra.mxu0 0.0
    %946 = vmatpush.xpose.msra.mxu0 0.0
    %947 = vmatpush.xpose.msra.mxu0 %v930
    %948 = vmatmul.f32.gmra.mxu0 %v927
    %v949 = vpop.f32.mrf.mxu0
    %v950 = vadd.f32 %v48, %v949
    %951 = vdwg.mxu0
    %v953 = vsel %vm170, %v852, 0
    %v956 = vsel %vm170, %v888, 0
    %958 = vmatpush.xpose.msra.mxu0 0.0
    %959 = vmatpush.xpose.msra.mxu0 0.0
    %960 = vmatpush.xpose.msra.mxu0 0.0
    %961 = vmatpush.xpose.msra.mxu0 0.0
    %962 = vmatpush.xpose.msra.mxu0 0.0
    %963 = vmatpush.xpose.msra.mxu0 0.0
    %964 = vmatpush.xpose.msra.mxu0 0.0
    %965 = vmatpush.xpose.msra.mxu0 0.0
    %966 = vmatpush.xpose.msra.mxu0 0.0
    %967 = vmatpush.xpose.msra.mxu0 0.0
    %968 = vmatpush.xpose.msra.mxu0 0.0
    %969 = vmatpush.xpose.msra.mxu0 0.0
    %970 = vmatpush.xpose.msra.mxu0 0.0
    %971 = vmatpush.xpose.msra.mxu0 0.0
    %972 = vmatpush.xpose.msra.mxu0 0.0
    %973 = vmatpush.xpose.msra.mxu0 %v956
    %974 = vmatmul.f32.gmra.mxu0 %v953
    %v975 = vpop.f32.mrf.mxu0
    %v976 = vadd.f32 %v49, %v975
    %977 = vdwg.mxu0
    %v978 = vsel %vm170, %v950, -inf
    %979 = vmax.xlane.f32.xlu0 %v978
    %v980 = vpop.xlane.xlu0 %979
    %v981 = vsel %vm170, %v976, -inf
    %982 = vmax.xlane.f32.xlu0 %v981
    %v983 = vpop.xlane.xlu0 %982
    %v984 = vsub.f32 %v950, %v980
    %v985 = vsub.f32 %v976, %v983
    %v986 = vmul.f32 %v984, 1.442695
    %v987 = vpow.pop %v986
    %v988 = vmul.f32 %v985, 1.442695
    %v989 = vpow.pop %v988
    %v990 = vsel %vm170, %v987, 0.0
    %991 = vadd.xlane.f32.xlu0 %v990
    %v992 = vpop.xlane.xlu0 %991
    %v993 = vsel %vm170, %v989, 0.0
    %994 = vadd.xlane.f32.xlu0 %v993
    %v995 = vpop.xlane.xlu0 %994
    %v996 = vrcp.pop %v992
    %v997 = vrcp.pop %v995
    %v998 = vmul.f32 %v987, %v996
    %v999 = vmul.f32 %v989, %v997
    %v1001 = vsel %vm170, %v998, 0
    %1003 = vmatpush.msra.mxu0 0.0
    %1004 = vmatpush.msra.mxu0 0.0
    %1005 = vmatpush.msra.mxu0 0.0
    %1006 = vmatpush.msra.mxu0 0.0
    %1007 = vmatpush.msra.mxu0 0.0
    %1008 = vmatpush.msra.mxu0 0.0
    %1009 = vmatpush.msra.mxu0 0.0
    %1010 = vmatpush.msra.mxu0 0.0
    %1011 = vmatpush.msra.mxu0 0.0
    %1012 = vmatpush.msra.mxu0 0.0
    %1013 = vmatpush.msra.mxu0 0.0
    %1014 = vmatpush.msra.mxu0 0.0
    %1015 = vmatpush.msra.mxu0 0.0
    %1016 = vmatpush.msra.mxu0 0.0
    %1017 = vmatpush.msra.mxu0 0.0
    %1018 = vmatpush.msra.mxu0 %v922
    %1019 = vmatmul.f32.gmra.mxu0 %v1001
    %v1020 = vpop.f32.mrf.mxu0
    %v1021 = vadd.f32 0.0, %v1020
    %1022 = vdwg.mxu0
    %v1024 = vsel %vm170, %v999, 0
    %1026 = vmatpush.msra.mxu0 0.0
    %1027 = vmatpush.msra.mxu0 0.0
    %1028 = vmatpush.msra.mxu0 0.0
    %1029 = vmatpush.msra.mxu0 0.0
    %1030 = vmatpush.msra.mxu0 0.0
    %1031 = vmatpush.msra.mxu0 0.0
    %1032 = vmatpush.msra.mxu0 0.0
    %1033 = vmatpush.msra.mxu0 0.0
    %1034 = vmatpush.msra.mxu0 0.0
    %1035 = vmatpush.msra.mxu0 0.0
    %1036 = vmatpush.msra.mxu0 0.0
    %1037 = vmatpush.msra.mxu0 0.0
    %1038 = vmatpush.msra.mxu0 0.0
    %1039 = vmatpush.msra.mxu0 0.0
    %1040 = vmatpush.msra.mxu0 0.0
    %1041 = vmatpush.msra.mxu0 %v924
    %1042 = vmatmul.f32.gmra.mxu0 %v1024
    %v1043 = vpop.f32.mrf.mxu0
    %v1044 = vadd.f32 0.0, %v1043
    %1045 = vdwg.mxu0
    %v1046 = vpack.c.bf16 %v1044, %v1021
    %s1047 = scalar_lea.vmem %s5, 12
    %v1048 = vld [vmem:[%s1047] sm:$0xf]
    %v1050 = vsel %vm170, %v1046, 0
    %v1053 = vsel %vm527, %v1048, 0
    %1055 = vmatpush.bf16.msra.mxu0 0
    %1056 = vmatpush.bf16.msra.mxu0 0
    %1057 = vmatpush.bf16.msra.mxu0 0
    %1058 = vmatpush.bf16.msra.mxu0 0
    %1059 = vmatpush.bf16.msra.mxu0 0
    %1060 = vmatpush.bf16.msra.mxu0 0
    %1061 = vmatpush.bf16.msra.mxu0 0
    %1062 = vmatpush.bf16.msra.mxu0 %v1053
    %1063 = vmatmul.bf16.gmra.mxu0 %v1050
    %v1064 = vpop.f32.mrf.mxu0
    %v1065 = vadd.f32 0.0, %v1064
    %v1066 = vpop.f32.mrf.mxu0
    %v1067 = vadd.f32 0.0, %v1066
    %1068 = vdwg.mxu0
    %v1069 = vadd.f32 %v816, %v1065
    %v1070 = vadd.f32 %v817, %v1067
    %v1071 = vadd.f32 %v43, %v1069
    %v1072 = vadd.f32 %v44, %v1070
    %v1073 = vperm.slane %v52, 0
    %v1074 = vadd.f32 %v1071, %v1073
    %v1075 = vadd.f32 %v1072, %v1073
    %v1076 = vsel %vm80, %v1074, 0.0
    %1077 = vadd.xlane.f32.xlu0 %v1076
    %v1078 = vpop.xlane.xlu0 %1077
    %v1079 = vsel %vm80, %v1075, 0.0
    %1080 = vadd.xlane.f32.xlu0 %v1079
    %v1081 = vpop.xlane.xlu0 %1080
    %v1082 = vrcp.pop 32.0
    %v1083 = vmul.f32 32.0, %v1082
    %v1084 = vsub.f32 1.0, %v1083
    %v1085 = vmul.f32 %v1082, %v1084
    %v1086 = vadd.f32 %v1082, %v1085
    %vm1087 = vweird.f32 %v1082
    %v1088 = vsel %vm1087, %v1082, %v1086
    %v1089 = vmul.f32 %v1078, %v1088
    %v1090 = vmul.f32 %v1081, %v1088
    %v1091 = vmul.f32 %v1074, %v1074
    %v1092 = vmul.f32 %v1075, %v1075
    %v1093 = vsel %vm80, %v1091, 0.0
    %1094 = vadd.xlane.f32.xlu0 %v1093
    %v1095 = vpop.xlane.xlu0 %1094
    %v1096 = vsel %vm80, %v1092, 0.0
    %1097 = vadd.xlane.f32.xlu0 %v1096
    %v1098 = vpop.xlane.xlu0 %1097
    %v1099 = vmul.f32 %v1095, %v1088
    %v1100 = vmul.f32 %v1098, %v1088
    %v1101 = vmul.f32 %v1089, %v1089
    %v1102 = vmul.f32 %v1090, %v1090
    %v1103 = vsub.f32 %v1099, %v1101
    %v1104 = vsub.f32 %v1100, %v1102
    %v1105 = vmax.f32 %v1103, 0.0
    %v1106 = vmax.f32 %v1104, 0.0
    %v1107 = vsub.f32 %v1074, %v1089
    %v1108 = vsub.f32 %v1075, %v1090
    %v1109 = vadd.f32 %v1105, 1e-12
    %v1110 = vadd.f32 %v1106, 1e-12
    %v1111 = vrsqrt.pop %v1109
    %v1112 = vmul.f32 %v1111, %v1109
    %v1113 = vmul.f32 %v1112, %v1111
    %v1114 = vmul.f32 0.5, %v1113
    %v1115 = vsub.f32 1.5, %v1114
    %v1116 = vmul.f32 %v1111, %v1115
    %vm1117 = vweird.f32 %v1109
    %vm1118 = vweird.f32 %v1111
    %vm1119 = vmor %vm1117, %vm1118
    %v1120 = vsel %vm1119, %v1111, %v1116
    %v1121 = vrsqrt.pop %v1110
    %v1122 = vmul.f32 %v1121, %v1110
    %v1123 = vmul.f32 %v1122, %v1121
    %v1124 = vmul.f32 0.5, %v1123
    %v1125 = vsub.f32 1.5, %v1124
    %v1126 = vmul.f32 %v1121, %v1125
    %vm1127 = vweird.f32 %v1110
    %vm1128 = vweird.f32 %v1121
    %vm1129 = vmor %vm1127, %vm1128
    %v1130 = vsel %vm1129, %v1121, %v1126
    %v1131 = vmul.f32 %v1107, %v1120
    %v1132 = vmul.f32 %v1108, %v1130
    %v1133 = vperm.slane %v55, 0
    %v1134 = vmul.f32 %v1131, %v1133
    %v1135 = vmul.f32 %v1132, %v1133
    %v1136 = vperm.slane %v56, 0
    %v1137 = vadd.f32 %v1134, %v1136
    %v1138 = vadd.f32 %v1135, %v1136
    %v1139 = vpack.c.bf16 %v1138, %v1137
    %v1140 = vld [vmem:[%s6] sm:$0xf]
    %v1141 = vld [vmem:[%s6 + $0x4] sm:$0xf]
    %v1142 = vld [vmem:[%s6 + $0x8] sm:$0xf]
    %v1143 = vld [vmem:[%s6 + $0xc] sm:$0xf]
    %v1144 = vperm.slane %v53, 0
    %v1149 = vunpack.c.l.b16 %v1140
    %v1150 = vunpack.c.l.b16 %v1141
    %v1151 = vunpack.c.l.b16 %v1142
    %v1152 = vunpack.c.l.b16 %v1143
    %v1153 = vpack.c.b16 %v1150, %v1149
    %v1154 = vpack.c.b16 %v1152, %v1151
    %v1158 = vsel %vm80, %v1139, 0
    %1160 = vmatpush.bf16.msra.mxu0 0
    %1161 = vmatpush.bf16.msra.mxu0 0
    %1162 = vmatpush.bf16.msra.mxu0 0
    %1163 = vmatpush.bf16.msra.mxu0 0
    %1164 = vmatpush.bf16.msra.mxu0 0
    %1165 = vmatpush.bf16.msra.mxu0 0
    %1166 = vmatpush.bf16.msra.mxu0 %v1154
    %1167 = vmatpush.bf16.msra.mxu0 %v1153
    %1168 = vmatmul.bf16.gmra.mxu0 %v1158
    %v1169 = vpop.f32.mrf.mxu0
    %v1170 = vadd.f32 %v1144, %v1169
    %v1171 = vpop.f32.mrf.mxu0
    %v1172 = vadd.f32 %v1144, %v1171
    %1173 = vdwg.mxu0
    %v1174 = vmul.f32 %v1170, %v1170
    %v1175 = vmul.f32 %v1172, %v1172
    %v1176 = vmul.f32 %v1170, %v1174
    %v1177 = vmul.f32 %v1172, %v1175
    %v1178 = vmul.f32 %v1176, 0.044715
    %v1179 = vmul.f32 %v1177, 0.044715
    %v1180 = vadd.f32 %v1170, %v1178
    %v1181 = vadd.f32 %v1172, %v1179
    %v1182 = vmul.f32 %v1180, 0.7978846
    %v1183 = vmul.f32 %v1181, 0.7978846
    %v1184 = vtanh.pop %v1182
    %v1185 = vtanh.pop %v1183
    %v1186 = vadd.f32 %v1184, 1.0
    %v1187 = vadd.f32 %v1185, 1.0
    %v1188 = vmul.f32 %v1186, 0.5
    %v1189 = vmul.f32 %v1187, 0.5
    %v1190 = vmul.f32 %v1170, %v1188
    %v1191 = vmul.f32 %v1172, %v1189
    %v1192 = vpack.c.bf16 %v1191, %v1190
    %v1193 = vld [vmem:[%s7] sm:$0xf]
    %v1194 = vld [vmem:[%s7 + $0x4] sm:$0xf]
    %v1195 = vld [vmem:[%s7 + $0x8] sm:$0xf]
    %v1196 = vld [vmem:[%s7 + $0xc] sm:$0xf]
    %v1197 = vld [vmem:[%s7 + $0x10] sm:$0xf]
    %v1198 = vld [vmem:[%s7 + $0x14] sm:$0xf]
    %v1199 = vld [vmem:[%s7 + $0x18] sm:$0xf]
    %v1200 = vld [vmem:[%s7 + $0x1c] sm:$0xf]
    %v1201 = vperm.slane %v54, 0
    %v1210 = vunpack.c.l.b16 %v1193
    %v1211 = vunpack.c.l.b16 %v1194
    %v1212 = vunpack.c.l.b16 %v1195
    %v1213 = vunpack.c.l.b16 %v1196
    %v1214 = vunpack.c.l.b16 %v1197
    %v1215 = vunpack.c.l.b16 %v1198
    %v1216 = vunpack.c.l.b16 %v1199
    %v1217 = vunpack.c.l.b16 %v1200
    %v1218 = vpack.c.b16 %v1211, %v1210
    %v1219 = vpack.c.b16 %v1213, %v1212
    %v1220 = vpack.c.b16 %v1215, %v1214
    %v1221 = vpack.c.b16 %v1217, %v1216
    %vm1226 = vcmask 523264
    %v1228 = vsel %vm1226, %v1192, 0
    %1230 = vmatpush.bf16.msra.mxu0 0
    %1231 = vmatpush.bf16.msra.mxu0 0
    %1232 = vmatpush.bf16.msra.mxu0 0
    %1233 = vmatpush.bf16.msra.mxu0 0
    %1234 = vmatpush.bf16.msra.mxu0 %v1221
    %1235 = vmatpush.bf16.msra.mxu0 %v1220
    %1236 = vmatpush.bf16.msra.mxu0 %v1219
    %1237 = vmatpush.bf16.msra.mxu0 %v1218
    %1238 = vmatmul.bf16.gmra.mxu0 %v1228
    %v1239 = vpop.f32.mrf.mxu0
    %v1240 = vadd.f32 %v1201, %v1239
    %v1241 = vpop.f32.mrf.mxu0
    %v1242 = vadd.f32 %v1201, %v1241
    %1243 = vdwg.mxu0
    %v1244 = vadd.f32 %v1137, %v1240
    %v1245 = vadd.f32 %v1138, %v1242
    %v1246 = vsel %vm80, %v1244, 0.0
    %1247 = vadd.xlane.f32.xlu0 %v1246
    %v1248 = vpop.xlane.xlu0 %1247
    %v1249 = vsel %vm80, %v1245, 0.0
    %1250 = vadd.xlane.f32.xlu0 %v1249
    %v1251 = vpop.xlane.xlu0 %1250
    %v1252 = vmul.f32 %v1248, %v1088
    %v1253 = vmul.f32 %v1251, %v1088
    %v1254 = vmul.f32 %v1244, %v1244
    %v1255 = vmul.f32 %v1245, %v1245
    %v1256 = vsel %vm80, %v1254, 0.0
    %1257 = vadd.xlane.f32.xlu0 %v1256
    %v1258 = vpop.xlane.xlu0 %1257
    %v1259 = vsel %vm80, %v1255, 0.0
    %1260 = vadd.xlane.f32.xlu0 %v1259
    %v1261 = vpop.xlane.xlu0 %1260
    %v1262 = vmul.f32 %v1258, %v1088
    %v1263 = vmul.f32 %v1261, %v1088
    %v1264 = vmul.f32 %v1252, %v1252
    %v1265 = vmul.f32 %v1253, %v1253
    %v1266 = vsub.f32 %v1262, %v1264
    %v1267 = vsub.f32 %v1263, %v1265
    %v1268 = vmax.f32 %v1266, 0.0
    %v1269 = vmax.f32 %v1267, 0.0
    %v1270 = vsub.f32 %v1244, %v1252
    %v1271 = vsub.f32 %v1245, %v1253
    %v1272 = vadd.f32 %v1268, 1e-12
    %v1273 = vadd.f32 %v1269, 1e-12
    %v1274 = vrsqrt.pop %v1272
    %v1275 = vmul.f32 %v1274, %v1272
    %v1276 = vmul.f32 %v1275, %v1274
    %v1277 = vmul.f32 0.5, %v1276
    %v1278 = vsub.f32 1.5, %v1277
    %v1279 = vmul.f32 %v1274, %v1278
    %vm1280 = vweird.f32 %v1272
    %vm1281 = vweird.f32 %v1274
    %vm1282 = vmor %vm1280, %vm1281
    %v1283 = vsel %vm1282, %v1274, %v1279
    %v1284 = vrsqrt.pop %v1273
    %v1285 = vmul.f32 %v1284, %v1273
    %v1286 = vmul.f32 %v1285, %v1284
    %v1287 = vmul.f32 0.5, %v1286
    %v1288 = vsub.f32 1.5, %v1287
    %v1289 = vmul.f32 %v1284, %v1288
    %vm1290 = vweird.f32 %v1273
    %vm1291 = vweird.f32 %v1284
    %vm1292 = vmor %vm1290, %vm1291
    %v1293 = vsel %vm1292, %v1284, %v1289
    %v1294 = vmul.f32 %v1270, %v1283
    %v1295 = vmul.f32 %v1271, %v1293
    %v1296 = vperm.slane %v57, 0
    %v1297 = vmul.f32 %v1294, %v1296
    %v1298 = vmul.f32 %v1295, %v1296
    %v1299 = vperm.slane %v58, 0
    %v1300 = vadd.f32 %v1297, %v1299
    %v1301 = vadd.f32 %v1298, %v1299
    %s1302 = scalar_lea.vmem %s8, 8
    %v1303 = vld [vmem:[%s1302] sm:$0x1]
    %v1304 = vld [vmem:[%s1302 + $0x1] sm:$0x1]
    %v1305 = vld [vmem:[%s1302 + $0x2] sm:$0x1]
    %v1306 = vld [vmem:[%s1302 + $0x3] sm:$0x1]
    %v1307 = vld [vmem:[%s1302 + $0x4] sm:$0x1]
    %v1308 = vld [vmem:[%s1302 + $0x5] sm:$0x1]
    %v1309 = vld [vmem:[%s1302 + $0x6] sm:$0x1]
    %v1310 = vpack.c.bf16 %v1301, %v1300
    %s1311 = scalar_lea.vmem %s3, 192
    %v1312 = vld [vmem:[%s1311] sm:$0xf]
    %v1313 = vld [vmem:[%s1311 + $0x4] sm:$0xf]
    %v1314 = vld [vmem:[%s1311 + $0x8] sm:$0xf]
    %v1315 = vld [vmem:[%s1311 + $0xc] sm:$0xf]
    %s1316 = scalar_lea.vmem %s4, 12
    %v1317 = vld [vmem:[%s1316] sm:$0x1]
    %v1319 = vperm.slane %v1317, 0
    %v1325 = vunpack.c.l.b16 %v1312
    %v1326 = vunpack.c.l.b16 %v1313
    %v1327 = vunpack.c.l.b16 %v1314
    %v1328 = vunpack.c.l.b16 %v1315
    %v1329 = vpack.c.b16 %v1326, %v1325
    %v1330 = vpack.c.b16 %v1328, %v1327
    %v1334 = vsel %vm80, %v1310, 0
    %1336 = vmatpush.bf16.msra.mxu0 0
    %1337 = vmatpush.bf16.msra.mxu0 0
    %1338 = vmatpush.bf16.msra.mxu0 0
    %1339 = vmatpush.bf16.msra.mxu0 0
    %1340 = vmatpush.bf16.msra.mxu0 0
    %1341 = vmatpush.bf16.msra.mxu0 0
    %1342 = vmatpush.bf16.msra.mxu0 %v1330
    %1343 = vmatpush.bf16.msra.mxu0 %v1329
    %1344 = vmatmul.bf16.gmra.mxu0 %v1334
    %v1345 = vpop.f32.mrf.mxu0
    %v1346 = vadd.f32 %v1319, %v1345
    %v1347 = vpop.f32.mrf.mxu0
    %v1348 = vadd.f32 %v1319, %v1347
    %1349 = vdwg.mxu0
    %s1350 = scalar_lea.vmem %s3, 256
    %v1351 = vld [vmem:[%s1350] sm:$0xf]
    %v1352 = vld [vmem:[%s1350 + $0x4] sm:$0xf]
    %v1353 = vld [vmem:[%s1350 + $0x8] sm:$0xf]
    %v1354 = vld [vmem:[%s1350 + $0xc] sm:$0xf]
    %s1355 = scalar_lea.vmem %s4, 16
    %v1356 = vld [vmem:[%s1355] sm:$0x1]
    %v1358 = vperm.slane %v1356, 0
    %v1364 = vunpack.c.l.b16 %v1351
    %v1365 = vunpack.c.l.b16 %v1352
    %v1366 = vunpack.c.l.b16 %v1353
    %v1367 = vunpack.c.l.b16 %v1354
    %v1368 = vpack.c.b16 %v1365, %v1364
    %v1369 = vpack.c.b16 %v1367, %v1366
    %1372 = vmatpush.bf16.msra.mxu0 0
    %1373 = vmatpush.bf16.msra.mxu0 0
    %1374 = vmatpush.bf16.msra.mxu0 0
    %1375 = vmatpush.bf16.msra.mxu0 0
    %1376 = vmatpush.bf16.msra.mxu0 0
    %1377 = vmatpush.bf16.msra.mxu0 0
    %1378 = vmatpush.bf16.msra.mxu0 %v1369
    %1379 = vmatpush.bf16.msra.mxu0 %v1368
    %1380 = vmatmul.bf16.gmra.mxu0 %v1334
    %v1381 = vpop.f32.mrf.mxu0
    %v1382 = vadd.f32 %v1358, %v1381
    %v1383 = vpop.f32.mrf.mxu0
    %v1384 = vadd.f32 %v1358, %v1383
    %1385 = vdwg.mxu0
    %s1386 = scalar_lea.vmem %s3, 320
    %v1387 = vld [vmem:[%s1386] sm:$0xf]
    %v1388 = vld [vmem:[%s1386 + $0x4] sm:$0xf]
    %v1389 = vld [vmem:[%s1386 + $0x8] sm:$0xf]
    %v1390 = vld [vmem:[%s1386 + $0xc] sm:$0xf]
    %s1391 = scalar_lea.vmem %s4, 20
    %v1392 = vld [vmem:[%s1391] sm:$0x1]
    %v1394 = vperm.slane %v1392, 0
    %v1400 = vunpack.c.l.b16 %v1387
    %v1401 = vunpack.c.l.b16 %v1388
    %v1402 = vunpack.c.l.b16 %v1389
    %v1403 = vunpack.c.l.b16 %v1390
    %v1404 = vpack.c.b16 %v1401, %v1400
    %v1405 = vpack.c.b16 %v1403, %v1402
    %1408 = vmatpush.bf16.msra.mxu0 0
    %1409 = vmatpush.bf16.msra.mxu0 0
    %1410 = vmatpush.bf16.msra.mxu0 0
    %1411 = vmatpush.bf16.msra.mxu0 0
    %1412 = vmatpush.bf16.msra.mxu0 0
    %1413 = vmatpush.bf16.msra.mxu0 0
    %1414 = vmatpush.bf16.msra.mxu0 %v1405
    %1415 = vmatpush.bf16.msra.mxu0 %v1404
    %1416 = vmatmul.bf16.gmra.mxu0 %v1334
    %v1417 = vpop.f32.mrf.mxu0
    %v1418 = vadd.f32 %v1394, %v1417
    %v1419 = vpop.f32.mrf.mxu0
    %v1420 = vadd.f32 %v1394, %v1419
    %1421 = vdwg.mxu0
    %v1423 = vsel %vm170, %v1346, 0
    %v1426 = vsel %vm170, %v1382, 0
    %1428 = vmatpush.xpose.msra.mxu0 0.0
    %1429 = vmatpush.xpose.msra.mxu0 0.0
    %1430 = vmatpush.xpose.msra.mxu0 0.0
    %1431 = vmatpush.xpose.msra.mxu0 0.0
    %1432 = vmatpush.xpose.msra.mxu0 0.0
    %1433 = vmatpush.xpose.msra.mxu0 0.0
    %1434 = vmatpush.xpose.msra.mxu0 0.0
    %1435 = vmatpush.xpose.msra.mxu0 0.0
    %1436 = vmatpush.xpose.msra.mxu0 0.0
    %1437 = vmatpush.xpose.msra.mxu0 0.0
    %1438 = vmatpush.xpose.msra.mxu0 0.0
    %1439 = vmatpush.xpose.msra.mxu0 0.0
    %1440 = vmatpush.xpose.msra.mxu0 0.0
    %1441 = vmatpush.xpose.msra.mxu0 0.0
    %1442 = vmatpush.xpose.msra.mxu0 0.0
    %1443 = vmatpush.xpose.msra.mxu0 %v1426
    %1444 = vmatmul.f32.gmra.mxu0 %v1423
    %v1445 = vpop.f32.mrf.mxu0
    %v1446 = vadd.f32 %v48, %v1445
    %1447 = vdwg.mxu0
    %v1449 = vsel %vm170, %v1348, 0
    %v1452 = vsel %vm170, %v1384, 0
    %1454 = vmatpush.xpose.msra.mxu0 0.0
    %1455 = vmatpush.xpose.msra.mxu0 0.0
    %1456 = vmatpush.xpose.msra.mxu0 0.0
    %1457 = vmatpush.xpose.msra.mxu0 0.0
    %1458 = vmatpush.xpose.msra.mxu0 0.0
    %1459 = vmatpush.xpose.msra.mxu0 0.0
    %1460 = vmatpush.xpose.msra.mxu0 0.0
    %1461 = vmatpush.xpose.msra.mxu0 0.0
    %1462 = vmatpush.xpose.msra.mxu0 0.0
    %1463 = vmatpush.xpose.msra.mxu0 0.0
    %1464 = vmatpush.xpose.msra.mxu0 0.0
    %1465 = vmatpush.xpose.msra.mxu0 0.0
    %1466 = vmatpush.xpose.msra.mxu0 0.0
    %1467 = vmatpush.xpose.msra.mxu0 0.0
    %1468 = vmatpush.xpose.msra.mxu0 0.0
    %1469 = vmatpush.xpose.msra.mxu0 %v1452
    %1470 = vmatmul.f32.gmra.mxu0 %v1449
    %v1471 = vpop.f32.mrf.mxu0
    %v1472 = vadd.f32 %v49, %v1471
    %1473 = vdwg.mxu0
    %v1474 = vsel %vm170, %v1446, -inf
    %1475 = vmax.xlane.f32.xlu0 %v1474
    %v1476 = vpop.xlane.xlu0 %1475
    %v1477 = vsel %vm170, %v1472, -inf
    %1478 = vmax.xlane.f32.xlu0 %v1477
    %v1479 = vpop.xlane.xlu0 %1478
    %v1480 = vsub.f32 %v1446, %v1476
    %v1481 = vsub.f32 %v1472, %v1479
    %v1482 = vmul.f32 %v1480, 1.442695
    %v1483 = vpow.pop %v1482
    %v1484 = vmul.f32 %v1481, 1.442695
    %v1485 = vpow.pop %v1484
    %v1486 = vsel %vm170, %v1483, 0.0
    %1487 = vadd.xlane.f32.xlu0 %v1486
    %v1488 = vpop.xlane.xlu0 %1487
    %v1489 = vsel %vm170, %v1485, 0.0
    %1490 = vadd.xlane.f32.xlu0 %v1489
    %v1491 = vpop.xlane.xlu0 %1490
    %v1492 = vrcp.pop %v1488
    %v1493 = vrcp.pop %v1491
    %v1494 = vmul.f32 %v1483, %v1492
    %v1495 = vmul.f32 %v1485, %v1493
    %v1497 = vsel %vm170, %v1494, 0
    %1499 = vmatpush.msra.mxu0 0.0
    %1500 = vmatpush.msra.mxu0 0.0
    %1501 = vmatpush.msra.mxu0 0.0
    %1502 = vmatpush.msra.mxu0 0.0
    %1503 = vmatpush.msra.mxu0 0.0
    %1504 = vmatpush.msra.mxu0 0.0
    %1505 = vmatpush.msra.mxu0 0.0
    %1506 = vmatpush.msra.mxu0 0.0
    %1507 = vmatpush.msra.mxu0 0.0
    %1508 = vmatpush.msra.mxu0 0.0
    %1509 = vmatpush.msra.mxu0 0.0
    %1510 = vmatpush.msra.mxu0 0.0
    %1511 = vmatpush.msra.mxu0 0.0
    %1512 = vmatpush.msra.mxu0 0.0
    %1513 = vmatpush.msra.mxu0 0.0
    %1514 = vmatpush.msra.mxu0 %v1418
    %1515 = vmatmul.f32.gmra.mxu0 %v1497
    %v1516 = vpop.f32.mrf.mxu0
    %v1517 = vadd.f32 0.0, %v1516
    %1518 = vdwg.mxu0
    %v1520 = vsel %vm170, %v1495, 0
    %1522 = vmatpush.msra.mxu0 0.0
    %1523 = vmatpush.msra.mxu0 0.0
    %1524 = vmatpush.msra.mxu0 0.0
    %1525 = vmatpush.msra.mxu0 0.0
    %1526 = vmatpush.msra.mxu0 0.0
    %1527 = vmatpush.msra.mxu0 0.0
    %1528 = vmatpush.msra.mxu0 0.0
    %1529 = vmatpush.msra.mxu0 0.0
    %1530 = vmatpush.msra.mxu0 0.0
    %1531 = vmatpush.msra.mxu0 0.0
    %1532 = vmatpush.msra.mxu0 0.0
    %1533 = vmatpush.msra.mxu0 0.0
    %1534 = vmatpush.msra.mxu0 0.0
    %1535 = vmatpush.msra.mxu0 0.0
    %1536 = vmatpush.msra.mxu0 0.0
    %1537 = vmatpush.msra.mxu0 %v1420
    %1538 = vmatmul.f32.gmra.mxu0 %v1520
    %v1539 = vpop.f32.mrf.mxu0
    %v1540 = vadd.f32 0.0, %v1539
    %1541 = vdwg.mxu0
    %v1542 = vpack.c.bf16 %v1540, %v1517
    %s1543 = scalar_lea.vmem %s5, 16
    %v1544 = vld [vmem:[%s1543] sm:$0xf]
    %s1545 = scalar_lea.vmem %s3, 208
    %v1546 = vld [vmem:[%s1545] sm:$0xf]
    %v1547 = vld [vmem:[%s1545 + $0x4] sm:$0xf]
    %v1548 = vld [vmem:[%s1545 + $0x8] sm:$0xf]
    %v1549 = vld [vmem:[%s1545 + $0xc] sm:$0xf]
    %s1550 = scalar_lea.vmem %s4, 13
    %v1551 = vld [vmem:[%s1550] sm:$0x1]
    %v1553 = vperm.slane %v1551, 0
    %v1559 = vunpack.c.l.b16 %v1546
    %v1560 = vunpack.c.l.b16 %v1547
    %v1561 = vunpack.c.l.b16 %v1548
    %v1562 = vunpack.c.l.b16 %v1549
    %v1563 = vpack.c.b16 %v1560, %v1559
    %v1564 = vpack.c.b16 %v1562, %v1561
    %1567 = vmatpush.bf16.msra.mxu0 0
    %1568 = vmatpush.bf16.msra.mxu0 0
    %1569 = vmatpush.bf16.msra.mxu0 0
    %1570 = vmatpush.bf16.msra.mxu0 0
    %1571 = vmatpush.bf16.msra.mxu0 0
    %1572 = vmatpush.bf16.msra.mxu0 0
    %1573 = vmatpush.bf16.msra.mxu0 %v1564
    %1574 = vmatpush.bf16.msra.mxu0 %v1563
    %1575 = vmatmul.bf16.gmra.mxu0 %v1334
    %v1576 = vpop.f32.mrf.mxu0
    %v1577 = vadd.f32 %v1553, %v1576
    %v1578 = vpop.f32.mrf.mxu0
    %v1579 = vadd.f32 %v1553, %v1578
    %1580 = vdwg.mxu0
    %s1581 = scalar_lea.vmem %s3, 272
    %v1582 = vld [vmem:[%s1581] sm:$0xf]
    %v1583 = vld [vmem:[%s1581 + $0x4] sm:$0xf]
    %v1584 = vld [vmem:[%s1581 + $0x8] sm:$0xf]
    %v1585 = vld [vmem:[%s1581 + $0xc] sm:$0xf]
    %s1586 = scalar_lea.vmem %s4, 17
    %v1587 = vld [vmem:[%s1586] sm:$0x1]
    %v1589 = vperm.slane %v1587, 0
    %v1595 = vunpack.c.l.b16 %v1582
    %v1596 = vunpack.c.l.b16 %v1583
    %v1597 = vunpack.c.l.b16 %v1584
    %v1598 = vunpack.c.l.b16 %v1585
    %v1599 = vpack.c.b16 %v1596, %v1595
    %v1600 = vpack.c.b16 %v1598, %v1597
    %1603 = vmatpush.bf16.msra.mxu0 0
    %1604 = vmatpush.bf16.msra.mxu0 0
    %1605 = vmatpush.bf16.msra.mxu0 0
    %1606 = vmatpush.bf16.msra.mxu0 0
    %1607 = vmatpush.bf16.msra.mxu0 0
    %1608 = vmatpush.bf16.msra.mxu0 0
    %1609 = vmatpush.bf16.msra.mxu0 %v1600
    %1610 = vmatpush.bf16.msra.mxu0 %v1599
    %1611 = vmatmul.bf16.gmra.mxu0 %v1334
    %v1612 = vpop.f32.mrf.mxu0
    %v1613 = vadd.f32 %v1589, %v1612
    %v1614 = vpop.f32.mrf.mxu0
    %v1615 = vadd.f32 %v1589, %v1614
    %1616 = vdwg.mxu0
    %s1617 = scalar_lea.vmem %s3, 336
    %v1618 = vld [vmem:[%s1617] sm:$0xf]
    %v1619 = vld [vmem:[%s1617 + $0x4] sm:$0xf]
    %v1620 = vld [vmem:[%s1617 + $0x8] sm:$0xf]
    %v1621 = vld [vmem:[%s1617 + $0xc] sm:$0xf]
    %s1622 = scalar_lea.vmem %s4, 21
    %v1623 = vld [vmem:[%s1622] sm:$0x1]
    %v1625 = vperm.slane %v1623, 0
    %v1631 = vunpack.c.l.b16 %v1618
    %v1632 = vunpack.c.l.b16 %v1619
    %v1633 = vunpack.c.l.b16 %v1620
    %v1634 = vunpack.c.l.b16 %v1621
    %v1635 = vpack.c.b16 %v1632, %v1631
    %v1636 = vpack.c.b16 %v1634, %v1633
    %1639 = vmatpush.bf16.msra.mxu0 0
    %1640 = vmatpush.bf16.msra.mxu0 0
    %1641 = vmatpush.bf16.msra.mxu0 0
    %1642 = vmatpush.bf16.msra.mxu0 0
    %1643 = vmatpush.bf16.msra.mxu0 0
    %1644 = vmatpush.bf16.msra.mxu0 0
    %1645 = vmatpush.bf16.msra.mxu0 %v1636
    %1646 = vmatpush.bf16.msra.mxu0 %v1635
    %1647 = vmatmul.bf16.gmra.mxu0 %v1334
    %v1648 = vpop.f32.mrf.mxu0
    %v1649 = vadd.f32 %v1625, %v1648
    %v1650 = vpop.f32.mrf.mxu0
    %v1651 = vadd.f32 %v1625, %v1650
    %1652 = vdwg.mxu0
    %v1654 = vsel %vm170, %v1577, 0
    %v1657 = vsel %vm170, %v1613, 0
    %1659 = vmatpush.xpose.msra.mxu0 0.0
    %1660 = vmatpush.xpose.msra.mxu0 0.0
    %1661 = vmatpush.xpose.msra.mxu0 0.0
    %1662 = vmatpush.xpose.msra.mxu0 0.0
    %1663 = vmatpush.xpose.msra.mxu0 0.0
    %1664 = vmatpush.xpose.msra.mxu0 0.0
    %1665 = vmatpush.xpose.msra.mxu0 0.0
    %1666 = vmatpush.xpose.msra.mxu0 0.0
    %1667 = vmatpush.xpose.msra.mxu0 0.0
    %1668 = vmatpush.xpose.msra.mxu0 0.0
    %1669 = vmatpush.xpose.msra.mxu0 0.0
    %1670 = vmatpush.xpose.msra.mxu0 0.0
    %1671 = vmatpush.xpose.msra.mxu0 0.0
    %1672 = vmatpush.xpose.msra.mxu0 0.0
    %1673 = vmatpush.xpose.msra.mxu0 0.0
    %1674 = vmatpush.xpose.msra.mxu0 %v1657
    %1675 = vmatmul.f32.gmra.mxu0 %v1654
    %v1676 = vpop.f32.mrf.mxu0
    %v1677 = vadd.f32 %v48, %v1676
    %1678 = vdwg.mxu0
    %v1680 = vsel %vm170, %v1579, 0
    %v1683 = vsel %vm170, %v1615, 0
    %1685 = vmatpush.xpose.msra.mxu0 0.0
    %1686 = vmatpush.xpose.msra.mxu0 0.0
    %1687 = vmatpush.xpose.msra.mxu0 0.0
    %1688 = vmatpush.xpose.msra.mxu0 0.0
    %1689 = vmatpush.xpose.msra.mxu0 0.0
    %1690 = vmatpush.xpose.msra.mxu0 0.0
    %1691 = vmatpush.xpose.msra.mxu0 0.0
    %1692 = vmatpush.xpose.msra.mxu0 0.0
    %1693 = vmatpush.xpose.msra.mxu0 0.0
    %1694 = vmatpush.xpose.msra.mxu0 0.0
    %1695 = vmatpush.xpose.msra.mxu0 0.0
    %1696 = vmatpush.xpose.msra.mxu0 0.0
    %1697 = vmatpush.xpose.msra.mxu0 0.0
    %1698 = vmatpush.xpose.msra.mxu0 0.0
    %1699 = vmatpush.xpose.msra.mxu0 0.0
    %1700 = vmatpush.xpose.msra.mxu0 %v1683
    %1701 = vmatmul.f32.gmra.mxu0 %v1680
    %v1702 = vpop.f32.mrf.mxu0
    %v1703 = vadd.f32 %v49, %v1702
    %1704 = vdwg.mxu0
    %v1705 = vsel %vm170, %v1677, -inf
    %1706 = vmax.xlane.f32.xlu0 %v1705
    %v1707 = vpop.xlane.xlu0 %1706
    %v1708 = vsel %vm170, %v1703, -inf
    %1709 = vmax.xlane.f32.xlu0 %v1708
    %v1710 = vpop.xlane.xlu0 %1709
    %v1711 = vsub.f32 %v1677, %v1707
    %v1712 = vsub.f32 %v1703, %v1710
    %v1713 = vmul.f32 %v1711, 1.442695
    %v1714 = vpow.pop %v1713
    %v1715 = vmul.f32 %v1712, 1.442695
    %v1716 = vpow.pop %v1715
    %v1717 = vsel %vm170, %v1714, 0.0
    %1718 = vadd.xlane.f32.xlu0 %v1717
    %v1719 = vpop.xlane.xlu0 %1718
    %v1720 = vsel %vm170, %v1716, 0.0
    %1721 = vadd.xlane.f32.xlu0 %v1720
    %v1722 = vpop.xlane.xlu0 %1721
    %v1723 = vrcp.pop %v1719
    %v1724 = vrcp.pop %v1722
    %v1725 = vmul.f32 %v1714, %v1723
    %v1726 = vmul.f32 %v1716, %v1724
    %v1728 = vsel %vm170, %v1725, 0
    %1730 = vmatpush.msra.mxu0 0.0
    %1731 = vmatpush.msra.mxu0 0.0
    %1732 = vmatpush.msra.mxu0 0.0
    %1733 = vmatpush.msra.mxu0 0.0
    %1734 = vmatpush.msra.mxu0 0.0
    %1735 = vmatpush.msra.mxu0 0.0
    %1736 = vmatpush.msra.mxu0 0.0
    %1737 = vmatpush.msra.mxu0 0.0
    %1738 = vmatpush.msra.mxu0 0.0
    %1739 = vmatpush.msra.mxu0 0.0
    %1740 = vmatpush.msra.mxu0 0.0
    %1741 = vmatpush.msra.mxu0 0.0
    %1742 = vmatpush.msra.mxu0 0.0
    %1743 = vmatpush.msra.mxu0 0.0
    %1744 = vmatpush.msra.mxu0 0.0
    %1745 = vmatpush.msra.mxu0 %v1649
    %1746 = vmatmul.f32.gmra.mxu0 %v1728
    %v1747 = vpop.f32.mrf.mxu0
    %v1748 = vadd.f32 0.0, %v1747
    %1749 = vdwg.mxu0
    %v1751 = vsel %vm170, %v1726, 0
    %1753 = vmatpush.msra.mxu0 0.0
    %1754 = vmatpush.msra.mxu0 0.0
    %1755 = vmatpush.msra.mxu0 0.0
    %1756 = vmatpush.msra.mxu0 0.0
    %1757 = vmatpush.msra.mxu0 0.0
    %1758 = vmatpush.msra.mxu0 0.0
    %1759 = vmatpush.msra.mxu0 0.0
    %1760 = vmatpush.msra.mxu0 0.0
    %1761 = vmatpush.msra.mxu0 0.0
    %1762 = vmatpush.msra.mxu0 0.0
    %1763 = vmatpush.msra.mxu0 0.0
    %1764 = vmatpush.msra.mxu0 0.0
    %1765 = vmatpush.msra.mxu0 0.0
    %1766 = vmatpush.msra.mxu0 0.0
    %1767 = vmatpush.msra.mxu0 0.0
    %1768 = vmatpush.msra.mxu0 %v1651
    %1769 = vmatmul.f32.gmra.mxu0 %v1751
    %v1770 = vpop.f32.mrf.mxu0
    %v1771 = vadd.f32 0.0, %v1770
    %1772 = vdwg.mxu0
    %v1773 = vpack.c.bf16 %v1771, %v1748
    %s1774 = scalar_lea.vmem %s5, 20
    %v1775 = vld [vmem:[%s1774] sm:$0xf]
    %v1777 = vsel %vm170, %v1773, 0
    %v1780 = vsel %vm527, %v1775, 0
    %1782 = vmatpush.bf16.msra.mxu0 0
    %1783 = vmatpush.bf16.msra.mxu0 0
    %1784 = vmatpush.bf16.msra.mxu0 0
    %1785 = vmatpush.bf16.msra.mxu0 0
    %1786 = vmatpush.bf16.msra.mxu0 0
    %1787 = vmatpush.bf16.msra.mxu0 0
    %1788 = vmatpush.bf16.msra.mxu0 0
    %1789 = vmatpush.bf16.msra.mxu0 %v1780
    %1790 = vmatmul.bf16.gmra.mxu0 %v1777
    %v1791 = vpop.f32.mrf.mxu0
    %v1792 = vadd.f32 0.0, %v1791
    %v1793 = vpop.f32.mrf.mxu0
    %v1794 = vadd.f32 0.0, %v1793
    %1795 = vdwg.mxu0
    %v1797 = vsel %vm170, %v1542, 0
    %v1800 = vsel %vm527, %v1544, 0
    %1802 = vmatpush.bf16.msra.mxu0 0
    %1803 = vmatpush.bf16.msra.mxu0 0
    %1804 = vmatpush.bf16.msra.mxu0 0
    %1805 = vmatpush.bf16.msra.mxu0 0
    %1806 = vmatpush.bf16.msra.mxu0 0
    %1807 = vmatpush.bf16.msra.mxu0 0
    %1808 = vmatpush.bf16.msra.mxu0 0
    %1809 = vmatpush.bf16.msra.mxu0 %v1800
    %1810 = vmatmul.bf16.gmra.mxu0 %v1797
    %v1811 = vpop.f32.mrf.mxu0
    %v1812 = vadd.f32 %v1792, %v1811
    %v1813 = vpop.f32.mrf.mxu0
    %v1814 = vadd.f32 %v1794, %v1813
    %1815 = vdwg.mxu0
    %s1816 = scalar_lea.vmem %s3, 224
    %v1817 = vld [vmem:[%s1816] sm:$0xf]
    %v1818 = vld [vmem:[%s1816 + $0x4] sm:$0xf]
    %v1819 = vld [vmem:[%s1816 + $0x8] sm:$0xf]
    %v1820 = vld [vmem:[%s1816 + $0xc] sm:$0xf]
    %s1821 = scalar_lea.vmem %s4, 14
    %v1822 = vld [vmem:[%s1821] sm:$0x1]
    %v1824 = vperm.slane %v1822, 0
    %v1830 = vunpack.c.l.b16 %v1817
    %v1831 = vunpack.c.l.b16 %v1818
    %v1832 = vunpack.c.l.b16 %v1819
    %v1833 = vunpack.c.l.b16 %v1820
    %v1834 = vpack.c.b16 %v1831, %v1830
    %v1835 = vpack.c.b16 %v1833, %v1832
    %1838 = vmatpush.bf16.msra.mxu0 0
    %1839 = vmatpush.bf16.msra.mxu0 0
    %1840 = vmatpush.bf16.msra.mxu0 0
    %1841 = vmatpush.bf16.msra.mxu0 0
    %1842 = vmatpush.bf16.msra.mxu0 0
    %1843 = vmatpush.bf16.msra.mxu0 0
    %1844 = vmatpush.bf16.msra.mxu0 %v1835
    %1845 = vmatpush.bf16.msra.mxu0 %v1834
    %1846 = vmatmul.bf16.gmra.mxu0 %v1334
    %v1847 = vpop.f32.mrf.mxu0
    %v1848 = vadd.f32 %v1824, %v1847
    %v1849 = vpop.f32.mrf.mxu0
    %v1850 = vadd.f32 %v1824, %v1849
    %1851 = vdwg.mxu0
    %s1852 = scalar_lea.vmem %s3, 288
    %v1853 = vld [vmem:[%s1852] sm:$0xf]
    %v1854 = vld [vmem:[%s1852 + $0x4] sm:$0xf]
    %v1855 = vld [vmem:[%s1852 + $0x8] sm:$0xf]
    %v1856 = vld [vmem:[%s1852 + $0xc] sm:$0xf]
    %s1857 = scalar_lea.vmem %s4, 18
    %v1858 = vld [vmem:[%s1857] sm:$0x1]
    %v1860 = vperm.slane %v1858, 0
    %v1866 = vunpack.c.l.b16 %v1853
    %v1867 = vunpack.c.l.b16 %v1854
    %v1868 = vunpack.c.l.b16 %v1855
    %v1869 = vunpack.c.l.b16 %v1856
    %v1870 = vpack.c.b16 %v1867, %v1866
    %v1871 = vpack.c.b16 %v1869, %v1868
    %1874 = vmatpush.bf16.msra.mxu0 0
    %1875 = vmatpush.bf16.msra.mxu0 0
    %1876 = vmatpush.bf16.msra.mxu0 0
    %1877 = vmatpush.bf16.msra.mxu0 0
    %1878 = vmatpush.bf16.msra.mxu0 0
    %1879 = vmatpush.bf16.msra.mxu0 0
    %1880 = vmatpush.bf16.msra.mxu0 %v1871
    %1881 = vmatpush.bf16.msra.mxu0 %v1870
    %1882 = vmatmul.bf16.gmra.mxu0 %v1334
    %v1883 = vpop.f32.mrf.mxu0
    %v1884 = vadd.f32 %v1860, %v1883
    %v1885 = vpop.f32.mrf.mxu0
    %v1886 = vadd.f32 %v1860, %v1885
    %1887 = vdwg.mxu0
    %s1888 = scalar_lea.vmem %s3, 352
    %v1889 = vld [vmem:[%s1888] sm:$0xf]
    %v1890 = vld [vmem:[%s1888 + $0x4] sm:$0xf]
    %v1891 = vld [vmem:[%s1888 + $0x8] sm:$0xf]
    %v1892 = vld [vmem:[%s1888 + $0xc] sm:$0xf]
    %s1893 = scalar_lea.vmem %s4, 22
    %v1894 = vld [vmem:[%s1893] sm:$0x1]
    %v1896 = vperm.slane %v1894, 0
    %v1902 = vunpack.c.l.b16 %v1889
    %v1903 = vunpack.c.l.b16 %v1890
    %v1904 = vunpack.c.l.b16 %v1891
    %v1905 = vunpack.c.l.b16 %v1892
    %v1906 = vpack.c.b16 %v1903, %v1902
    %v1907 = vpack.c.b16 %v1905, %v1904
    %1910 = vmatpush.bf16.msra.mxu0 0
    %1911 = vmatpush.bf16.msra.mxu0 0
    %1912 = vmatpush.bf16.msra.mxu0 0
    %1913 = vmatpush.bf16.msra.mxu0 0
    %1914 = vmatpush.bf16.msra.mxu0 0
    %1915 = vmatpush.bf16.msra.mxu0 0
    %1916 = vmatpush.bf16.msra.mxu0 %v1907
    %1917 = vmatpush.bf16.msra.mxu0 %v1906
    %1918 = vmatmul.bf16.gmra.mxu0 %v1334
    %v1919 = vpop.f32.mrf.mxu0
    %v1920 = vadd.f32 %v1896, %v1919
    %v1921 = vpop.f32.mrf.mxu0
    %v1922 = vadd.f32 %v1896, %v1921
    %1923 = vdwg.mxu0
    %v1925 = vsel %vm170, %v1848, 0
    %v1928 = vsel %vm170, %v1884, 0
    %1930 = vmatpush.xpose.msra.mxu0 0.0
    %1931 = vmatpush.xpose.msra.mxu0 0.0
    %1932 = vmatpush.xpose.msra.mxu0 0.0
    %1933 = vmatpush.xpose.msra.mxu0 0.0
    %1934 = vmatpush.xpose.msra.mxu0 0.0
    %1935 = vmatpush.xpose.msra.mxu0 0.0
    %1936 = vmatpush.xpose.msra.mxu0 0.0
    %1937 = vmatpush.xpose.msra.mxu0 0.0
    %1938 = vmatpush.xpose.msra.mxu0 0.0
    %1939 = vmatpush.xpose.msra.mxu0 0.0
    %1940 = vmatpush.xpose.msra.mxu0 0.0
    %1941 = vmatpush.xpose.msra.mxu0 0.0
    %1942 = vmatpush.xpose.msra.mxu0 0.0
    %1943 = vmatpush.xpose.msra.mxu0 0.0
    %1944 = vmatpush.xpose.msra.mxu0 0.0
    %1945 = vmatpush.xpose.msra.mxu0 %v1928
    %1946 = vmatmul.f32.gmra.mxu0 %v1925
    %v1947 = vpop.f32.mrf.mxu0
    %v1948 = vadd.f32 %v48, %v1947
    %1949 = vdwg.mxu0
    %v1951 = vsel %vm170, %v1850, 0
    %v1954 = vsel %vm170, %v1886, 0
    %1956 = vmatpush.xpose.msra.mxu0 0.0
    %1957 = vmatpush.xpose.msra.mxu0 0.0
    %1958 = vmatpush.xpose.msra.mxu0 0.0
    %1959 = vmatpush.xpose.msra.mxu0 0.0
    %1960 = vmatpush.xpose.msra.mxu0 0.0
    %1961 = vmatpush.xpose.msra.mxu0 0.0
    %1962 = vmatpush.xpose.msra.mxu0 0.0
    %1963 = vmatpush.xpose.msra.mxu0 0.0
    %1964 = vmatpush.xpose.msra.mxu0 0.0
    %1965 = vmatpush.xpose.msra.mxu0 0.0
    %1966 = vmatpush.xpose.msra.mxu0 0.0
    %1967 = vmatpush.xpose.msra.mxu0 0.0
    %1968 = vmatpush.xpose.msra.mxu0 0.0
    %1969 = vmatpush.xpose.msra.mxu0 0.0
    %1970 = vmatpush.xpose.msra.mxu0 0.0
    %1971 = vmatpush.xpose.msra.mxu0 %v1954
    %1972 = vmatmul.f32.gmra.mxu0 %v1951
    %v1973 = vpop.f32.mrf.mxu0
    %v1974 = vadd.f32 %v49, %v1973
    %1975 = vdwg.mxu0
    %v1976 = vsel %vm170, %v1948, -inf
    %1977 = vmax.xlane.f32.xlu0 %v1976
    %v1978 = vpop.xlane.xlu0 %1977
    %v1979 = vsel %vm170, %v1974, -inf
    %1980 = vmax.xlane.f32.xlu0 %v1979
    %v1981 = vpop.xlane.xlu0 %1980
    %v1982 = vsub.f32 %v1948, %v1978
    %v1983 = vsub.f32 %v1974, %v1981
    %v1984 = vmul.f32 %v1982, 1.442695
    %v1985 = vpow.pop %v1984
    %v1986 = vmul.f32 %v1983, 1.442695
    %v1987 = vpow.pop %v1986
    %v1988 = vsel %vm170, %v1985, 0.0
    %1989 = vadd.xlane.f32.xlu0 %v1988
    %v1990 = vpop.xlane.xlu0 %1989
    %v1991 = vsel %vm170, %v1987, 0.0
    %1992 = vadd.xlane.f32.xlu0 %v1991
    %v1993 = vpop.xlane.xlu0 %1992
    %v1994 = vrcp.pop %v1990
    %v1995 = vrcp.pop %v1993
    %v1996 = vmul.f32 %v1985, %v1994
    %v1997 = vmul.f32 %v1987, %v1995
    %v1999 = vsel %vm170, %v1996, 0
    %2001 = vmatpush.msra.mxu0 0.0
    %2002 = vmatpush.msra.mxu0 0.0
    %2003 = vmatpush.msra.mxu0 0.0
    %2004 = vmatpush.msra.mxu0 0.0
    %2005 = vmatpush.msra.mxu0 0.0
    %2006 = vmatpush.msra.mxu0 0.0
    %2007 = vmatpush.msra.mxu0 0.0
    %2008 = vmatpush.msra.mxu0 0.0
    %2009 = vmatpush.msra.mxu0 0.0
    %2010 = vmatpush.msra.mxu0 0.0
    %2011 = vmatpush.msra.mxu0 0.0
    %2012 = vmatpush.msra.mxu0 0.0
    %2013 = vmatpush.msra.mxu0 0.0
    %2014 = vmatpush.msra.mxu0 0.0
    %2015 = vmatpush.msra.mxu0 0.0
    %2016 = vmatpush.msra.mxu0 %v1920
    %2017 = vmatmul.f32.gmra.mxu0 %v1999
    %v2018 = vpop.f32.mrf.mxu0
    %v2019 = vadd.f32 0.0, %v2018
    %2020 = vdwg.mxu0
    %v2022 = vsel %vm170, %v1997, 0
    %2024 = vmatpush.msra.mxu0 0.0
    %2025 = vmatpush.msra.mxu0 0.0
    %2026 = vmatpush.msra.mxu0 0.0
    %2027 = vmatpush.msra.mxu0 0.0
    %2028 = vmatpush.msra.mxu0 0.0
    %2029 = vmatpush.msra.mxu0 0.0
    %2030 = vmatpush.msra.mxu0 0.0
    %2031 = vmatpush.msra.mxu0 0.0
    %2032 = vmatpush.msra.mxu0 0.0
    %2033 = vmatpush.msra.mxu0 0.0
    %2034 = vmatpush.msra.mxu0 0.0
    %2035 = vmatpush.msra.mxu0 0.0
    %2036 = vmatpush.msra.mxu0 0.0
    %2037 = vmatpush.msra.mxu0 0.0
    %2038 = vmatpush.msra.mxu0 0.0
    %2039 = vmatpush.msra.mxu0 %v1922
    %2040 = vmatmul.f32.gmra.mxu0 %v2022
    %v2041 = vpop.f32.mrf.mxu0
    %v2042 = vadd.f32 0.0, %v2041
    %2043 = vdwg.mxu0
    %v2044 = vpack.c.bf16 %v2042, %v2019
    %s2045 = scalar_lea.vmem %s5, 24
    %v2046 = vld [vmem:[%s2045] sm:$0xf]
    %v2048 = vsel %vm170, %v2044, 0
    %v2051 = vsel %vm527, %v2046, 0
    %2053 = vmatpush.bf16.msra.mxu0 0
    %2054 = vmatpush.bf16.msra.mxu0 0
    %2055 = vmatpush.bf16.msra.mxu0 0
    %2056 = vmatpush.bf16.msra.mxu0 0
    %2057 = vmatpush.bf16.msra.mxu0 0
    %2058 = vmatpush.bf16.msra.mxu0 0
    %2059 = vmatpush.bf16.msra.mxu0 0
    %2060 = vmatpush.bf16.msra.mxu0 %v2051
    %2061 = vmatmul.bf16.gmra.mxu0 %v2048
    %v2062 = vpop.f32.mrf.mxu0
    %v2063 = vadd.f32 0.0, %v2062
    %v2064 = vpop.f32.mrf.mxu0
    %v2065 = vadd.f32 0.0, %v2064
    %2066 = vdwg.mxu0
    %v2067 = vadd.f32 %v1812, %v2063
    %v2068 = vadd.f32 %v1814, %v2065
    %s2069 = scalar_lea.vmem %s3, 240
    %v2070 = vld [vmem:[%s2069] sm:$0xf]
    %v2071 = vld [vmem:[%s2069 + $0x4] sm:$0xf]
    %v2072 = vld [vmem:[%s2069 + $0x8] sm:$0xf]
    %v2073 = vld [vmem:[%s2069 + $0xc] sm:$0xf]
    %s2074 = scalar_lea.vmem %s4, 15
    %v2075 = vld [vmem:[%s2074] sm:$0x1]
    %v2077 = vperm.slane %v2075, 0
    %v2083 = vunpack.c.l.b16 %v2070
    %v2084 = vunpack.c.l.b16 %v2071
    %v2085 = vunpack.c.l.b16 %v2072
    %v2086 = vunpack.c.l.b16 %v2073
    %v2087 = vpack.c.b16 %v2084, %v2083
    %v2088 = vpack.c.b16 %v2086, %v2085
    %2091 = vmatpush.bf16.msra.mxu0 0
    %2092 = vmatpush.bf16.msra.mxu0 0
    %2093 = vmatpush.bf16.msra.mxu0 0
    %2094 = vmatpush.bf16.msra.mxu0 0
    %2095 = vmatpush.bf16.msra.mxu0 0
    %2096 = vmatpush.bf16.msra.mxu0 0
    %2097 = vmatpush.bf16.msra.mxu0 %v2088
    %2098 = vmatpush.bf16.msra.mxu0 %v2087
    %2099 = vmatmul.bf16.gmra.mxu0 %v1334
    %v2100 = vpop.f32.mrf.mxu0
    %v2101 = vadd.f32 %v2077, %v2100
    %v2102 = vpop.f32.mrf.mxu0
    %v2103 = vadd.f32 %v2077, %v2102
    %2104 = vdwg.mxu0
    %s2105 = scalar_lea.vmem %s3, 304
    %v2106 = vld [vmem:[%s2105] sm:$0xf]
    %v2107 = vld [vmem:[%s2105 + $0x4] sm:$0xf]
    %v2108 = vld [vmem:[%s2105 + $0x8] sm:$0xf]
    %v2109 = vld [vmem:[%s2105 + $0xc] sm:$0xf]
    %s2110 = scalar_lea.vmem %s4, 19
    %v2111 = vld [vmem:[%s2110] sm:$0x1]
    %v2113 = vperm.slane %v2111, 0
    %v2119 = vunpack.c.l.b16 %v2106
    %v2120 = vunpack.c.l.b16 %v2107
    %v2121 = vunpack.c.l.b16 %v2108
    %v2122 = vunpack.c.l.b16 %v2109
    %v2123 = vpack.c.b16 %v2120, %v2119
    %v2124 = vpack.c.b16 %v2122, %v2121
    %2127 = vmatpush.bf16.msra.mxu0 0
    %2128 = vmatpush.bf16.msra.mxu0 0
    %2129 = vmatpush.bf16.msra.mxu0 0
    %2130 = vmatpush.bf16.msra.mxu0 0
    %2131 = vmatpush.bf16.msra.mxu0 0
    %2132 = vmatpush.bf16.msra.mxu0 0
    %2133 = vmatpush.bf16.msra.mxu0 %v2124
    %2134 = vmatpush.bf16.msra.mxu0 %v2123
    %2135 = vmatmul.bf16.gmra.mxu0 %v1334
    %v2136 = vpop.f32.mrf.mxu0
    %v2137 = vadd.f32 %v2113, %v2136
    %v2138 = vpop.f32.mrf.mxu0
    %v2139 = vadd.f32 %v2113, %v2138
    %2140 = vdwg.mxu0
    %s2141 = scalar_lea.vmem %s3, 368
    %v2142 = vld [vmem:[%s2141] sm:$0xf]
    %v2143 = vld [vmem:[%s2141 + $0x4] sm:$0xf]
    %v2144 = vld [vmem:[%s2141 + $0x8] sm:$0xf]
    %v2145 = vld [vmem:[%s2141 + $0xc] sm:$0xf]
    %s2146 = scalar_lea.vmem %s4, 23
    %v2147 = vld [vmem:[%s2146] sm:$0x1]
    %v2149 = vperm.slane %v2147, 0
    %v2155 = vunpack.c.l.b16 %v2142
    %v2156 = vunpack.c.l.b16 %v2143
    %v2157 = vunpack.c.l.b16 %v2144
    %v2158 = vunpack.c.l.b16 %v2145
    %v2159 = vpack.c.b16 %v2156, %v2155
    %v2160 = vpack.c.b16 %v2158, %v2157
    %2163 = vmatpush.bf16.msra.mxu0 0
    %2164 = vmatpush.bf16.msra.mxu0 0
    %2165 = vmatpush.bf16.msra.mxu0 0
    %2166 = vmatpush.bf16.msra.mxu0 0
    %2167 = vmatpush.bf16.msra.mxu0 0
    %2168 = vmatpush.bf16.msra.mxu0 0
    %2169 = vmatpush.bf16.msra.mxu0 %v2160
    %2170 = vmatpush.bf16.msra.mxu0 %v2159
    %2171 = vmatmul.bf16.gmra.mxu0 %v1334
    %v2172 = vpop.f32.mrf.mxu0
    %v2173 = vadd.f32 %v2149, %v2172
    %v2174 = vpop.f32.mrf.mxu0
    %v2175 = vadd.f32 %v2149, %v2174
    %2176 = vdwg.mxu0
    %v2178 = vsel %vm170, %v2101, 0
    %v2181 = vsel %vm170, %v2137, 0
    %2183 = vmatpush.xpose.msra.mxu0 0.0
    %2184 = vmatpush.xpose.msra.mxu0 0.0
    %2185 = vmatpush.xpose.msra.mxu0 0.0
    %2186 = vmatpush.xpose.msra.mxu0 0.0
    %2187 = vmatpush.xpose.msra.mxu0 0.0
    %2188 = vmatpush.xpose.msra.mxu0 0.0
    %2189 = vmatpush.xpose.msra.mxu0 0.0
    %2190 = vmatpush.xpose.msra.mxu0 0.0
    %2191 = vmatpush.xpose.msra.mxu0 0.0
    %2192 = vmatpush.xpose.msra.mxu0 0.0
    %2193 = vmatpush.xpose.msra.mxu0 0.0
    %2194 = vmatpush.xpose.msra.mxu0 0.0
    %2195 = vmatpush.xpose.msra.mxu0 0.0
    %2196 = vmatpush.xpose.msra.mxu0 0.0
    %2197 = vmatpush.xpose.msra.mxu0 0.0
    %2198 = vmatpush.xpose.msra.mxu0 %v2181
    %2199 = vmatmul.f32.gmra.mxu0 %v2178
    %v2200 = vpop.f32.mrf.mxu0
    %v2201 = vadd.f32 %v48, %v2200
    %2202 = vdwg.mxu0
    %v2204 = vsel %vm170, %v2103, 0
    %v2207 = vsel %vm170, %v2139, 0
    %2209 = vmatpush.xpose.msra.mxu0 0.0
    %2210 = vmatpush.xpose.msra.mxu0 0.0
    %2211 = vmatpush.xpose.msra.mxu0 0.0
    %2212 = vmatpush.xpose.msra.mxu0 0.0
    %2213 = vmatpush.xpose.msra.mxu0 0.0
    %2214 = vmatpush.xpose.msra.mxu0 0.0
    %2215 = vmatpush.xpose.msra.mxu0 0.0
    %2216 = vmatpush.xpose.msra.mxu0 0.0
    %2217 = vmatpush.xpose.msra.mxu0 0.0
    %2218 = vmatpush.xpose.msra.mxu0 0.0
    %2219 = vmatpush.xpose.msra.mxu0 0.0
    %2220 = vmatpush.xpose.msra.mxu0 0.0
    %2221 = vmatpush.xpose.msra.mxu0 0.0
    %2222 = vmatpush.xpose.msra.mxu0 0.0
    %2223 = vmatpush.xpose.msra.mxu0 0.0
    %2224 = vmatpush.xpose.msra.mxu0 %v2207
    %2225 = vmatmul.f32.gmra.mxu0 %v2204
    %v2226 = vpop.f32.mrf.mxu0
    %v2227 = vadd.f32 %v49, %v2226
    %2228 = vdwg.mxu0
    %v2229 = vsel %vm170, %v2201, -inf
    %2230 = vmax.xlane.f32.xlu0 %v2229
    %v2231 = vpop.xlane.xlu0 %2230
    %v2232 = vsel %vm170, %v2227, -inf
    %2233 = vmax.xlane.f32.xlu0 %v2232
    %v2234 = vpop.xlane.xlu0 %2233
    %v2235 = vsub.f32 %v2201, %v2231
    %v2236 = vsub.f32 %v2227, %v2234
    %v2237 = vmul.f32 %v2235, 1.442695
    %v2238 = vpow.pop %v2237
    %v2239 = vmul.f32 %v2236, 1.442695
    %v2240 = vpow.pop %v2239
    %v2241 = vsel %vm170, %v2238, 0.0
    %2242 = vadd.xlane.f32.xlu0 %v2241
    %v2243 = vpop.xlane.xlu0 %2242
    %v2244 = vsel %vm170, %v2240, 0.0
    %2245 = vadd.xlane.f32.xlu0 %v2244
    %v2246 = vpop.xlane.xlu0 %2245
    %v2247 = vrcp.pop %v2243
    %v2248 = vrcp.pop %v2246
    %v2249 = vmul.f32 %v2238, %v2247
    %v2250 = vmul.f32 %v2240, %v2248
    %v2252 = vsel %vm170, %v2249, 0
    %2254 = vmatpush.msra.mxu0 0.0
    %2255 = vmatpush.msra.mxu0 0.0
    %2256 = vmatpush.msra.mxu0 0.0
    %2257 = vmatpush.msra.mxu0 0.0
    %2258 = vmatpush.msra.mxu0 0.0
    %2259 = vmatpush.msra.mxu0 0.0
    %2260 = vmatpush.msra.mxu0 0.0
    %2261 = vmatpush.msra.mxu0 0.0
    %2262 = vmatpush.msra.mxu0 0.0
    %2263 = vmatpush.msra.mxu0 0.0
    %2264 = vmatpush.msra.mxu0 0.0
    %2265 = vmatpush.msra.mxu0 0.0
    %2266 = vmatpush.msra.mxu0 0.0
    %2267 = vmatpush.msra.mxu0 0.0
    %2268 = vmatpush.msra.mxu0 0.0
    %2269 = vmatpush.msra.mxu0 %v2173
    %2270 = vmatmul.f32.gmra.mxu0 %v2252
    %v2271 = vpop.f32.mrf.mxu0
    %v2272 = vadd.f32 0.0, %v2271
    %2273 = vdwg.mxu0
    %v2275 = vsel %vm170, %v2250, 0
    %2277 = vmatpush.msra.mxu0 0.0
    %2278 = vmatpush.msra.mxu0 0.0
    %2279 = vmatpush.msra.mxu0 0.0
    %2280 = vmatpush.msra.mxu0 0.0
    %2281 = vmatpush.msra.mxu0 0.0
    %2282 = vmatpush.msra.mxu0 0.0
    %2283 = vmatpush.msra.mxu0 0.0
    %2284 = vmatpush.msra.mxu0 0.0
    %2285 = vmatpush.msra.mxu0 0.0
    %2286 = vmatpush.msra.mxu0 0.0
    %2287 = vmatpush.msra.mxu0 0.0
    %2288 = vmatpush.msra.mxu0 0.0
    %2289 = vmatpush.msra.mxu0 0.0
    %2290 = vmatpush.msra.mxu0 0.0
    %2291 = vmatpush.msra.mxu0 0.0
    %2292 = vmatpush.msra.mxu0 %v2175
    %2293 = vmatmul.f32.gmra.mxu0 %v2275
    %v2294 = vpop.f32.mrf.mxu0
    %v2295 = vadd.f32 0.0, %v2294
    %2296 = vdwg.mxu0
    %v2297 = vpack.c.bf16 %v2295, %v2272
    %s2298 = scalar_lea.vmem %s5, 28
    %v2299 = vld [vmem:[%s2298] sm:$0xf]
    %v2301 = vsel %vm170, %v2297, 0
    %v2304 = vsel %vm527, %v2299, 0
    %2306 = vmatpush.bf16.msra.mxu0 0
    %2307 = vmatpush.bf16.msra.mxu0 0
    %2308 = vmatpush.bf16.msra.mxu0 0
    %2309 = vmatpush.bf16.msra.mxu0 0
    %2310 = vmatpush.bf16.msra.mxu0 0
    %2311 = vmatpush.bf16.msra.mxu0 0
    %2312 = vmatpush.bf16.msra.mxu0 0
    %2313 = vmatpush.bf16.msra.mxu0 %v2304
    %2314 = vmatmul.bf16.gmra.mxu0 %v2301
    %v2315 = vpop.f32.mrf.mxu0
    %v2316 = vadd.f32 0.0, %v2315
    %v2317 = vpop.f32.mrf.mxu0
    %v2318 = vadd.f32 0.0, %v2317
    %2319 = vdwg.mxu0
    %v2320 = vadd.f32 %v2067, %v2316
    %v2321 = vadd.f32 %v2068, %v2318
    %v2322 = vadd.f32 %v1300, %v2320
    %v2323 = vadd.f32 %v1301, %v2321
    %v2324 = vperm.slane %v1303, 0
    %v2325 = vadd.f32 %v2322, %v2324
    %v2326 = vadd.f32 %v2323, %v2324
    %v2327 = vsel %vm80, %v2325, 0.0
    %2328 = vadd.xlane.f32.xlu0 %v2327
    %v2329 = vpop.xlane.xlu0 %2328
    %v2330 = vsel %vm80, %v2326, 0.0
    %2331 = vadd.xlane.f32.xlu0 %v2330
    %v2332 = vpop.xlane.xlu0 %2331
    %v2333 = vmul.f32 %v2329, %v1088
    %v2334 = vmul.f32 %v2332, %v1088
    %v2335 = vmul.f32 %v2325, %v2325
    %v2336 = vmul.f32 %v2326, %v2326
    %v2337 = vsel %vm80, %v2335, 0.0
    %2338 = vadd.xlane.f32.xlu0 %v2337
    %v2339 = vpop.xlane.xlu0 %2338
    %v2340 = vsel %vm80, %v2336, 0.0
    %2341 = vadd.xlane.f32.xlu0 %v2340
    %v2342 = vpop.xlane.xlu0 %2341
    %v2343 = vmul.f32 %v2339, %v1088
    %v2344 = vmul.f32 %v2342, %v1088
    %v2345 = vmul.f32 %v2333, %v2333
    %v2346 = vmul.f32 %v2334, %v2334
    %v2347 = vsub.f32 %v2343, %v2345
    %v2348 = vsub.f32 %v2344, %v2346
    %v2349 = vmax.f32 %v2347, 0.0
    %v2350 = vmax.f32 %v2348, 0.0
    %v2351 = vsub.f32 %v2325, %v2333
    %v2352 = vsub.f32 %v2326, %v2334
    %v2353 = vadd.f32 %v2349, 1e-12
    %v2354 = vadd.f32 %v2350, 1e-12
    %v2355 = vrsqrt.pop %v2353
    %v2356 = vmul.f32 %v2355, %v2353
    %v2357 = vmul.f32 %v2356, %v2355
    %v2358 = vmul.f32 0.5, %v2357
    %v2359 = vsub.f32 1.5, %v2358
    %v2360 = vmul.f32 %v2355, %v2359
    %vm2361 = vweird.f32 %v2353
    %vm2362 = vweird.f32 %v2355
    %vm2363 = vmor %vm2361, %vm2362
    %v2364 = vsel %vm2363, %v2355, %v2360
    %v2365 = vrsqrt.pop %v2354
    %v2366 = vmul.f32 %v2365, %v2354
    %v2367 = vmul.f32 %v2366, %v2365
    %v2368 = vmul.f32 0.5, %v2367
    %v2369 = vsub.f32 1.5, %v2368
    %v2370 = vmul.f32 %v2365, %v2369
    %vm2371 = vweird.f32 %v2354
    %vm2372 = vweird.f32 %v2365
    %vm2373 = vmor %vm2371, %vm2372
    %v2374 = vsel %vm2373, %v2365, %v2370
    %v2375 = vmul.f32 %v2351, %v2364
    %v2376 = vmul.f32 %v2352, %v2374
    %v2377 = vperm.slane %v1306, 0
    %v2378 = vmul.f32 %v2375, %v2377
    %v2379 = vmul.f32 %v2376, %v2377
    %v2380 = vperm.slane %v1307, 0
    %v2381 = vadd.f32 %v2378, %v2380
    %v2382 = vadd.f32 %v2379, %v2380
    %v2383 = vpack.c.bf16 %v2382, %v2381
    %s2384 = scalar_lea.vmem %s6, 16
    %v2385 = vld [vmem:[%s2384] sm:$0xf]
    %v2386 = vld [vmem:[%s2384 + $0x4] sm:$0xf]
    %v2387 = vld [vmem:[%s2384 + $0x8] sm:$0xf]
    %v2388 = vld [vmem:[%s2384 + $0xc] sm:$0xf]
    %v2389 = vperm.slane %v1304, 0
    %v2394 = vunpack.c.l.b16 %v2385
    %v2395 = vunpack.c.l.b16 %v2386
    %v2396 = vunpack.c.l.b16 %v2387
    %v2397 = vunpack.c.l.b16 %v2388
    %v2398 = vpack.c.b16 %v2395, %v2394
    %v2399 = vpack.c.b16 %v2397, %v2396
    %v2403 = vsel %vm80, %v2383, 0
    %2405 = vmatpush.bf16.msra.mxu0 0
    %2406 = vmatpush.bf16.msra.mxu0 0
    %2407 = vmatpush.bf16.msra.mxu0 0
    %2408 = vmatpush.bf16.msra.mxu0 0
    %2409 = vmatpush.bf16.msra.mxu0 0
    %2410 = vmatpush.bf16.msra.mxu0 0
    %2411 = vmatpush.bf16.msra.mxu0 %v2399
    %2412 = vmatpush.bf16.msra.mxu0 %v2398
    %2413 = vmatmul.bf16.gmra.mxu0 %v2403
    %v2414 = vpop.f32.mrf.mxu0
    %v2415 = vadd.f32 %v2389, %v2414
    %v2416 = vpop.f32.mrf.mxu0
    %v2417 = vadd.f32 %v2389, %v2416
    %2418 = vdwg.mxu0
    %v2419 = vmul.f32 %v2415, %v2415
    %v2420 = vmul.f32 %v2417, %v2417
    %v2421 = vmul.f32 %v2415, %v2419
    %v2422 = vmul.f32 %v2417, %v2420
    %v2423 = vmul.f32 %v2421, 0.044715
    %v2424 = vmul.f32 %v2422, 0.044715
    %v2425 = vadd.f32 %v2415, %v2423
    %v2426 = vadd.f32 %v2417, %v2424
    %v2427 = vmul.f32 %v2425, 0.7978846
    %v2428 = vmul.f32 %v2426, 0.7978846
    %v2429 = vtanh.pop %v2427
    %v2430 = vtanh.pop %v2428
    %v2431 = vadd.f32 %v2429, 1.0
    %v2432 = vadd.f32 %v2430, 1.0
    %v2433 = vmul.f32 %v2431, 0.5
    %v2434 = vmul.f32 %v2432, 0.5
    %v2435 = vmul.f32 %v2415, %v2433
    %v2436 = vmul.f32 %v2417, %v2434
    %v2437 = vpack.c.bf16 %v2436, %v2435
    %s2438 = scalar_lea.vmem %s7, 32
    %v2439 = vld [vmem:[%s2438] sm:$0xf]
    %v2440 = vld [vmem:[%s2438 + $0x4] sm:$0xf]
    %v2441 = vld [vmem:[%s2438 + $0x8] sm:$0xf]
    %v2442 = vld [vmem:[%s2438 + $0xc] sm:$0xf]
    %v2443 = vld [vmem:[%s2438 + $0x10] sm:$0xf]
    %v2444 = vld [vmem:[%s2438 + $0x14] sm:$0xf]
    %v2445 = vld [vmem:[%s2438 + $0x18] sm:$0xf]
    %v2446 = vld [vmem:[%s2438 + $0x1c] sm:$0xf]
    %v2447 = vperm.slane %v1305, 0
    %v2456 = vunpack.c.l.b16 %v2439
    %v2457 = vunpack.c.l.b16 %v2440
    %v2458 = vunpack.c.l.b16 %v2441
    %v2459 = vunpack.c.l.b16 %v2442
    %v2460 = vunpack.c.l.b16 %v2443
    %v2461 = vunpack.c.l.b16 %v2444
    %v2462 = vunpack.c.l.b16 %v2445
    %v2463 = vunpack.c.l.b16 %v2446
    %v2464 = vpack.c.b16 %v2457, %v2456
    %v2465 = vpack.c.b16 %v2459, %v2458
    %v2466 = vpack.c.b16 %v2461, %v2460
    %v2467 = vpack.c.b16 %v2463, %v2462
    %v2473 = vsel %vm1226, %v2437, 0
    %2475 = vmatpush.bf16.msra.mxu0 0
    %2476 = vmatpush.bf16.msra.mxu0 0
    %2477 = vmatpush.bf16.msra.mxu0 0
    %2478 = vmatpush.bf16.msra.mxu0 0
    %2479 = vmatpush.bf16.msra.mxu0 %v2467
    %2480 = vmatpush.bf16.msra.mxu0 %v2466
    %2481 = vmatpush.bf16.msra.mxu0 %v2465
    %2482 = vmatpush.bf16.msra.mxu0 %v2464
    %2483 = vmatmul.bf16.gmra.mxu0 %v2473
    %v2484 = vpop.f32.mrf.mxu0
    %v2485 = vadd.f32 %v2447, %v2484
    %v2486 = vpop.f32.mrf.mxu0
    %v2487 = vadd.f32 %v2447, %v2486
    %2488 = vdwg.mxu0
    %v2489 = vadd.f32 %v2381, %v2485
    %v2490 = vadd.f32 %v2382, %v2487
    %v2491 = vsel %vm80, %v2489, 0.0
    %2492 = vadd.xlane.f32.xlu0 %v2491
    %v2493 = vpop.xlane.xlu0 %2492
    %v2494 = vsel %vm80, %v2490, 0.0
    %2495 = vadd.xlane.f32.xlu0 %v2494
    %v2496 = vpop.xlane.xlu0 %2495
    %v2497 = vmul.f32 %v2493, %v1088
    %v2498 = vmul.f32 %v2496, %v1088
    %v2499 = vmul.f32 %v2489, %v2489
    %v2500 = vmul.f32 %v2490, %v2490
    %v2501 = vsel %vm80, %v2499, 0.0
    %2502 = vadd.xlane.f32.xlu0 %v2501
    %v2503 = vpop.xlane.xlu0 %2502
    %v2504 = vsel %vm80, %v2500, 0.0
    %2505 = vadd.xlane.f32.xlu0 %v2504
    %v2506 = vpop.xlane.xlu0 %2505
    %v2507 = vmul.f32 %v2503, %v1088
    %v2508 = vmul.f32 %v2506, %v1088
    %v2509 = vmul.f32 %v2497, %v2497
    %v2510 = vmul.f32 %v2498, %v2498
    %v2511 = vsub.f32 %v2507, %v2509
    %v2512 = vsub.f32 %v2508, %v2510
    %v2513 = vmax.f32 %v2511, 0.0
    %v2514 = vmax.f32 %v2512, 0.0
    %v2515 = vsub.f32 %v2489, %v2497
    %v2516 = vsub.f32 %v2490, %v2498
    %v2517 = vadd.f32 %v2513, 1e-12
    %v2518 = vadd.f32 %v2514, 1e-12
    %v2519 = vrsqrt.pop %v2517
    %v2520 = vmul.f32 %v2519, %v2517
    %v2521 = vmul.f32 %v2520, %v2519
    %v2522 = vmul.f32 0.5, %v2521
    %v2523 = vsub.f32 1.5, %v2522
    %v2524 = vmul.f32 %v2519, %v2523
    %vm2525 = vweird.f32 %v2517
    %vm2526 = vweird.f32 %v2519
    %vm2527 = vmor %vm2525, %vm2526
    %v2528 = vsel %vm2527, %v2519, %v2524
    %v2529 = vrsqrt.pop %v2518
    %v2530 = vmul.f32 %v2529, %v2518
    %v2531 = vmul.f32 %v2530, %v2529
    %v2532 = vmul.f32 0.5, %v2531
    %v2533 = vsub.f32 1.5, %v2532
    %v2534 = vmul.f32 %v2529, %v2533
    %vm2535 = vweird.f32 %v2518
    %vm2536 = vweird.f32 %v2529
    %vm2537 = vmor %vm2535, %vm2536
    %v2538 = vsel %vm2537, %v2529, %v2534
    %v2539 = vmul.f32 %v2515, %v2528
    %v2540 = vmul.f32 %v2516, %v2538
    %v2541 = vperm.slane %v1308, 0
    %v2542 = vmul.f32 %v2539, %v2541
    %v2543 = vmul.f32 %v2540, %v2541
    %v2544 = vperm.slane %v1309, 0
    %v2545 = vadd.f32 %v2542, %v2544
    %v2546 = vadd.f32 %v2543, %v2544
    %v2547 = vpack.c.bf16 %v2546, %v2545
    %v2548 = vld [vmem:[%s9] sm:$0xf]
    %v2549 = vld [vmem:[%s9 + $0x4] sm:$0xf]
    %v2550 = vld [vmem:[%s9 + $0x8] sm:$0xf]
    %v2551 = vld [vmem:[%s9 + $0xc] sm:$0xf]
    %v2552 = vld [vmem:[%s10] sm:$0x1]
    %v2554 = vperm.slane %v2552, 0
    %v2560 = vunpack.c.l.b16 %v2548
    %v2561 = vunpack.c.l.b16 %v2549
    %v2562 = vunpack.c.l.b16 %v2550
    %v2563 = vunpack.c.l.b16 %v2551
    %v2564 = vpack.c.b16 %v2561, %v2560
    %v2565 = vpack.c.b16 %v2563, %v2562
    %v2569 = vsel %vm80, %v2547, 0
    %2571 = vmatpush.bf16.msra.mxu0 0
    %2572 = vmatpush.bf16.msra.mxu0 0
    %2573 = vmatpush.bf16.msra.mxu0 0
    %2574 = vmatpush.bf16.msra.mxu0 0
    %2575 = vmatpush.bf16.msra.mxu0 0
    %2576 = vmatpush.bf16.msra.mxu0 0
    %2577 = vmatpush.bf16.msra.mxu0 %v2565
    %2578 = vmatpush.bf16.msra.mxu0 %v2564
    %2579 = vmatmul.bf16.gmra.mxu0 %v2569
    %v2580 = vpop.f32.mrf.mxu0
    %v2581 = vadd.f32 %v2554, %v2580
    %v2582 = vpop.f32.mrf.mxu0
    %v2583 = vadd.f32 %v2554, %v2582
    %2584 = vdwg.mxu0
    %2585 = vst [vmem:[#allocation2] sm:$0xff] %v2581
    %2586 = vst [vmem:[#allocation2 + $0x8] sm:$0xff] %v2583
    // Predicated region
    $region46: #{transformer_decoder_pallas.1} parent=1 // pred_check
      _
    $region47: #{transformer_decoder_pallas.1} parent=1 // pred_check_branch
      %2588 = sbr.rel (0) target = $region49
    $region48: #{transformer_decoder_pallas.1} parent=1 // pred_region
      %2590 = vsyncadd [#allocation3], 0
      %s2591 = sshll.u32 [#allocation2], 4
      %s2592 = int_to_ptr.vmem [resolvable:$true] %s2591
      %s2593 = sshll.u32 %s11, 4
      %s2594 = int_to_ptr.hbm [resolvable:$true] %s2593
      %2599 = dma.vmem_to_hbm [thread:$0]  %s2592, 256, %s2594, [#allocation3], 128, 128, 8
    $region49: #{transformer_decoder_pallas.1} parent=1 // pred_fallthru
      _
    // Predicated region
    $region50: #{transformer_decoder_pallas.1} parent=1 // pred_check
      _
    $region51: #{transformer_decoder_pallas.1} parent=1 // pred_check_branch
      %2601 = sbr.rel (0) target = $region53
    $region52: #{transformer_decoder_pallas.1} parent=1 // pred_region
      %2603 = dma.done [#allocation3], 256
    $region53: #{transformer_decoder_pallas.1} parent=1 // pred_fallthru
      _
    %2604 = vsyncpa [#allocation3], 1

</llo_original>
